<compile_context>
chip_gen: v6e
topology: v6e:2x2x1
jax: 0.10.0
libtpu: 0.0.40
codegen_flags: <defaults>
</compile_context>

<pallas_src>
import functools

import jax
import jax.numpy as jnp
from jax.experimental import pallas as pl
from jax.experimental.pallas import tpu as pltpu

_HI = jax.lax.Precision.HIGHEST


# ----------------------------------------------------------------------------
# Fused bidirectional LSTM recurrence kernel.
# Grid = (S // T,), sequential ("arbitrary"); both directions per step.
# ----------------------------------------------------------------------------
def _bilstm_kernel(xg_f_ref, xg_b_ref, whh_ref,
                   out_f_ref, out_b_ref, hlast_ref, clast_ref,
                   h_sc, c_sc, *, hidden_size, t_chunk):
    c_idx = pl.program_id(0)
    n_chunks = pl.num_programs(0)
    H = hidden_size

    @pl.when(c_idx == 0)
    def _():
        h_sc[...] = jnp.zeros_like(h_sc)
        c_sc[...] = jnp.zeros_like(c_sc)

    # Recurrent weights (bf16, resident across the whole grid).
    whh_f = whh_ref[0]                       # (H, 4H)
    whh_b = whh_ref[1]                       # (H, 4H)

    def cell(gates, c_prev):                 # f32 elementwise path
        i_g = jax.nn.sigmoid(gates[:, 0 * H:1 * H])
        f_g = jax.nn.sigmoid(gates[:, 1 * H:2 * H])
        g_g = jnp.tanh(gates[:, 2 * H:3 * H])
        o_g = jax.nn.sigmoid(gates[:, 3 * H:4 * H])
        c_new = f_g * c_prev + i_g * g_g
        h_new = o_g * jnp.tanh(c_new)
        return h_new, c_new

    def step(i, carry):
        h_f, c_f, h_b, c_b = carry
        # forward direction: local time i of this (time-increasing) chunk.
        g_f = xg_f_ref[i].astype(jnp.float32) + jnp.dot(
            h_f.astype(jnp.bfloat16), whh_f, preferred_element_type=jnp.float32)
        h_f, c_f = cell(g_f, c_f)
        out_f_ref[i] = h_f
        # backward direction: chunk was fetched time-reversed via the
        # index_map; local offset t_chunk-1-i is the matching original time.
        j = t_chunk - 1 - i
        g_b = xg_b_ref[j].astype(jnp.float32) + jnp.dot(
            h_b.astype(jnp.bfloat16), whh_b, preferred_element_type=jnp.float32)
        h_b, c_b = cell(g_b, c_b)
        out_b_ref[j] = h_b
        return h_f, c_f, h_b, c_b

    carry0 = (h_sc[0], c_sc[0], h_sc[1], c_sc[1])
    if t_chunk <= 16:
        unroll = True          # tiny chunk: fully unroll for LLO visibility
    elif hidden_size < 512:
        unroll = 8
    else:
        unroll = 4             # large H: keep live (B,4H) gate values small
    h_f, c_f, h_b, c_b = jax.lax.fori_loop(0, t_chunk, step, carry0,
                                           unroll=unroll)

    h_sc[0] = h_f
    h_sc[1] = h_b
    c_sc[0] = c_f
    c_sc[1] = c_b

    @pl.when(c_idx == n_chunks - 1)
    def _():
        hlast_ref[0] = h_f
        hlast_ref[1] = h_b
        clast_ref[0] = c_f
        clast_ref[1] = c_b


# ----------------------------------------------------------------------------
# VMEM-aware tiling
# ----------------------------------------------------------------------------
def _vmem_budget_bytes():
    """Scoped-VMEM budget: ~100 MiB on 128 MiB chips (v5e/v6e), ~48 MiB on
    64 MiB chips (v7x).  Conservative fallback if the query is unavailable."""
    cap = None
    try:
        cap = int(getattr(pltpu.get_tpu_info(), "vmem_capacity_bytes", 0)) or None
    except Exception:
        cap = None
    if cap is None:
        cap = 64 << 20
    return int(max(32 << 20, min(cap - (16 << 20), 100 << 20)))


def _pick_t_chunk(seq_len, batch, hidden, budget_bytes):
    """Largest divisor of seq_len whose pipelined blocks fit the VMEM budget.

    Per-T bytes: 2 dirs x 2 bufs x (T*B*4H) bf16 gates  = 16*T*B*H
               + 2 dirs x 2 bufs x (T*B*H)  f32 outputs = 16*T*B*H
    Fixed     : bf16 W_hh (16*H*H) + carries/last-state + compiler margin.
    """
    per_t = 32 * batch * hidden
    fixed = 16 * hidden * hidden + 64 * batch * hidden + (4 << 20)
    t_cap = max(1, (budget_bytes - fixed) // per_t)
    t_cap = int(min(t_cap, seq_len, 256))
    t = t_cap
    while seq_len % t:
        t -= 1
    return t


def _run_bilstm(xg_f, xg_b, whh_stacked, *, hidden_size, single_buffer_whh):
    """xg_f/xg_b: (S, B, 4H) bf16 precomputed input gates (time-major, original
    time order for BOTH directions).  whh_stacked: (2, H, 4H) bf16.  Returns
    (out_f (S,B,H), out_b (S,B,H), h_last (2,B,H), c_last (2,B,H)) in f32."""
    S, B, G = xg_f.shape
    H = hidden_size
    budget = _vmem_budget_bytes()
    T = _pick_t_chunk(S, B, H, budget)
    n_chunks = S // T

    kernel = functools.partial(_bilstm_kernel, hidden_size=H, t_chunk=T)

    # Grid-invariant recurrent weights: single-buffer to halve their VMEM cost.
    whh_kwargs = {"pipeline_mode": pl.Buffered(1)} if single_buffer_whh else {}
    whh_spec = pl.BlockSpec((2, H, G), lambda c: (0, 0, 0), **whh_kwargs)

    out_f, out_b, h_last, c_last = pl.pallas_call(
        kernel,
        out_shape=(
            jax.ShapeDtypeStruct((S, B, H), jnp.float32),
            jax.ShapeDtypeStruct((S, B, H), jnp.float32),
            jax.ShapeDtypeStruct((2, B, H), jnp.float32),
            jax.ShapeDtypeStruct((2, B, H), jnp.float32),
        ),
        grid_spec=pltpu.PrefetchScalarGridSpec(
            num_scalar_prefetch=0,
            grid=(n_chunks,),
            in_specs=[
                # forward-direction input gates: time-increasing chunks (bf16)
                pl.BlockSpec((T, B, G), lambda c: (c, 0, 0)),
                # backward-direction input gates: time-reversed addressing
                pl.BlockSpec((T, B, G),
                             lambda c, n=n_chunks: (n - 1 - c, 0, 0)),
                # stacked recurrent weights (invariant across the grid)
                whh_spec,
            ],
            out_specs=[
                pl.BlockSpec((T, B, H), lambda c: (c, 0, 0)),
                pl.BlockSpec((T, B, H),
                             lambda c, n=n_chunks: (n - 1 - c, 0, 0)),
                pl.BlockSpec((2, B, H), lambda c: (0, 0, 0)),
                pl.BlockSpec((2, B, H), lambda c: (0, 0, 0)),
            ],
            scratch_shapes=[
                pltpu.VMEM((2, B, H), jnp.float32),   # h carry (fwd, bwd)
                pltpu.VMEM((2, B, H), jnp.float32),   # c carry (fwd, bwd)
            ],
        ),
        compiler_params=pltpu.CompilerParams(
            dimension_semantics=("arbitrary",),        # recurrent time axis
            vmem_limit_bytes=budget),
    )(xg_f, xg_b, whh_stacked)
    return out_f, out_b, h_last, c_last


# ----------------------------------------------------------------------------
# EncoderVanilla forward
# ----------------------------------------------------------------------------
def encoder_vanilla_forward(params, source, *, single_buffer_whh=True):
    """source: (batch, seq) int32 token ids."""
    H = params["w_hh_f"].shape[1]          # w_hh is (4H, H)

    # Embedding lookup (gather) -- glue, plain JAX.  Dropout: eval-mode
    # identity (nn.LSTM's dropout arg is also a no-op for n_layers=1).
    emb = jnp.take(params["embedding"], source, axis=0)            # (B,S,E) f32
    emb_bf = emb.astype(jnp.bfloat16)

    # Hoisted input projections: one big bf16 GEMM per direction (f32 accum),
    # produced time-major and stored bf16 so the recurrence streams half the
    # HBM bytes.
    def xgates(w_ih, b_ih, b_hh):
        g = jnp.einsum("bse,ge->sbg", emb_bf, w_ih.astype(jnp.bfloat16),
                       preferred_element_type=jnp.float32)
        return (g + (b_ih + b_hh)).astype(jnp.bfloat16)

    xg_f = xgates(params["w_ih_f"], params["b_ih_f"], params["b_hh_f"])
    xg_b = xgates(params["w_ih_b"], params["b_ih_b"], params["b_hh_b"])

    whh = jnp.stack([params["w_hh_f"].T, params["w_hh_b"].T],
                    axis=0).astype(jnp.bfloat16)                   # (2, H, 4H)

    out_f, out_b, h_last, c_last = _run_bilstm(
        xg_f, xg_b, whh, hidden_size=H, single_buffer_whh=single_buffer_whh)

    outputs = jnp.concatenate([out_f, out_b], axis=-1)             # (S, B, 2H)
    return outputs, h_last, c_last


# ----------------------------------------------------------------------------
# Deterministic parameter init (shapes follow nn.Embedding / nn.LSTM)
# ----------------------------------------------------------------------------
def init_params(key, vocab_size, embed_size, hidden_size):
    ks = jax.random.split(key, 9)
    emb = jax.random.normal(ks[0], (vocab_size, embed_size), jnp.float32)
    emb = emb.at[0].set(0.0)                                       # padding_idx=0
    bound = 1.0 / jnp.sqrt(hidden_size)

    def u(k, shape):
        return jax.random.uniform(k, shape, jnp.float32, -bound, bound)

    return {
        "embedding": emb,
        "w_ih_f": u(ks[1], (4 * hidden_size, embed_size)),
        "w_hh_f": u(ks[2], (4 * hidden_size, hidden_size)),
        "b_ih_f": u(ks[3], (4 * hidden_size,)),
        "b_hh_f": u(ks[4], (4 * hidden_size,)),
        "w_ih_b": u(ks[5], (4 * hidden_size, embed_size)),
        "w_hh_b": u(ks[6], (4 * hidden_size, hidden_size)),
        "b_ih_b": u(ks[7], (4 * hidden_size,)),
        "b_hh_b": u(ks[8], (4 * hidden_size,)),
    }


# ----------------------------------------------------------------------------
# Pure-JAX f32 reference (lax.scan) for a correctness check
# ----------------------------------------------------------------------------
def _lstm_ref(x_tm, w_ih, w_hh, bias):
    H = w_hh.shape[1]                       # (4H, H) -> hidden size
    B = x_tm.shape[1]

    def step(carry, x_t):
        h, c = carry
        g = (jnp.dot(x_t, w_ih.T, precision=_HI)
             + jnp.dot(h, w_hh.T, precision=_HI) + bias)
        i = jax.nn.sigmoid(g[:, :H])
        f = jax.nn.sigmoid(g[:, H:2 * H])
        gg = jnp.tanh(g[:, 2 * H:3 * H])
        o = jax.nn.sigmoid(g[:, 3 * H:])
        c = f * c + i * gg
        h = o * jnp.tanh(c)
        return (h, c), h

    init = (jnp.zeros((B, H), jnp.float32), jnp.zeros((B, H), jnp.float32))
    (h, c), outs = jax.lax.scan(step, init, x_tm)
    return outs, h, c


def encoder_vanilla_ref(params, source):
    emb = jnp.take(params["embedding"], source, axis=0)
    x = jnp.transpose(emb, (1, 0, 2))
    of, hf, cf = _lstm_ref(x, params["w_ih_f"], params["w_hh_f"],
                           params["b_ih_f"] + params["b_hh_f"])
    ob, hb, cb = _lstm_ref(x[::-1], params["w_ih_b"], params["w_hh_b"],
                           params["b_ih_b"] + params["b_hh_b"])
    return (jnp.concatenate([of, ob[::-1]], -1),
            jnp.stack([hf, hb], 0), jnp.stack([cf, cb], 0))


if __name__ == "__main__":
    VOCAB, EMBED, HIDDEN = 20, 32, 32
    BATCH, SEQ = 2, 8

    key = jax.random.PRNGKey(0)
    kp, kx = jax.random.split(key)
    params = init_params(kp, VOCAB, EMBED, HIDDEN)
    source = jax.random.randint(kx, (BATCH, SEQ), 0, VOCAB, jnp.int32)

    def _run(single_buffer_whh):
        fwd = jax.jit(functools.partial(encoder_vanilla_forward,
                                        single_buffer_whh=single_buffer_whh))
        return jax.block_until_ready(fwd(params, source))

    try:
        outputs, hidden, cell = _run(True)
    except Exception:
        # Graceful fallback if this jax build rejects single-buffered
        # (pl.Buffered(1)) pipelining for the invariant W_hh operand.
        outputs, hidden, cell = _run(False)

    assert outputs.shape == (SEQ, BATCH, 2 * HIDDEN)
    assert hidden.shape == (2, BATCH, HIDDEN)
    assert cell.shape == (2, BATCH, HIDDEN)

    # bf16 MXU/stream path vs f32 reference: loosened tolerance (review note).
    ref_o, ref_h, ref_c = encoder_vanilla_ref(params, source)
    assert jnp.allclose(outputs, ref_o, atol=5e-2, rtol=5e-2)
    assert jnp.allclose(hidden, ref_h, atol=5e-2, rtol=5e-2)
    assert jnp.allclose(cell, ref_c, atol=5e-2, rtol=5e-2)

    print("KERNEL_OK")
</pallas_src>

<mosaic_0001>
module attributes {stable_mosaic.version = 11 : i64} {
  func.func @_bilstm_kernel(%arg0: i32, %arg1: memref<8x2x128xbf16, #tpu.memory_space<vmem>>, %arg2: memref<8x2x128xbf16, #tpu.memory_space<vmem>>, %arg3: memref<2x32x128xbf16, #tpu.memory_space<vmem>>, %arg4: memref<8x2x32xf32, #tpu.memory_space<vmem>>, %arg5: memref<8x2x32xf32, #tpu.memory_space<vmem>>, %arg6: memref<2x2x32xf32, #tpu.memory_space<vmem>>, %arg7: memref<2x2x32xf32, #tpu.memory_space<vmem>>, %arg8: memref<2x2x32xf32, #tpu.memory_space<vmem>>, %arg9: memref<2x2x32xf32, #tpu.memory_space<vmem>>) attributes {dimension_semantics = [#tpu.dimension_semantics<arbitrary>], iteration_bounds = array<i64: 1>, scalar_prefetch = 0 : i64, scratch_operands = 2 : i64, tpu.core_type = #tpu.core_type<tc>, window_params = [{transform_indices = @transform_0, window_bounds = array<i64: 8, 2, 128>}, {transform_indices = @transform_1, window_bounds = array<i64: 8, 2, 128>}, {pipeline_mode = #tpu.pipeline_mode<synchronous>, transform_indices = @transform_2, window_bounds = array<i64: 2, 32, 128>}, {transform_indices = @transform_3, window_bounds = array<i64: 8, 2, 32>}, {transform_indices = @transform_4, window_bounds = array<i64: 8, 2, 32>}, {pipeline_mode = #tpu.pipeline_mode<synchronous>, transform_indices = @transform_5, window_bounds = array<i64: 2, 2, 32>}, {pipeline_mode = #tpu.pipeline_mode<synchronous>, transform_indices = @transform_6, window_bounds = array<i64: 2, 2, 32>}]} {
    %c0_i32 = arith.constant 0 : i32
    %0 = arith.cmpi eq, %arg0, %c0_i32 : i32
    %1 = arith.extui %0 : i1 to i32
    %c0_i32_0 = arith.constant 0 : i32
    %2 = arith.cmpi ne, %1, %c0_i32_0 : i32
    scf.if %2 {
      %cst_167 = arith.constant 0.000000e+00 : f32
      %614 = vector.broadcast %cst_167 : f32 to vector<2x2x32xf32>
      %c0_168 = arith.constant 0 : index
      %c0_169 = arith.constant 0 : index
      %c0_170 = arith.constant 0 : index
      %615 = vector.load %arg8[%c0_168, %c0_169, %c0_170] : memref<2x2x32xf32, #tpu.memory_space<vmem>>, vector<2x2x32xf32>
      tpu.vector_store %arg8[%c0_168, %c0_169, %c0_170], %614 {strides = array<i32>} : memref<2x2x32xf32, #tpu.memory_space<vmem>>, vector<2x2x32xf32>,
      %cst_171 = arith.constant 0.000000e+00 : f32
      %616 = vector.broadcast %cst_171 : f32 to vector<2x2x32xf32>
      %c0_172 = arith.constant 0 : index
      %c0_173 = arith.constant 0 : index
      %c0_174 = arith.constant 0 : index
      %617 = vector.load %arg9[%c0_172, %c0_173, %c0_174] : memref<2x2x32xf32, #tpu.memory_space<vmem>>, vector<2x2x32xf32>
      tpu.vector_store %arg9[%c0_172, %c0_173, %c0_174], %616 {strides = array<i32>} : memref<2x2x32xf32, #tpu.memory_space<vmem>>, vector<2x2x32xf32>,
    } else {
    }
    %c0 = arith.constant 0 : index
    %c0_1 = arith.constant 0 : index
    %c0_2 = arith.constant 0 : index
    %3 = vector.load %arg3[%c0, %c0_1, %c0_2] : memref<2x32x128xbf16, #tpu.memory_space<vmem>>, vector<1x32x128xbf16>
    %4 = vector.shape_cast %3 : vector<1x32x128xbf16> to vector<32x128xbf16>
    %c1 = arith.constant 1 : index
    %c0_3 = arith.constant 0 : index
    %c0_4 = arith.constant 0 : index
    %5 = vector.load %arg3[%c1, %c0_3, %c0_4] : memref<2x32x128xbf16, #tpu.memory_space<vmem>>, vector<1x32x128xbf16>
    %6 = vector.shape_cast %5 : vector<1x32x128xbf16> to vector<32x128xbf16>
    %c0_5 = arith.constant 0 : index
    %c0_6 = arith.constant 0 : index
    %c0_7 = arith.constant 0 : index
    %7 = vector.load %arg8[%c0_5, %c0_6, %c0_7] : memref<2x2x32xf32, #tpu.memory_space<vmem>>, vector<1x2x32xf32>
    %8 = vector.shape_cast %7 : vector<1x2x32xf32> to vector<2x32xf32>
    %c0_8 = arith.constant 0 : index
    %c0_9 = arith.constant 0 : index
    %c0_10 = arith.constant 0 : index
    %9 = vector.load %arg9[%c0_8, %c0_9, %c0_10] : memref<2x2x32xf32, #tpu.memory_space<vmem>>, vector<1x2x32xf32>
    %10 = vector.shape_cast %9 : vector<1x2x32xf32> to vector<2x32xf32>
    %c1_11 = arith.constant 1 : index
    %c0_12 = arith.constant 0 : index
    %c0_13 = arith.constant 0 : index
    %11 = vector.load %arg8[%c1_11, %c0_12, %c0_13] : memref<2x2x32xf32, #tpu.memory_space<vmem>>, vector<1x2x32xf32>
    %12 = vector.shape_cast %11 : vector<1x2x32xf32> to vector<2x32xf32>
    %c1_14 = arith.constant 1 : index
    %c0_15 = arith.constant 0 : index
    %c0_16 = arith.constant 0 : index
    %13 = vector.load %arg9[%c1_14, %c0_15, %c0_16] : memref<2x2x32xf32, #tpu.memory_space<vmem>>, vector<1x2x32xf32>
    %14 = vector.shape_cast %13 : vector<1x2x32xf32> to vector<2x32xf32>
    %c0_i32_17 = arith.constant 0 : i32
    %15 = arith.index_cast %c0_i32_17 : i32 to index
    %c0_18 = arith.constant 0 : index
    %c0_19 = arith.constant 0 : index
    %16 = vector.load %arg1[%15, %c0_18, %c0_19] : memref<8x2x128xbf16, #tpu.memory_space<vmem>>, vector<1x2x128xbf16>
    %17 = vector.shape_cast %16 : vector<1x2x128xbf16> to vector<2x128xbf16>
    %18 = arith.extf %17 : vector<2x128xbf16> to vector<2x128xf32>
    %19 = arith.truncf %8 : vector<2x32xf32> to vector<2x32xbf16>
    %cst = arith.constant dense<0.000000e+00> : vector<2x128xf32>
    %20 = tpu.matmul %19, %4, %cst {dimension_numbers = #tpu.dot_dimension_numbers<[1], [0], [0], [1], [0, 0, 1, 1], [], []>} : vector<2x32xbf16>, vector<32x128xbf16>, vector<2x128xf32> -> vector<2x128xf32>
    %21 = arith.addf %18, %20 : vector<2x128xf32>
    %22 = vector.extract_strided_slice %21 {offsets = [0, 0], sizes = [2, 32], strides = [1, 1]} : vector<2x128xf32> to vector<2x32xf32>
    %23 = arith.negf %22 : vector<2x32xf32>
    %24 = math.exp %23 : vector<2x32xf32>
    %cst_20 = arith.constant 1.000000e+00 : f32
    %25 = vector.broadcast %cst_20 : f32 to vector<2x32xf32>
    %26 = arith.addf %25, %24 : vector<2x32xf32>
    %27 = arith.divf %25, %26 : vector<2x32xf32>
    %28 = vector.extract_strided_slice %21 {offsets = [0, 32], sizes = [2, 32], strides = [1, 1]} : vector<2x128xf32> to vector<2x32xf32>
    %29 = arith.negf %28 : vector<2x32xf32>
    %30 = math.exp %29 : vector<2x32xf32>
    %cst_21 = arith.constant 1.000000e+00 : f32
    %31 = vector.broadcast %cst_21 : f32 to vector<2x32xf32>
    %32 = arith.addf %31, %30 : vector<2x32xf32>
    %33 = arith.divf %31, %32 : vector<2x32xf32>
    %34 = vector.extract_strided_slice %21 {offsets = [0, 64], sizes = [2, 32], strides = [1, 1]} : vector<2x128xf32> to vector<2x32xf32>
    %35 = math.tanh %34 : vector<2x32xf32>
    %36 = vector.extract_strided_slice %21 {offsets = [0, 96], sizes = [2, 32], strides = [1, 1]} : vector<2x128xf32> to vector<2x32xf32>
    %37 = arith.negf %36 : vector<2x32xf32>
    %38 = math.exp %37 : vector<2x32xf32>
    %cst_22 = arith.constant 1.000000e+00 : f32
    %39 = vector.broadcast %cst_22 : f32 to vector<2x32xf32>
    %40 = arith.addf %39, %38 : vector<2x32xf32>
    %41 = arith.divf %39, %40 : vector<2x32xf32>
    %42 = arith.mulf %33, %10 : vector<2x32xf32>
    %43 = arith.mulf %27, %35 : vector<2x32xf32>
    %44 = arith.addf %42, %43 : vector<2x32xf32>
    %45 = math.tanh %44 : vector<2x32xf32>
    %46 = arith.mulf %41, %45 : vector<2x32xf32>
    %47 = arith.index_cast %c0_i32_17 : i32 to index
    %c0_23 = arith.constant 0 : index
    %c0_24 = arith.constant 0 : index
    %48 = vector.load %arg4[%47, %c0_23, %c0_24] : memref<8x2x32xf32, #tpu.memory_space<vmem>>, vector<1x2x32xf32>
    %49 = vector.shape_cast %48 : vector<1x2x32xf32> to vector<2x32xf32>
    %50 = vector.shape_cast %46 : vector<2x32xf32> to vector<1x2x32xf32>
    tpu.vector_store %arg4[%47, %c0_23, %c0_24], %50 {strides = array<i32>} : memref<8x2x32xf32, #tpu.memory_space<vmem>>, vector<1x2x32xf32>,
    %c7_i32 = arith.constant 7 : i32
    %51 = arith.subi %c7_i32, %c0_i32_17 : i32
    %52 = arith.index_cast %51 : i32 to index
    %c0_25 = arith.constant 0 : index
    %c0_26 = arith.constant 0 : index
    %53 = vector.load %arg2[%52, %c0_25, %c0_26] : memref<8x2x128xbf16, #tpu.memory_space<vmem>>, vector<1x2x128xbf16>
    %54 = vector.shape_cast %53 : vector<1x2x128xbf16> to vector<2x128xbf16>
    %55 = arith.extf %54 : vector<2x128xbf16> to vector<2x128xf32>
    %56 = arith.truncf %12 : vector<2x32xf32> to vector<2x32xbf16>
    %cst_27 = arith.constant dense<0.000000e+00> : vector<2x128xf32>
    %57 = tpu.matmul %56, %6, %cst_27 {dimension_numbers = #tpu.dot_dimension_numbers<[1], [0], [0], [1], [0, 0, 1, 1], [], []>} : vector<2x32xbf16>, vector<32x128xbf16>, vector<2x128xf32> -> vector<2x128xf32>
    %58 = arith.addf %55, %57 : vector<2x128xf32>
    %59 = vector.extract_strided_slice %58 {offsets = [0, 0], sizes = [2, 32], strides = [1, 1]} : vector<2x128xf32> to vector<2x32xf32>
    %60 = arith.negf %59 : vector<2x32xf32>
    %61 = math.exp %60 : vector<2x32xf32>
    %cst_28 = arith.constant 1.000000e+00 : f32
    %62 = vector.broadcast %cst_28 : f32 to vector<2x32xf32>
    %63 = arith.addf %62, %61 : vector<2x32xf32>
    %64 = arith.divf %62, %63 : vector<2x32xf32>
    %65 = vector.extract_strided_slice %58 {offsets = [0, 32], sizes = [2, 32], strides = [1, 1]} : vector<2x128xf32> to vector<2x32xf32>
    %66 = arith.negf %65 : vector<2x32xf32>
    %67 = math.exp %66 : vector<2x32xf32>
    %cst_29 = arith.constant 1.000000e+00 : f32
    %68 = vector.broadcast %cst_29 : f32 to vector<2x32xf32>
    %69 = arith.addf %68, %67 : vector<2x32xf32>
    %70 = arith.divf %68, %69 : vector<2x32xf32>
    %71 = vector.extract_strided_slice %58 {offsets = [0, 64], sizes = [2, 32], strides = [1, 1]} : vector<2x128xf32> to vector<2x32xf32>
    %72 = math.tanh %71 : vector<2x32xf32>
    %73 = vector.extract_strided_slice %58 {offsets = [0, 96], sizes = [2, 32], strides = [1, 1]} : vector<2x128xf32> to vector<2x32xf32>
    %74 = arith.negf %73 : vector<2x32xf32>
    %75 = math.exp %74 : vector<2x32xf32>
    %cst_30 = arith.constant 1.000000e+00 : f32
    %76 = vector.broadcast %cst_30 : f32 to vector<2x32xf32>
    %77 = arith.addf %76, %75 : vector<2x32xf32>
    %78 = arith.divf %76, %77 : vector<2x32xf32>
    %79 = arith.mulf %70, %14 : vector<2x32xf32>
    %80 = arith.mulf %64, %72 : vector<2x32xf32>
    %81 = arith.addf %79, %80 : vector<2x32xf32>
    %82 = math.tanh %81 : vector<2x32xf32>
    %83 = arith.mulf %78, %82 : vector<2x32xf32>
    %84 = arith.index_cast %51 : i32 to index
    %c0_31 = arith.constant 0 : index
    %c0_32 = arith.constant 0 : index
    %85 = vector.load %arg5[%84, %c0_31, %c0_32] : memref<8x2x32xf32, #tpu.memory_space<vmem>>, vector<1x2x32xf32>
    %86 = vector.shape_cast %85 : vector<1x2x32xf32> to vector<2x32xf32>
    %87 = vector.shape_cast %83 : vector<2x32xf32> to vector<1x2x32xf32>
    tpu.vector_store %arg5[%84, %c0_31, %c0_32], %87 {strides = array<i32>} : memref<8x2x32xf32, #tpu.memory_space<vmem>>, vector<1x2x32xf32>,
    %c1_i32 = arith.constant 1 : i32
    %88 = arith.index_cast %c1_i32 : i32 to index
    %c0_33 = arith.constant 0 : index
    %c0_34 = arith.constant 0 : index
    %89 = vector.load %arg1[%88, %c0_33, %c0_34] : memref<8x2x128xbf16, #tpu.memory_space<vmem>>, vector<1x2x128xbf16>
    %90 = vector.shape_cast %89 : vector<1x2x128xbf16> to vector<2x128xbf16>
    %91 = arith.extf %90 : vector<2x128xbf16> to vector<2x128xf32>
    %92 = arith.truncf %46 : vector<2x32xf32> to vector<2x32xbf16>
    %cst_35 = arith.constant dense<0.000000e+00> : vector<2x128xf32>
    %93 = tpu.matmul %92, %4, %cst_35 {dimension_numbers = #tpu.dot_dimension_numbers<[1], [0], [0], [1], [0, 0, 1, 1], [], []>} : vector<2x32xbf16>, vector<32x128xbf16>, vector<2x128xf32> -> vector<2x128xf32>
    %94 = arith.addf %91, %93 : vector<2x128xf32>
    %95 = vector.extract_strided_slice %94 {offsets = [0, 0], sizes = [2, 32], strides = [1, 1]} : vector<2x128xf32> to vector<2x32xf32>
    %96 = arith.negf %95 : vector<2x32xf32>
    %97 = math.exp %96 : vector<2x32xf32>
    %cst_36 = arith.constant 1.000000e+00 : f32
    %98 = vector.broadcast %cst_36 : f32 to vector<2x32xf32>
    %99 = arith.addf %98, %97 : vector<2x32xf32>
    %100 = arith.divf %98, %99 : vector<2x32xf32>
    %101 = vector.extract_strided_slice %94 {offsets = [0, 32], sizes = [2, 32], strides = [1, 1]} : vector<2x128xf32> to vector<2x32xf32>
    %102 = arith.negf %101 : vector<2x32xf32>
    %103 = math.exp %102 : vector<2x32xf32>
    %cst_37 = arith.constant 1.000000e+00 : f32
    %104 = vector.broadcast %cst_37 : f32 to vector<2x32xf32>
    %105 = arith.addf %104, %103 : vector<2x32xf32>
    %106 = arith.divf %104, %105 : vector<2x32xf32>
    %107 = vector.extract_strided_slice %94 {offsets = [0, 64], sizes = [2, 32], strides = [1, 1]} : vector<2x128xf32> to vector<2x32xf32>
    %108 = math.tanh %107 : vector<2x32xf32>
    %109 = vector.extract_strided_slice %94 {offsets = [0, 96], sizes = [2, 32], strides = [1, 1]} : vector<2x128xf32> to vector<2x32xf32>
    %110 = arith.negf %109 : vector<2x32xf32>
    %111 = math.exp %110 : vector<2x32xf32>
    %cst_38 = arith.constant 1.000000e+00 : f32
    %112 = vector.broadcast %cst_38 : f32 to vector<2x32xf32>
    %113 = arith.addf %112, %111 : vector<2x32xf32>
    %114 = arith.divf %112, %113 : vector<2x32xf32>
    %115 = arith.mulf %106, %44 : vector<2x32xf32>
    %116 = arith.mulf %100, %108 : vector<2x32xf32>
    %117 = arith.addf %115, %116 : vector<2x32xf32>
    %118 = math.tanh %117 : vector<2x32xf32>
    %119 = arith.mulf %114, %118 : vector<2x32xf32>
    %120 = arith.index_cast %c1_i32 : i32 to index
    %c0_39 = arith.constant 0 : index
    %c0_40 = arith.constant 0 : index
    %121 = vector.load %arg4[%120, %c0_39, %c0_40] : memref<8x2x32xf32, #tpu.memory_space<vmem>>, vector<1x2x32xf32>
    %122 = vector.shape_cast %121 : vector<1x2x32xf32> to vector<2x32xf32>
    %123 = vector.shape_cast %119 : vector<2x32xf32> to vector<1x2x32xf32>
    tpu.vector_store %arg4[%120, %c0_39, %c0_40], %123 {strides = array<i32>} : memref<8x2x32xf32, #tpu.memory_space<vmem>>, vector<1x2x32xf32>,
    %c7_i32_41 = arith.constant 7 : i32
    %124 = arith.subi %c7_i32_41, %c1_i32 : i32
    %125 = arith.index_cast %124 : i32 to index
    %c0_42 = arith.constant 0 : index
    %c0_43 = arith.constant 0 : index
    %126 = vector.load %arg2[%125, %c0_42, %c0_43] : memref<8x2x128xbf16, #tpu.memory_space<vmem>>, vector<1x2x128xbf16>
    %127 = vector.shape_cast %126 : vector<1x2x128xbf16> to vector<2x128xbf16>
    %128 = arith.extf %127 : vector<2x128xbf16> to vector<2x128xf32>
    %129 = arith.truncf %83 : vector<2x32xf32> to vector<2x32xbf16>
    %cst_44 = arith.constant dense<0.000000e+00> : vector<2x128xf32>
    %130 = tpu.matmul %129, %6, %cst_44 {dimension_numbers = #tpu.dot_dimension_numbers<[1], [0], [0], [1], [0, 0, 1, 1], [], []>} : vector<2x32xbf16>, vector<32x128xbf16>, vector<2x128xf32> -> vector<2x128xf32>
    %131 = arith.addf %128, %130 : vector<2x128xf32>
    %132 = vector.extract_strided_slice %131 {offsets = [0, 0], sizes = [2, 32], strides = [1, 1]} : vector<2x128xf32> to vector<2x32xf32>
    %133 = arith.negf %132 : vector<2x32xf32>
    %134 = math.exp %133 : vector<2x32xf32>
    %cst_45 = arith.constant 1.000000e+00 : f32
    %135 = vector.broadcast %cst_45 : f32 to vector<2x32xf32>
    %136 = arith.addf %135, %134 : vector<2x32xf32>
    %137 = arith.divf %135, %136 : vector<2x32xf32>
    %138 = vector.extract_strided_slice %131 {offsets = [0, 32], sizes = [2, 32], strides = [1, 1]} : vector<2x128xf32> to vector<2x32xf32>
    %139 = arith.negf %138 : vector<2x32xf32>
    %140 = math.exp %139 : vector<2x32xf32>
    %cst_46 = arith.constant 1.000000e+00 : f32
    %141 = vector.broadcast %cst_46 : f32 to vector<2x32xf32>
    %142 = arith.addf %141, %140 : vector<2x32xf32>
    %143 = arith.divf %141, %142 : vector<2x32xf32>
    %144 = vector.extract_strided_slice %131 {offsets = [0, 64], sizes = [2, 32], strides = [1, 1]} : vector<2x128xf32> to vector<2x32xf32>
    %145 = math.tanh %144 : vector<2x32xf32>
    %146 = vector.extract_strided_slice %131 {offsets = [0, 96], sizes = [2, 32], strides = [1, 1]} : vector<2x128xf32> to vector<2x32xf32>
    %147 = arith.negf %146 : vector<2x32xf32>
    %148 = math.exp %147 : vector<2x32xf32>
    %cst_47 = arith.constant 1.000000e+00 : f32
    %149 = vector.broadcast %cst_47 : f32 to vector<2x32xf32>
    %150 = arith.addf %149, %148 : vector<2x32xf32>
    %151 = arith.divf %149, %150 : vector<2x32xf32>
    %152 = arith.mulf %143, %81 : vector<2x32xf32>
    %153 = arith.mulf %137, %145 : vector<2x32xf32>
    %154 = arith.addf %152, %153 : vector<2x32xf32>
    %155 = math.tanh %154 : vector<2x32xf32>
    %156 = arith.mulf %151, %155 : vector<2x32xf32>
    %157 = arith.index_cast %124 : i32 to index
    %c0_48 = arith.constant 0 : index
    %c0_49 = arith.constant 0 : index
    %158 = vector.load %arg5[%157, %c0_48, %c0_49] : memref<8x2x32xf32, #tpu.memory_space<vmem>>, vector<1x2x32xf32>
    %159 = vector.shape_cast %158 : vector<1x2x32xf32> to vector<2x32xf32>
    %160 = vector.shape_cast %156 : vector<2x32xf32> to vector<1x2x32xf32>
    tpu.vector_store %arg5[%157, %c0_48, %c0_49], %160 {strides = array<i32>} : memref<8x2x32xf32, #tpu.memory_space<vmem>>, vector<1x2x32xf32>,
    %c2_i32 = arith.constant 2 : i32
    %161 = arith.index_cast %c2_i32 : i32 to index
    %c0_50 = arith.constant 0 : index
    %c0_51 = arith.constant 0 : index
    %162 = vector.load %arg1[%161, %c0_50, %c0_51] : memref<8x2x128xbf16, #tpu.memory_space<vmem>>, vector<1x2x128xbf16>
    %163 = vector.shape_cast %162 : vector<1x2x128xbf16> to vector<2x128xbf16>
    %164 = arith.extf %163 : vector<2x128xbf16> to vector<2x128xf32>
    %165 = arith.truncf %119 : vector<2x32xf32> to vector<2x32xbf16>
    %cst_52 = arith.constant dense<0.000000e+00> : vector<2x128xf32>
    %166 = tpu.matmul %165, %4, %cst_52 {dimension_numbers = #tpu.dot_dimension_numbers<[1], [0], [0], [1], [0, 0, 1, 1], [], []>} : vector<2x32xbf16>, vector<32x128xbf16>, vector<2x128xf32> -> vector<2x128xf32>
    %167 = arith.addf %164, %166 : vector<2x128xf32>
    %168 = vector.extract_strided_slice %167 {offsets = [0, 0], sizes = [2, 32], strides = [1, 1]} : vector<2x128xf32> to vector<2x32xf32>
    %169 = arith.negf %168 : vector<2x32xf32>
    %170 = math.exp %169 : vector<2x32xf32>
    %cst_53 = arith.constant 1.000000e+00 : f32
    %171 = vector.broadcast %cst_53 : f32 to vector<2x32xf32>
    %172 = arith.addf %171, %170 : vector<2x32xf32>
    %173 = arith.divf %171, %172 : vector<2x32xf32>
    %174 = vector.extract_strided_slice %167 {offsets = [0, 32], sizes = [2, 32], strides = [1, 1]} : vector<2x128xf32> to vector<2x32xf32>
    %175 = arith.negf %174 : vector<2x32xf32>
    %176 = math.exp %175 : vector<2x32xf32>
    %cst_54 = arith.constant 1.000000e+00 : f32
    %177 = vector.broadcast %cst_54 : f32 to vector<2x32xf32>
    %178 = arith.addf %177, %176 : vector<2x32xf32>
    %179 = arith.divf %177, %178 : vector<2x32xf32>
    %180 = vector.extract_strided_slice %167 {offsets = [0, 64], sizes = [2, 32], strides = [1, 1]} : vector<2x128xf32> to vector<2x32xf32>
    %181 = math.tanh %180 : vector<2x32xf32>
    %182 = vector.extract_strided_slice %167 {offsets = [0, 96], sizes = [2, 32], strides = [1, 1]} : vector<2x128xf32> to vector<2x32xf32>
    %183 = arith.negf %182 : vector<2x32xf32>
    %184 = math.exp %183 : vector<2x32xf32>
    %cst_55 = arith.constant 1.000000e+00 : f32
    %185 = vector.broadcast %cst_55 : f32 to vector<2x32xf32>
    %186 = arith.addf %185, %184 : vector<2x32xf32>
    %187 = arith.divf %185, %186 : vector<2x32xf32>
    %188 = arith.mulf %179, %117 : vector<2x32xf32>
    %189 = arith.mulf %173, %181 : vector<2x32xf32>
    %190 = arith.addf %188, %189 : vector<2x32xf32>
    %191 = math.tanh %190 : vector<2x32xf32>
    %192 = arith.mulf %187, %191 : vector<2x32xf32>
    %193 = arith.index_cast %c2_i32 : i32 to index
    %c0_56 = arith.constant 0 : index
    %c0_57 = arith.constant 0 : index
    %194 = vector.load %arg4[%193, %c0_56, %c0_57] : memref<8x2x32xf32, #tpu.memory_space<vmem>>, vector<1x2x32xf32>
    %195 = vector.shape_cast %194 : vector<1x2x32xf32> to vector<2x32xf32>
    %196 = vector.shape_cast %192 : vector<2x32xf32> to vector<1x2x32xf32>
    tpu.vector_store %arg4[%193, %c0_56, %c0_57], %196 {strides = array<i32>} : memref<8x2x32xf32, #tpu.memory_space<vmem>>, vector<1x2x32xf32>,
    %c7_i32_58 = arith.constant 7 : i32
    %197 = arith.subi %c7_i32_58, %c2_i32 : i32
    %198 = arith.index_cast %197 : i32 to index
    %c0_59 = arith.constant 0 : index
    %c0_60 = arith.constant 0 : index
    %199 = vector.load %arg2[%198, %c0_59, %c0_60] : memref<8x2x128xbf16, #tpu.memory_space<vmem>>, vector<1x2x128xbf16>
    %200 = vector.shape_cast %199 : vector<1x2x128xbf16> to vector<2x128xbf16>
    %201 = arith.extf %200 : vector<2x128xbf16> to vector<2x128xf32>
    %202 = arith.truncf %156 : vector<2x32xf32> to vector<2x32xbf16>
    %cst_61 = arith.constant dense<0.000000e+00> : vector<2x128xf32>
    %203 = tpu.matmul %202, %6, %cst_61 {dimension_numbers = #tpu.dot_dimension_numbers<[1], [0], [0], [1], [0, 0, 1, 1], [], []>} : vector<2x32xbf16>, vector<32x128xbf16>, vector<2x128xf32> -> vector<2x128xf32>
    %204 = arith.addf %201, %203 : vector<2x128xf32>
    %205 = vector.extract_strided_slice %204 {offsets = [0, 0], sizes = [2, 32], strides = [1, 1]} : vector<2x128xf32> to vector<2x32xf32>
    %206 = arith.negf %205 : vector<2x32xf32>
    %207 = math.exp %206 : vector<2x32xf32>
    %cst_62 = arith.constant 1.000000e+00 : f32
    %208 = vector.broadcast %cst_62 : f32 to vector<2x32xf32>
    %209 = arith.addf %208, %207 : vector<2x32xf32>
    %210 = arith.divf %208, %209 : vector<2x32xf32>
    %211 = vector.extract_strided_slice %204 {offsets = [0, 32], sizes = [2, 32], strides = [1, 1]} : vector<2x128xf32> to vector<2x32xf32>
    %212 = arith.negf %211 : vector<2x32xf32>
    %213 = math.exp %212 : vector<2x32xf32>
    %cst_63 = arith.constant 1.000000e+00 : f32
    %214 = vector.broadcast %cst_63 : f32 to vector<2x32xf32>
    %215 = arith.addf %214, %213 : vector<2x32xf32>
    %216 = arith.divf %214, %215 : vector<2x32xf32>
    %217 = vector.extract_strided_slice %204 {offsets = [0, 64], sizes = [2, 32], strides = [1, 1]} : vector<2x128xf32> to vector<2x32xf32>
    %218 = math.tanh %217 : vector<2x32xf32>
    %219 = vector.extract_strided_slice %204 {offsets = [0, 96], sizes = [2, 32], strides = [1, 1]} : vector<2x128xf32> to vector<2x32xf32>
    %220 = arith.negf %219 : vector<2x32xf32>
    %221 = math.exp %220 : vector<2x32xf32>
    %cst_64 = arith.constant 1.000000e+00 : f32
    %222 = vector.broadcast %cst_64 : f32 to vector<2x32xf32>
    %223 = arith.addf %222, %221 : vector<2x32xf32>
    %224 = arith.divf %222, %223 : vector<2x32xf32>
    %225 = arith.mulf %216, %154 : vector<2x32xf32>
    %226 = arith.mulf %210, %218 : vector<2x32xf32>
    %227 = arith.addf %225, %226 : vector<2x32xf32>
    %228 = math.tanh %227 : vector<2x32xf32>
    %229 = arith.mulf %224, %228 : vector<2x32xf32>
    %230 = arith.index_cast %197 : i32 to index
    %c0_65 = arith.constant 0 : index
    %c0_66 = arith.constant 0 : index
    %231 = vector.load %arg5[%230, %c0_65, %c0_66] : memref<8x2x32xf32, #tpu.memory_space<vmem>>, vector<1x2x32xf32>
    %232 = vector.shape_cast %231 : vector<1x2x32xf32> to vector<2x32xf32>
    %233 = vector.shape_cast %229 : vector<2x32xf32> to vector<1x2x32xf32>
    tpu.vector_store %arg5[%230, %c0_65, %c0_66], %233 {strides = array<i32>} : memref<8x2x32xf32, #tpu.memory_space<vmem>>, vector<1x2x32xf32>,
    %c3_i32 = arith.constant 3 : i32
    %234 = arith.index_cast %c3_i32 : i32 to index
    %c0_67 = arith.constant 0 : index
    %c0_68 = arith.constant 0 : index
    %235 = vector.load %arg1[%234, %c0_67, %c0_68] : memref<8x2x128xbf16, #tpu.memory_space<vmem>>, vector<1x2x128xbf16>
    %236 = vector.shape_cast %235 : vector<1x2x128xbf16> to vector<2x128xbf16>
    %237 = arith.extf %236 : vector<2x128xbf16> to vector<2x128xf32>
    %238 = arith.truncf %192 : vector<2x32xf32> to vector<2x32xbf16>
    %cst_69 = arith.constant dense<0.000000e+00> : vector<2x128xf32>
    %239 = tpu.matmul %238, %4, %cst_69 {dimension_numbers = #tpu.dot_dimension_numbers<[1], [0], [0], [1], [0, 0, 1, 1], [], []>} : vector<2x32xbf16>, vector<32x128xbf16>, vector<2x128xf32> -> vector<2x128xf32>
    %240 = arith.addf %237, %239 : vector<2x128xf32>
    %241 = vector.extract_strided_slice %240 {offsets = [0, 0], sizes = [2, 32], strides = [1, 1]} : vector<2x128xf32> to vector<2x32xf32>
    %242 = arith.negf %241 : vector<2x32xf32>
    %243 = math.exp %242 : vector<2x32xf32>
    %cst_70 = arith.constant 1.000000e+00 : f32
    %244 = vector.broadcast %cst_70 : f32 to vector<2x32xf32>
    %245 = arith.addf %244, %243 : vector<2x32xf32>
    %246 = arith.divf %244, %245 : vector<2x32xf32>
    %247 = vector.extract_strided_slice %240 {offsets = [0, 32], sizes = [2, 32], strides = [1, 1]} : vector<2x128xf32> to vector<2x32xf32>
    %248 = arith.negf %247 : vector<2x32xf32>
    %249 = math.exp %248 : vector<2x32xf32>
    %cst_71 = arith.constant 1.000000e+00 : f32
    %250 = vector.broadcast %cst_71 : f32 to vector<2x32xf32>
    %251 = arith.addf %250, %249 : vector<2x32xf32>
    %252 = arith.divf %250, %251 : vector<2x32xf32>
    %253 = vector.extract_strided_slice %240 {offsets = [0, 64], sizes = [2, 32], strides = [1, 1]} : vector<2x128xf32> to vector<2x32xf32>
    %254 = math.tanh %253 : vector<2x32xf32>
    %255 = vector.extract_strided_slice %240 {offsets = [0, 96], sizes = [2, 32], strides = [1, 1]} : vector<2x128xf32> to vector<2x32xf32>
    %256 = arith.negf %255 : vector<2x32xf32>
    %257 = math.exp %256 : vector<2x32xf32>
    %cst_72 = arith.constant 1.000000e+00 : f32
    %258 = vector.broadcast %cst_72 : f32 to vector<2x32xf32>
    %259 = arith.addf %258, %257 : vector<2x32xf32>
    %260 = arith.divf %258, %259 : vector<2x32xf32>
    %261 = arith.mulf %252, %190 : vector<2x32xf32>
    %262 = arith.mulf %246, %254 : vector<2x32xf32>
    %263 = arith.addf %261, %262 : vector<2x32xf32>
    %264 = math.tanh %263 : vector<2x32xf32>
    %265 = arith.mulf %260, %264 : vector<2x32xf32>
    %266 = arith.index_cast %c3_i32 : i32 to index
    %c0_73 = arith.constant 0 : index
    %c0_74 = arith.constant 0 : index
    %267 = vector.load %arg4[%266, %c0_73, %c0_74] : memref<8x2x32xf32, #tpu.memory_space<vmem>>, vector<1x2x32xf32>
    %268 = vector.shape_cast %267 : vector<1x2x32xf32> to vector<2x32xf32>
    %269 = vector.shape_cast %265 : vector<2x32xf32> to vector<1x2x32xf32>
    tpu.vector_store %arg4[%266, %c0_73, %c0_74], %269 {strides = array<i32>} : memref<8x2x32xf32, #tpu.memory_space<vmem>>, vector<1x2x32xf32>,
    %c7_i32_75 = arith.constant 7 : i32
    %270 = arith.subi %c7_i32_75, %c3_i32 : i32
    %271 = arith.index_cast %270 : i32 to index
    %c0_76 = arith.constant 0 : index
    %c0_77 = arith.constant 0 : index
    %272 = vector.load %arg2[%271, %c0_76, %c0_77] : memref<8x2x128xbf16, #tpu.memory_space<vmem>>, vector<1x2x128xbf16>
    %273 = vector.shape_cast %272 : vector<1x2x128xbf16> to vector<2x128xbf16>
    %274 = arith.extf %273 : vector<2x128xbf16> to vector<2x128xf32>
    %275 = arith.truncf %229 : vector<2x32xf32> to vector<2x32xbf16>
    %cst_78 = arith.constant dense<0.000000e+00> : vector<2x128xf32>
    %276 = tpu.matmul %275, %6, %cst_78 {dimension_numbers = #tpu.dot_dimension_numbers<[1], [0], [0], [1], [0, 0, 1, 1], [], []>} : vector<2x32xbf16>, vector<32x128xbf16>, vector<2x128xf32> -> vector<2x128xf32>
    %277 = arith.addf %274, %276 : vector<2x128xf32>
    %278 = vector.extract_strided_slice %277 {offsets = [0, 0], sizes = [2, 32], strides = [1, 1]} : vector<2x128xf32> to vector<2x32xf32>
    %279 = arith.negf %278 : vector<2x32xf32>
    %280 = math.exp %279 : vector<2x32xf32>
    %cst_79 = arith.constant 1.000000e+00 : f32
    %281 = vector.broadcast %cst_79 : f32 to vector<2x32xf32>
    %282 = arith.addf %281, %280 : vector<2x32xf32>
    %283 = arith.divf %281, %282 : vector<2x32xf32>
    %284 = vector.extract_strided_slice %277 {offsets = [0, 32], sizes = [2, 32], strides = [1, 1]} : vector<2x128xf32> to vector<2x32xf32>
    %285 = arith.negf %284 : vector<2x32xf32>
    %286 = math.exp %285 : vector<2x32xf32>
    %cst_80 = arith.constant 1.000000e+00 : f32
    %287 = vector.broadcast %cst_80 : f32 to vector<2x32xf32>
    %288 = arith.addf %287, %286 : vector<2x32xf32>
    %289 = arith.divf %287, %288 : vector<2x32xf32>
    %290 = vector.extract_strided_slice %277 {offsets = [0, 64], sizes = [2, 32], strides = [1, 1]} : vector<2x128xf32> to vector<2x32xf32>
    %291 = math.tanh %290 : vector<2x32xf32>
    %292 = vector.extract_strided_slice %277 {offsets = [0, 96], sizes = [2, 32], strides = [1, 1]} : vector<2x128xf32> to vector<2x32xf32>
    %293 = arith.negf %292 : vector<2x32xf32>
    %294 = math.exp %293 : vector<2x32xf32>
    %cst_81 = arith.constant 1.000000e+00 : f32
    %295 = vector.broadcast %cst_81 : f32 to vector<2x32xf32>
    %296 = arith.addf %295, %294 : vector<2x32xf32>
    %297 = arith.divf %295, %296 : vector<2x32xf32>
    %298 = arith.mulf %289, %227 : vector<2x32xf32>
    %299 = arith.mulf %283, %291 : vector<2x32xf32>
    %300 = arith.addf %298, %299 : vector<2x32xf32>
    %301 = math.tanh %300 : vector<2x32xf32>
    %302 = arith.mulf %297, %301 : vector<2x32xf32>
    %303 = arith.index_cast %270 : i32 to index
    %c0_82 = arith.constant 0 : index
    %c0_83 = arith.constant 0 : index
    %304 = vector.load %arg5[%303, %c0_82, %c0_83] : memref<8x2x32xf32, #tpu.memory_space<vmem>>, vector<1x2x32xf32>
    %305 = vector.shape_cast %304 : vector<1x2x32xf32> to vector<2x32xf32>
    %306 = vector.shape_cast %302 : vector<2x32xf32> to vector<1x2x32xf32>
    tpu.vector_store %arg5[%303, %c0_82, %c0_83], %306 {strides = array<i32>} : memref<8x2x32xf32, #tpu.memory_space<vmem>>, vector<1x2x32xf32>,
    %c4_i32 = arith.constant 4 : i32
    %307 = arith.index_cast %c4_i32 : i32 to index
    %c0_84 = arith.constant 0 : index
    %c0_85 = arith.constant 0 : index
    %308 = vector.load %arg1[%307, %c0_84, %c0_85] : memref<8x2x128xbf16, #tpu.memory_space<vmem>>, vector<1x2x128xbf16>
    %309 = vector.shape_cast %308 : vector<1x2x128xbf16> to vector<2x128xbf16>
    %310 = arith.extf %309 : vector<2x128xbf16> to vector<2x128xf32>
    %311 = arith.truncf %265 : vector<2x32xf32> to vector<2x32xbf16>
    %cst_86 = arith.constant dense<0.000000e+00> : vector<2x128xf32>
    %312 = tpu.matmul %311, %4, %cst_86 {dimension_numbers = #tpu.dot_dimension_numbers<[1], [0], [0], [1], [0, 0, 1, 1], [], []>} : vector<2x32xbf16>, vector<32x128xbf16>, vector<2x128xf32> -> vector<2x128xf32>
    %313 = arith.addf %310, %312 : vector<2x128xf32>
    %314 = vector.extract_strided_slice %313 {offsets = [0, 0], sizes = [2, 32], strides = [1, 1]} : vector<2x128xf32> to vector<2x32xf32>
    %315 = arith.negf %314 : vector<2x32xf32>
    %316 = math.exp %315 : vector<2x32xf32>
    %cst_87 = arith.constant 1.000000e+00 : f32
    %317 = vector.broadcast %cst_87 : f32 to vector<2x32xf32>
    %318 = arith.addf %317, %316 : vector<2x32xf32>
    %319 = arith.divf %317, %318 : vector<2x32xf32>
    %320 = vector.extract_strided_slice %313 {offsets = [0, 32], sizes = [2, 32], strides = [1, 1]} : vector<2x128xf32> to vector<2x32xf32>
    %321 = arith.negf %320 : vector<2x32xf32>
    %322 = math.exp %321 : vector<2x32xf32>
    %cst_88 = arith.constant 1.000000e+00 : f32
    %323 = vector.broadcast %cst_88 : f32 to vector<2x32xf32>
    %324 = arith.addf %323, %322 : vector<2x32xf32>
    %325 = arith.divf %323, %324 : vector<2x32xf32>
    %326 = vector.extract_strided_slice %313 {offsets = [0, 64], sizes = [2, 32], strides = [1, 1]} : vector<2x128xf32> to vector<2x32xf32>
    %327 = math.tanh %326 : vector<2x32xf32>
    %328 = vector.extract_strided_slice %313 {offsets = [0, 96], sizes = [2, 32], strides = [1, 1]} : vector<2x128xf32> to vector<2x32xf32>
    %329 = arith.negf %328 : vector<2x32xf32>
    %330 = math.exp %329 : vector<2x32xf32>
    %cst_89 = arith.constant 1.000000e+00 : f32
    %331 = vector.broadcast %cst_89 : f32 to vector<2x32xf32>
    %332 = arith.addf %331, %330 : vector<2x32xf32>
    %333 = arith.divf %331, %332 : vector<2x32xf32>
    %334 = arith.mulf %325, %263 : vector<2x32xf32>
    %335 = arith.mulf %319, %327 : vector<2x32xf32>
    %336 = arith.addf %334, %335 : vector<2x32xf32>
    %337 = math.tanh %336 : vector<2x32xf32>
    %338 = arith.mulf %333, %337 : vector<2x32xf32>
    %339 = arith.index_cast %c4_i32 : i32 to index
    %c0_90 = arith.constant 0 : index
    %c0_91 = arith.constant 0 : index
    %340 = vector.load %arg4[%339, %c0_90, %c0_91] : memref<8x2x32xf32, #tpu.memory_space<vmem>>, vector<1x2x32xf32>
    %341 = vector.shape_cast %340 : vector<1x2x32xf32> to vector<2x32xf32>
    %342 = vector.shape_cast %338 : vector<2x32xf32> to vector<1x2x32xf32>
    tpu.vector_store %arg4[%339, %c0_90, %c0_91], %342 {strides = array<i32>} : memref<8x2x32xf32, #tpu.memory_space<vmem>>, vector<1x2x32xf32>,
    %c7_i32_92 = arith.constant 7 : i32
    %343 = arith.subi %c7_i32_92, %c4_i32 : i32
    %344 = arith.index_cast %343 : i32 to index
    %c0_93 = arith.constant 0 : index
    %c0_94 = arith.constant 0 : index
    %345 = vector.load %arg2[%344, %c0_93, %c0_94] : memref<8x2x128xbf16, #tpu.memory_space<vmem>>, vector<1x2x128xbf16>
    %346 = vector.shape_cast %345 : vector<1x2x128xbf16> to vector<2x128xbf16>
    %347 = arith.extf %346 : vector<2x128xbf16> to vector<2x128xf32>
    %348 = arith.truncf %302 : vector<2x32xf32> to vector<2x32xbf16>
    %cst_95 = arith.constant dense<0.000000e+00> : vector<2x128xf32>
    %349 = tpu.matmul %348, %6, %cst_95 {dimension_numbers = #tpu.dot_dimension_numbers<[1], [0], [0], [1], [0, 0, 1, 1], [], []>} : vector<2x32xbf16>, vector<32x128xbf16>, vector<2x128xf32> -> vector<2x128xf32>
    %350 = arith.addf %347, %349 : vector<2x128xf32>
    %351 = vector.extract_strided_slice %350 {offsets = [0, 0], sizes = [2, 32], strides = [1, 1]} : vector<2x128xf32> to vector<2x32xf32>
    %352 = arith.negf %351 : vector<2x32xf32>
    %353 = math.exp %352 : vector<2x32xf32>
    %cst_96 = arith.constant 1.000000e+00 : f32
    %354 = vector.broadcast %cst_96 : f32 to vector<2x32xf32>
    %355 = arith.addf %354, %353 : vector<2x32xf32>
    %356 = arith.divf %354, %355 : vector<2x32xf32>
    %357 = vector.extract_strided_slice %350 {offsets = [0, 32], sizes = [2, 32], strides = [1, 1]} : vector<2x128xf32> to vector<2x32xf32>
    %358 = arith.negf %357 : vector<2x32xf32>
    %359 = math.exp %358 : vector<2x32xf32>
    %cst_97 = arith.constant 1.000000e+00 : f32
    %360 = vector.broadcast %cst_97 : f32 to vector<2x32xf32>
    %361 = arith.addf %360, %359 : vector<2x32xf32>
    %362 = arith.divf %360, %361 : vector<2x32xf32>
    %363 = vector.extract_strided_slice %350 {offsets = [0, 64], sizes = [2, 32], strides = [1, 1]} : vector<2x128xf32> to vector<2x32xf32>
    %364 = math.tanh %363 : vector<2x32xf32>
    %365 = vector.extract_strided_slice %350 {offsets = [0, 96], sizes = [2, 32], strides = [1, 1]} : vector<2x128xf32> to vector<2x32xf32>
    %366 = arith.negf %365 : vector<2x32xf32>
    %367 = math.exp %366 : vector<2x32xf32>
    %cst_98 = arith.constant 1.000000e+00 : f32
    %368 = vector.broadcast %cst_98 : f32 to vector<2x32xf32>
    %369 = arith.addf %368, %367 : vector<2x32xf32>
    %370 = arith.divf %368, %369 : vector<2x32xf32>
    %371 = arith.mulf %362, %300 : vector<2x32xf32>
    %372 = arith.mulf %356, %364 : vector<2x32xf32>
    %373 = arith.addf %371, %372 : vector<2x32xf32>
    %374 = math.tanh %373 : vector<2x32xf32>
    %375 = arith.mulf %370, %374 : vector<2x32xf32>
    %376 = arith.index_cast %343 : i32 to index
    %c0_99 = arith.constant 0 : index
    %c0_100 = arith.constant 0 : index
    %377 = vector.load %arg5[%376, %c0_99, %c0_100] : memref<8x2x32xf32, #tpu.memory_space<vmem>>, vector<1x2x32xf32>
    %378 = vector.shape_cast %377 : vector<1x2x32xf32> to vector<2x32xf32>
    %379 = vector.shape_cast %375 : vector<2x32xf32> to vector<1x2x32xf32>
    tpu.vector_store %arg5[%376, %c0_99, %c0_100], %379 {strides = array<i32>} : memref<8x2x32xf32, #tpu.memory_space<vmem>>, vector<1x2x32xf32>,
    %c5_i32 = arith.constant 5 : i32
    %380 = arith.index_cast %c5_i32 : i32 to index
    %c0_101 = arith.constant 0 : index
    %c0_102 = arith.constant 0 : index
    %381 = vector.load %arg1[%380, %c0_101, %c0_102] : memref<8x2x128xbf16, #tpu.memory_space<vmem>>, vector<1x2x128xbf16>
    %382 = vector.shape_cast %381 : vector<1x2x128xbf16> to vector<2x128xbf16>
    %383 = arith.extf %382 : vector<2x128xbf16> to vector<2x128xf32>
    %384 = arith.truncf %338 : vector<2x32xf32> to vector<2x32xbf16>
    %cst_103 = arith.constant dense<0.000000e+00> : vector<2x128xf32>
    %385 = tpu.matmul %384, %4, %cst_103 {dimension_numbers = #tpu.dot_dimension_numbers<[1], [0], [0], [1], [0, 0, 1, 1], [], []>} : vector<2x32xbf16>, vector<32x128xbf16>, vector<2x128xf32> -> vector<2x128xf32>
    %386 = arith.addf %383, %385 : vector<2x128xf32>
    %387 = vector.extract_strided_slice %386 {offsets = [0, 0], sizes = [2, 32], strides = [1, 1]} : vector<2x128xf32> to vector<2x32xf32>
    %388 = arith.negf %387 : vector<2x32xf32>
    %389 = math.exp %388 : vector<2x32xf32>
    %cst_104 = arith.constant 1.000000e+00 : f32
    %390 = vector.broadcast %cst_104 : f32 to vector<2x32xf32>
    %391 = arith.addf %390, %389 : vector<2x32xf32>
    %392 = arith.divf %390, %391 : vector<2x32xf32>
    %393 = vector.extract_strided_slice %386 {offsets = [0, 32], sizes = [2, 32], strides = [1, 1]} : vector<2x128xf32> to vector<2x32xf32>
    %394 = arith.negf %393 : vector<2x32xf32>
    %395 = math.exp %394 : vector<2x32xf32>
    %cst_105 = arith.constant 1.000000e+00 : f32
    %396 = vector.broadcast %cst_105 : f32 to vector<2x32xf32>
    %397 = arith.addf %396, %395 : vector<2x32xf32>
    %398 = arith.divf %396, %397 : vector<2x32xf32>
    %399 = vector.extract_strided_slice %386 {offsets = [0, 64], sizes = [2, 32], strides = [1, 1]} : vector<2x128xf32> to vector<2x32xf32>
    %400 = math.tanh %399 : vector<2x32xf32>
    %401 = vector.extract_strided_slice %386 {offsets = [0, 96], sizes = [2, 32], strides = [1, 1]} : vector<2x128xf32> to vector<2x32xf32>
    %402 = arith.negf %401 : vector<2x32xf32>
    %403 = math.exp %402 : vector<2x32xf32>
    %cst_106 = arith.constant 1.000000e+00 : f32
    %404 = vector.broadcast %cst_106 : f32 to vector<2x32xf32>
    %405 = arith.addf %404, %403 : vector<2x32xf32>
    %406 = arith.divf %404, %405 : vector<2x32xf32>
    %407 = arith.mulf %398, %336 : vector<2x32xf32>
    %408 = arith.mulf %392, %400 : vector<2x32xf32>
    %409 = arith.addf %407, %408 : vector<2x32xf32>
    %410 = math.tanh %409 : vector<2x32xf32>
    %411 = arith.mulf %406, %410 : vector<2x32xf32>
    %412 = arith.index_cast %c5_i32 : i32 to index
    %c0_107 = arith.constant 0 : index
    %c0_108 = arith.constant 0 : index
    %413 = vector.load %arg4[%412, %c0_107, %c0_108] : memref<8x2x32xf32, #tpu.memory_space<vmem>>, vector<1x2x32xf32>
    %414 = vector.shape_cast %413 : vector<1x2x32xf32> to vector<2x32xf32>
    %415 = vector.shape_cast %411 : vector<2x32xf32> to vector<1x2x32xf32>
    tpu.vector_store %arg4[%412, %c0_107, %c0_108], %415 {strides = array<i32>} : memref<8x2x32xf32, #tpu.memory_space<vmem>>, vector<1x2x32xf32>,
    %c7_i32_109 = arith.constant 7 : i32
    %416 = arith.subi %c7_i32_109, %c5_i32 : i32
    %417 = arith.index_cast %416 : i32 to index
    %c0_110 = arith.constant 0 : index
    %c0_111 = arith.constant 0 : index
    %418 = vector.load %arg2[%417, %c0_110, %c0_111] : memref<8x2x128xbf16, #tpu.memory_space<vmem>>, vector<1x2x128xbf16>
    %419 = vector.shape_cast %418 : vector<1x2x128xbf16> to vector<2x128xbf16>
    %420 = arith.extf %419 : vector<2x128xbf16> to vector<2x128xf32>
    %421 = arith.truncf %375 : vector<2x32xf32> to vector<2x32xbf16>
    %cst_112 = arith.constant dense<0.000000e+00> : vector<2x128xf32>
    %422 = tpu.matmul %421, %6, %cst_112 {dimension_numbers = #tpu.dot_dimension_numbers<[1], [0], [0], [1], [0, 0, 1, 1], [], []>} : vector<2x32xbf16>, vector<32x128xbf16>, vector<2x128xf32> -> vector<2x128xf32>
    %423 = arith.addf %420, %422 : vector<2x128xf32>
    %424 = vector.extract_strided_slice %423 {offsets = [0, 0], sizes = [2, 32], strides = [1, 1]} : vector<2x128xf32> to vector<2x32xf32>
    %425 = arith.negf %424 : vector<2x32xf32>
    %426 = math.exp %425 : vector<2x32xf32>
    %cst_113 = arith.constant 1.000000e+00 : f32
    %427 = vector.broadcast %cst_113 : f32 to vector<2x32xf32>
    %428 = arith.addf %427, %426 : vector<2x32xf32>
    %429 = arith.divf %427, %428 : vector<2x32xf32>
    %430 = vector.extract_strided_slice %423 {offsets = [0, 32], sizes = [2, 32], strides = [1, 1]} : vector<2x128xf32> to vector<2x32xf32>
    %431 = arith.negf %430 : vector<2x32xf32>
    %432 = math.exp %431 : vector<2x32xf32>
    %cst_114 = arith.constant 1.000000e+00 : f32
    %433 = vector.broadcast %cst_114 : f32 to vector<2x32xf32>
    %434 = arith.addf %433, %432 : vector<2x32xf32>
    %435 = arith.divf %433, %434 : vector<2x32xf32>
    %436 = vector.extract_strided_slice %423 {offsets = [0, 64], sizes = [2, 32], strides = [1, 1]} : vector<2x128xf32> to vector<2x32xf32>
    %437 = math.tanh %436 : vector<2x32xf32>
    %438 = vector.extract_strided_slice %423 {offsets = [0, 96], sizes = [2, 32], strides = [1, 1]} : vector<2x128xf32> to vector<2x32xf32>
    %439 = arith.negf %438 : vector<2x32xf32>
    %440 = math.exp %439 : vector<2x32xf32>
    %cst_115 = arith.constant 1.000000e+00 : f32
    %441 = vector.broadcast %cst_115 : f32 to vector<2x32xf32>
    %442 = arith.addf %441, %440 : vector<2x32xf32>
    %443 = arith.divf %441, %442 : vector<2x32xf32>
    %444 = arith.mulf %435, %373 : vector<2x32xf32>
    %445 = arith.mulf %429, %437 : vector<2x32xf32>
    %446 = arith.addf %444, %445 : vector<2x32xf32>
    %447 = math.tanh %446 : vector<2x32xf32>
    %448 = arith.mulf %443, %447 : vector<2x32xf32>
    %449 = arith.index_cast %416 : i32 to index
    %c0_116 = arith.constant 0 : index
    %c0_117 = arith.constant 0 : index
    %450 = vector.load %arg5[%449, %c0_116, %c0_117] : memref<8x2x32xf32, #tpu.memory_space<vmem>>, vector<1x2x32xf32>
    %451 = vector.shape_cast %450 : vector<1x2x32xf32> to vector<2x32xf32>
    %452 = vector.shape_cast %448 : vector<2x32xf32> to vector<1x2x32xf32>
    tpu.vector_store %arg5[%449, %c0_116, %c0_117], %452 {strides = array<i32>} : memref<8x2x32xf32, #tpu.memory_space<vmem>>, vector<1x2x32xf32>,
    %c6_i32 = arith.constant 6 : i32
    %453 = arith.index_cast %c6_i32 : i32 to index
    %c0_118 = arith.constant 0 : index
    %c0_119 = arith.constant 0 : index
    %454 = vector.load %arg1[%453, %c0_118, %c0_119] : memref<8x2x128xbf16, #tpu.memory_space<vmem>>, vector<1x2x128xbf16>
    %455 = vector.shape_cast %454 : vector<1x2x128xbf16> to vector<2x128xbf16>
    %456 = arith.extf %455 : vector<2x128xbf16> to vector<2x128xf32>
    %457 = arith.truncf %411 : vector<2x32xf32> to vector<2x32xbf16>
    %cst_120 = arith.constant dense<0.000000e+00> : vector<2x128xf32>
    %458 = tpu.matmul %457, %4, %cst_120 {dimension_numbers = #tpu.dot_dimension_numbers<[1], [0], [0], [1], [0, 0, 1, 1], [], []>} : vector<2x32xbf16>, vector<32x128xbf16>, vector<2x128xf32> -> vector<2x128xf32>
    %459 = arith.addf %456, %458 : vector<2x128xf32>
    %460 = vector.extract_strided_slice %459 {offsets = [0, 0], sizes = [2, 32], strides = [1, 1]} : vector<2x128xf32> to vector<2x32xf32>
    %461 = arith.negf %460 : vector<2x32xf32>
    %462 = math.exp %461 : vector<2x32xf32>
    %cst_121 = arith.constant 1.000000e+00 : f32
    %463 = vector.broadcast %cst_121 : f32 to vector<2x32xf32>
    %464 = arith.addf %463, %462 : vector<2x32xf32>
    %465 = arith.divf %463, %464 : vector<2x32xf32>
    %466 = vector.extract_strided_slice %459 {offsets = [0, 32], sizes = [2, 32], strides = [1, 1]} : vector<2x128xf32> to vector<2x32xf32>
    %467 = arith.negf %466 : vector<2x32xf32>
    %468 = math.exp %467 : vector<2x32xf32>
    %cst_122 = arith.constant 1.000000e+00 : f32
    %469 = vector.broadcast %cst_122 : f32 to vector<2x32xf32>
    %470 = arith.addf %469, %468 : vector<2x32xf32>
    %471 = arith.divf %469, %470 : vector<2x32xf32>
    %472 = vector.extract_strided_slice %459 {offsets = [0, 64], sizes = [2, 32], strides = [1, 1]} : vector<2x128xf32> to vector<2x32xf32>
    %473 = math.tanh %472 : vector<2x32xf32>
    %474 = vector.extract_strided_slice %459 {offsets = [0, 96], sizes = [2, 32], strides = [1, 1]} : vector<2x128xf32> to vector<2x32xf32>
    %475 = arith.negf %474 : vector<2x32xf32>
    %476 = math.exp %475 : vector<2x32xf32>
    %cst_123 = arith.constant 1.000000e+00 : f32
    %477 = vector.broadcast %cst_123 : f32 to vector<2x32xf32>
    %478 = arith.addf %477, %476 : vector<2x32xf32>
    %479 = arith.divf %477, %478 : vector<2x32xf32>
    %480 = arith.mulf %471, %409 : vector<2x32xf32>
    %481 = arith.mulf %465, %473 : vector<2x32xf32>
    %482 = arith.addf %480, %481 : vector<2x32xf32>
    %483 = math.tanh %482 : vector<2x32xf32>
    %484 = arith.mulf %479, %483 : vector<2x32xf32>
    %485 = arith.index_cast %c6_i32 : i32 to index
    %c0_124 = arith.constant 0 : index
    %c0_125 = arith.constant 0 : index
    %486 = vector.load %arg4[%485, %c0_124, %c0_125] : memref<8x2x32xf32, #tpu.memory_space<vmem>>, vector<1x2x32xf32>
    %487 = vector.shape_cast %486 : vector<1x2x32xf32> to vector<2x32xf32>
    %488 = vector.shape_cast %484 : vector<2x32xf32> to vector<1x2x32xf32>
    tpu.vector_store %arg4[%485, %c0_124, %c0_125], %488 {strides = array<i32>} : memref<8x2x32xf32, #tpu.memory_space<vmem>>, vector<1x2x32xf32>,
    %c7_i32_126 = arith.constant 7 : i32
    %489 = arith.subi %c7_i32_126, %c6_i32 : i32
    %490 = arith.index_cast %489 : i32 to index
    %c0_127 = arith.constant 0 : index
    %c0_128 = arith.constant 0 : index
    %491 = vector.load %arg2[%490, %c0_127, %c0_128] : memref<8x2x128xbf16, #tpu.memory_space<vmem>>, vector<1x2x128xbf16>
    %492 = vector.shape_cast %491 : vector<1x2x128xbf16> to vector<2x128xbf16>
    %493 = arith.extf %492 : vector<2x128xbf16> to vector<2x128xf32>
    %494 = arith.truncf %448 : vector<2x32xf32> to vector<2x32xbf16>
    %cst_129 = arith.constant dense<0.000000e+00> : vector<2x128xf32>
    %495 = tpu.matmul %494, %6, %cst_129 {dimension_numbers = #tpu.dot_dimension_numbers<[1], [0], [0], [1], [0, 0, 1, 1], [], []>} : vector<2x32xbf16>, vector<32x128xbf16>, vector<2x128xf32> -> vector<2x128xf32>
    %496 = arith.addf %493, %495 : vector<2x128xf32>
    %497 = vector.extract_strided_slice %496 {offsets = [0, 0], sizes = [2, 32], strides = [1, 1]} : vector<2x128xf32> to vector<2x32xf32>
    %498 = arith.negf %497 : vector<2x32xf32>
    %499 = math.exp %498 : vector<2x32xf32>
    %cst_130 = arith.constant 1.000000e+00 : f32
    %500 = vector.broadcast %cst_130 : f32 to vector<2x32xf32>
    %501 = arith.addf %500, %499 : vector<2x32xf32>
    %502 = arith.divf %500, %501 : vector<2x32xf32>
    %503 = vector.extract_strided_slice %496 {offsets = [0, 32], sizes = [2, 32], strides = [1, 1]} : vector<2x128xf32> to vector<2x32xf32>
    %504 = arith.negf %503 : vector<2x32xf32>
    %505 = math.exp %504 : vector<2x32xf32>
    %cst_131 = arith.constant 1.000000e+00 : f32
    %506 = vector.broadcast %cst_131 : f32 to vector<2x32xf32>
    %507 = arith.addf %506, %505 : vector<2x32xf32>
    %508 = arith.divf %506, %507 : vector<2x32xf32>
    %509 = vector.extract_strided_slice %496 {offsets = [0, 64], sizes = [2, 32], strides = [1, 1]} : vector<2x128xf32> to vector<2x32xf32>
    %510 = math.tanh %509 : vector<2x32xf32>
    %511 = vector.extract_strided_slice %496 {offsets = [0, 96], sizes = [2, 32], strides = [1, 1]} : vector<2x128xf32> to vector<2x32xf32>
    %512 = arith.negf %511 : vector<2x32xf32>
    %513 = math.exp %512 : vector<2x32xf32>
    %cst_132 = arith.constant 1.000000e+00 : f32
    %514 = vector.broadcast %cst_132 : f32 to vector<2x32xf32>
    %515 = arith.addf %514, %513 : vector<2x32xf32>
    %516 = arith.divf %514, %515 : vector<2x32xf32>
    %517 = arith.mulf %508, %446 : vector<2x32xf32>
    %518 = arith.mulf %502, %510 : vector<2x32xf32>
    %519 = arith.addf %517, %518 : vector<2x32xf32>
    %520 = math.tanh %519 : vector<2x32xf32>
    %521 = arith.mulf %516, %520 : vector<2x32xf32>
    %522 = arith.index_cast %489 : i32 to index
    %c0_133 = arith.constant 0 : index
    %c0_134 = arith.constant 0 : index
    %523 = vector.load %arg5[%522, %c0_133, %c0_134] : memref<8x2x32xf32, #tpu.memory_space<vmem>>, vector<1x2x32xf32>
    %524 = vector.shape_cast %523 : vector<1x2x32xf32> to vector<2x32xf32>
    %525 = vector.shape_cast %521 : vector<2x32xf32> to vector<1x2x32xf32>
    tpu.vector_store %arg5[%522, %c0_133, %c0_134], %525 {strides = array<i32>} : memref<8x2x32xf32, #tpu.memory_space<vmem>>, vector<1x2x32xf32>,
    %c7_i32_135 = arith.constant 7 : i32
    %526 = arith.index_cast %c7_i32_135 : i32 to index
    %c0_136 = arith.constant 0 : index
    %c0_137 = arith.constant 0 : index
    %527 = vector.load %arg1[%526, %c0_136, %c0_137] : memref<8x2x128xbf16, #tpu.memory_space<vmem>>, vector<1x2x128xbf16>
    %528 = vector.shape_cast %527 : vector<1x2x128xbf16> to vector<2x128xbf16>
    %529 = arith.extf %528 : vector<2x128xbf16> to vector<2x128xf32>
    %530 = arith.truncf %484 : vector<2x32xf32> to vector<2x32xbf16>
    %cst_138 = arith.constant dense<0.000000e+00> : vector<2x128xf32>
    %531 = tpu.matmul %530, %4, %cst_138 {dimension_numbers = #tpu.dot_dimension_numbers<[1], [0], [0], [1], [0, 0, 1, 1], [], []>} : vector<2x32xbf16>, vector<32x128xbf16>, vector<2x128xf32> -> vector<2x128xf32>
    %532 = arith.addf %529, %531 : vector<2x128xf32>
    %533 = vector.extract_strided_slice %532 {offsets = [0, 0], sizes = [2, 32], strides = [1, 1]} : vector<2x128xf32> to vector<2x32xf32>
    %534 = arith.negf %533 : vector<2x32xf32>
    %535 = math.exp %534 : vector<2x32xf32>
    %cst_139 = arith.constant 1.000000e+00 : f32
    %536 = vector.broadcast %cst_139 : f32 to vector<2x32xf32>
    %537 = arith.addf %536, %535 : vector<2x32xf32>
    %538 = arith.divf %536, %537 : vector<2x32xf32>
    %539 = vector.extract_strided_slice %532 {offsets = [0, 32], sizes = [2, 32], strides = [1, 1]} : vector<2x128xf32> to vector<2x32xf32>
    %540 = arith.negf %539 : vector<2x32xf32>
    %541 = math.exp %540 : vector<2x32xf32>
    %cst_140 = arith.constant 1.000000e+00 : f32
    %542 = vector.broadcast %cst_140 : f32 to vector<2x32xf32>
    %543 = arith.addf %542, %541 : vector<2x32xf32>
    %544 = arith.divf %542, %543 : vector<2x32xf32>
    %545 = vector.extract_strided_slice %532 {offsets = [0, 64], sizes = [2, 32], strides = [1, 1]} : vector<2x128xf32> to vector<2x32xf32>
    %546 = math.tanh %545 : vector<2x32xf32>
    %547 = vector.extract_strided_slice %532 {offsets = [0, 96], sizes = [2, 32], strides = [1, 1]} : vector<2x128xf32> to vector<2x32xf32>
    %548 = arith.negf %547 : vector<2x32xf32>
    %549 = math.exp %548 : vector<2x32xf32>
    %cst_141 = arith.constant 1.000000e+00 : f32
    %550 = vector.broadcast %cst_141 : f32 to vector<2x32xf32>
    %551 = arith.addf %550, %549 : vector<2x32xf32>
    %552 = arith.divf %550, %551 : vector<2x32xf32>
    %553 = arith.mulf %544, %482 : vector<2x32xf32>
    %554 = arith.mulf %538, %546 : vector<2x32xf32>
    %555 = arith.addf %553, %554 : vector<2x32xf32>
    %556 = math.tanh %555 : vector<2x32xf32>
    %557 = arith.mulf %552, %556 : vector<2x32xf32>
    %558 = arith.index_cast %c7_i32_135 : i32 to index
    %c0_142 = arith.constant 0 : index
    %c0_143 = arith.constant 0 : index
    %559 = vector.load %arg4[%558, %c0_142, %c0_143] : memref<8x2x32xf32, #tpu.memory_space<vmem>>, vector<1x2x32xf32>
    %560 = vector.shape_cast %559 : vector<1x2x32xf32> to vector<2x32xf32>
    %561 = vector.shape_cast %557 : vector<2x32xf32> to vector<1x2x32xf32>
    tpu.vector_store %arg4[%558, %c0_142, %c0_143], %561 {strides = array<i32>} : memref<8x2x32xf32, #tpu.memory_space<vmem>>, vector<1x2x32xf32>,
    %c7_i32_144 = arith.constant 7 : i32
    %562 = arith.subi %c7_i32_144, %c7_i32_135 : i32
    %563 = arith.index_cast %562 : i32 to index
    %c0_145 = arith.constant 0 : index
    %c0_146 = arith.constant 0 : index
    %564 = vector.load %arg2[%563, %c0_145, %c0_146] : memref<8x2x128xbf16, #tpu.memory_space<vmem>>, vector<1x2x128xbf16>
    %565 = vector.shape_cast %564 : vector<1x2x128xbf16> to vector<2x128xbf16>
    %566 = arith.extf %565 : vector<2x128xbf16> to vector<2x128xf32>
    %567 = arith.truncf %521 : vector<2x32xf32> to vector<2x32xbf16>
    %cst_147 = arith.constant dense<0.000000e+00> : vector<2x128xf32>
    %568 = tpu.matmul %567, %6, %cst_147 {dimension_numbers = #tpu.dot_dimension_numbers<[1], [0], [0], [1], [0, 0, 1, 1], [], []>} : vector<2x32xbf16>, vector<32x128xbf16>, vector<2x128xf32> -> vector<2x128xf32>
    %569 = arith.addf %566, %568 : vector<2x128xf32>
    %570 = vector.extract_strided_slice %569 {offsets = [0, 0], sizes = [2, 32], strides = [1, 1]} : vector<2x128xf32> to vector<2x32xf32>
    %571 = arith.negf %570 : vector<2x32xf32>
    %572 = math.exp %571 : vector<2x32xf32>
    %cst_148 = arith.constant 1.000000e+00 : f32
    %573 = vector.broadcast %cst_148 : f32 to vector<2x32xf32>
    %574 = arith.addf %573, %572 : vector<2x32xf32>
    %575 = arith.divf %573, %574 : vector<2x32xf32>
    %576 = vector.extract_strided_slice %569 {offsets = [0, 32], sizes = [2, 32], strides = [1, 1]} : vector<2x128xf32> to vector<2x32xf32>
    %577 = arith.negf %576 : vector<2x32xf32>
    %578 = math.exp %577 : vector<2x32xf32>
    %cst_149 = arith.constant 1.000000e+00 : f32
    %579 = vector.broadcast %cst_149 : f32 to vector<2x32xf32>
    %580 = arith.addf %579, %578 : vector<2x32xf32>
    %581 = arith.divf %579, %580 : vector<2x32xf32>
    %582 = vector.extract_strided_slice %569 {offsets = [0, 64], sizes = [2, 32], strides = [1, 1]} : vector<2x128xf32> to vector<2x32xf32>
    %583 = math.tanh %582 : vector<2x32xf32>
    %584 = vector.extract_strided_slice %569 {offsets = [0, 96], sizes = [2, 32], strides = [1, 1]} : vector<2x128xf32> to vector<2x32xf32>
    %585 = arith.negf %584 : vector<2x32xf32>
    %586 = math.exp %585 : vector<2x32xf32>
    %cst_150 = arith.constant 1.000000e+00 : f32
    %587 = vector.broadcast %cst_150 : f32 to vector<2x32xf32>
    %588 = arith.addf %587, %586 : vector<2x32xf32>
    %589 = arith.divf %587, %588 : vector<2x32xf32>
    %590 = arith.mulf %581, %519 : vector<2x32xf32>
    %591 = arith.mulf %575, %583 : vector<2x32xf32>
    %592 = arith.addf %590, %591 : vector<2x32xf32>
    %593 = math.tanh %592 : vector<2x32xf32>
    %594 = arith.mulf %589, %593 : vector<2x32xf32>
    %595 = arith.index_cast %562 : i32 to index
    %c0_151 = arith.constant 0 : index
    %c0_152 = arith.constant 0 : index
    %596 = vector.load %arg5[%595, %c0_151, %c0_152] : memref<8x2x32xf32, #tpu.memory_space<vmem>>, vector<1x2x32xf32>
    %597 = vector.shape_cast %596 : vector<1x2x32xf32> to vector<2x32xf32>
    %598 = vector.shape_cast %594 : vector<2x32xf32> to vector<1x2x32xf32>
    tpu.vector_store %arg5[%595, %c0_151, %c0_152], %598 {strides = array<i32>} : memref<8x2x32xf32, #tpu.memory_space<vmem>>, vector<1x2x32xf32>,
    %c8_i32 = arith.constant 8 : i32
    %c0_153 = arith.constant 0 : index
    %c0_154 = arith.constant 0 : index
    %c0_155 = arith.constant 0 : index
    %599 = vector.load %arg8[%c0_153, %c0_154, %c0_155] : memref<2x2x32xf32, #tpu.memory_space<vmem>>, vector<1x2x32xf32>
    %600 = vector.shape_cast %599 : vector<1x2x32xf32> to vector<2x32xf32>
    %601 = vector.shape_cast %557 : vector<2x32xf32> to vector<1x2x32xf32>
    tpu.vector_store %arg8[%c0_153, %c0_154, %c0_155], %601 {strides = array<i32>} : memref<2x2x32xf32, #tpu.memory_space<vmem>>, vector<1x2x32xf32>,
    %c1_156 = arith.constant 1 : index
    %c0_157 = arith.constant 0 : index
    %c0_158 = arith.constant 0 : index
    %602 = vector.load %arg8[%c1_156, %c0_157, %c0_158] : memref<2x2x32xf32, #tpu.memory_space<vmem>>, vector<1x2x32xf32>
    %603 = vector.shape_cast %602 : vector<1x2x32xf32> to vector<2x32xf32>
    %604 = vector.shape_cast %594 : vector<2x32xf32> to vector<1x2x32xf32>
    tpu.vector_store %arg8[%c1_156, %c0_157, %c0_158], %604 {strides = array<i32>} : memref<2x2x32xf32, #tpu.memory_space<vmem>>, vector<1x2x32xf32>,
    %c0_159 = arith.constant 0 : index
    %c0_160 = arith.constant 0 : index
    %c0_161 = arith.constant 0 : index
    %605 = vector.load %arg9[%c0_159, %c0_160, %c0_161] : memref<2x2x32xf32, #tpu.memory_space<vmem>>, vector<1x2x32xf32>
    %606 = vector.shape_cast %605 : vector<1x2x32xf32> to vector<2x32xf32>
    %607 = vector.shape_cast %555 : vector<2x32xf32> to vector<1x2x32xf32>
    tpu.vector_store %arg9[%c0_159, %c0_160, %c0_161], %607 {strides = array<i32>} : memref<2x2x32xf32, #tpu.memory_space<vmem>>, vector<1x2x32xf32>,
    %c1_162 = arith.constant 1 : index
    %c0_163 = arith.constant 0 : index
    %c0_164 = arith.constant 0 : index
    %608 = vector.load %arg9[%c1_162, %c0_163, %c0_164] : memref<2x2x32xf32, #tpu.memory_space<vmem>>, vector<1x2x32xf32>
    %609 = vector.shape_cast %608 : vector<1x2x32xf32> to vector<2x32xf32>
    %610 = vector.shape_cast %592 : vector<2x32xf32> to vector<1x2x32xf32>
    tpu.vector_store %arg9[%c1_162, %c0_163, %c0_164], %610 {strides = array<i32>} : memref<2x2x32xf32, #tpu.memory_space<vmem>>, vector<1x2x32xf32>,
    %c0_i32_165 = arith.constant 0 : i32
    %611 = arith.cmpi eq, %arg0, %c0_i32_165 : i32
    %612 = arith.extui %611 : i1 to i32
    %c0_i32_166 = arith.constant 0 : i32
    %613 = arith.cmpi ne, %612, %c0_i32_166 : i32
    scf.if %613 {
      %c0_167 = arith.constant 0 : index
      %c0_168 = arith.constant 0 : index
      %c0_169 = arith.constant 0 : index
      %614 = vector.load %arg6[%c0_167, %c0_168, %c0_169] : memref<2x2x32xf32, #tpu.memory_space<vmem>>, vector<1x2x32xf32>
      %615 = vector.shape_cast %614 : vector<1x2x32xf32> to vector<2x32xf32>
      %616 = vector.shape_cast %557 : vector<2x32xf32> to vector<1x2x32xf32>
      tpu.vector_store %arg6[%c0_167, %c0_168, %c0_169], %616 {strides = array<i32>} : memref<2x2x32xf32, #tpu.memory_space<vmem>>, vector<1x2x32xf32>,
      %c1_170 = arith.constant 1 : index
      %c0_171 = arith.constant 0 : index
      %c0_172 = arith.constant 0 : index
      %617 = vector.load %arg6[%c1_170, %c0_171, %c0_172] : memref<2x2x32xf32, #tpu.memory_space<vmem>>, vector<1x2x32xf32>
      %618 = vector.shape_cast %617 : vector<1x2x32xf32> to vector<2x32xf32>
      %619 = vector.shape_cast %594 : vector<2x32xf32> to vector<1x2x32xf32>
      tpu.vector_store %arg6[%c1_170, %c0_171, %c0_172], %619 {strides = array<i32>} : memref<2x2x32xf32, #tpu.memory_space<vmem>>, vector<1x2x32xf32>,
      %c0_173 = arith.constant 0 : index
      %c0_174 = arith.constant 0 : index
      %c0_175 = arith.constant 0 : index
      %620 = vector.load %arg7[%c0_173, %c0_174, %c0_175] : memref<2x2x32xf32, #tpu.memory_space<vmem>>, vector<1x2x32xf32>
      %621 = vector.shape_cast %620 : vector<1x2x32xf32> to vector<2x32xf32>
      %622 = vector.shape_cast %555 : vector<2x32xf32> to vector<1x2x32xf32>
      tpu.vector_store %arg7[%c0_173, %c0_174, %c0_175], %622 {strides = array<i32>} : memref<2x2x32xf32, #tpu.memory_space<vmem>>, vector<1x2x32xf32>,
      %c1_176 = arith.constant 1 : index
      %c0_177 = arith.constant 0 : index
      %c0_178 = arith.constant 0 : index
      %623 = vector.load %arg7[%c1_176, %c0_177, %c0_178] : memref<2x2x32xf32, #tpu.memory_space<vmem>>, vector<1x2x32xf32>
      %624 = vector.shape_cast %623 : vector<1x2x32xf32> to vector<2x32xf32>
      %625 = vector.shape_cast %592 : vector<2x32xf32> to vector<1x2x32xf32>
      tpu.vector_store %arg7[%c1_176, %c0_177, %c0_178], %625 {strides = array<i32>} : memref<2x2x32xf32, #tpu.memory_space<vmem>>, vector<1x2x32xf32>,
    } else {
    }
    return
  }
  func.func @transform_0(%arg0: i32) -> (i32, i32, i32) {
    %c0_i32 = arith.constant 0 : i32
    %c0_i32_0 = arith.constant 0 : i32
    %c0_i32_1 = arith.constant 0 : i32
    return %arg0, %c0_i32, %c0_i32_0 : i32, i32, i32
  }
  func.func @transform_1(%arg0: i32) -> (i32, i32, i32) {
    %c0_i32 = arith.constant 0 : i32
    %0 = arith.subi %c0_i32, %arg0 : i32
    %c0_i32_0 = arith.constant 0 : i32
    %c0_i32_1 = arith.constant 0 : i32
    %c0_i32_2 = arith.constant 0 : i32
    return %0, %c0_i32_0, %c0_i32_1 : i32, i32, i32
  }
  func.func @transform_2(%arg0: i32) -> (i32, i32, i32) {
    %c0_i32 = arith.constant 0 : i32
    %c0_i32_0 = arith.constant 0 : i32
    %c0_i32_1 = arith.constant 0 : i32
    %c0_i32_2 = arith.constant 0 : i32
    return %c0_i32, %c0_i32_0, %c0_i32_1 : i32, i32, i32
  }
  func.func @transform_3(%arg0: i32) -> (i32, i32, i32) {
    %c0_i32 = arith.constant 0 : i32
    %c0_i32_0 = arith.constant 0 : i32
    %c0_i32_1 = arith.constant 0 : i32
    return %arg0, %c0_i32, %c0_i32_0 : i32, i32, i32
  }
  func.func @transform_4(%arg0: i32) -> (i32, i32, i32) {
    %c0_i32 = arith.constant 0 : i32
    %0 = arith.subi %c0_i32, %arg0 : i32
    %c0_i32_0 = arith.constant 0 : i32
    %c0_i32_1 = arith.constant 0 : i32
    %c0_i32_2 = arith.constant 0 : i32
    return %0, %c0_i32_0, %c0_i32_1 : i32, i32, i32
  }
  func.func @transform_5(%arg0: i32) -> (i32, i32, i32) {
    %c0_i32 = arith.constant 0 : i32
    %c0_i32_0 = arith.constant 0 : i32
    %c0_i32_1 = arith.constant 0 : i32
    %c0_i32_2 = arith.constant 0 : i32
    return %c0_i32, %c0_i32_0, %c0_i32_1 : i32, i32, i32
  }
  func.func @transform_6(%arg0: i32) -> (i32, i32, i32) {
    %c0_i32 = arith.constant 0 : i32
    %c0_i32_0 = arith.constant 0 : i32
    %c0_i32_1 = arith.constant 0 : i32
    %c0_i32_2 = arith.constant 0 : i32
    return %c0_i32, %c0_i32_0, %c0_i32_1 : i32, i32, i32
  }
}

module attributes {stable_mosaic.version = 11 : i64} {
  func.func @_bilstm_kernel(%arg0: i32, %arg1: memref<8x2x128xbf16, #tpu.memory_space<vmem>>, %arg2: memref<8x2x128xbf16, #tpu.memory_space<vmem>>, %arg3: memref<2x32x128xbf16, #tpu.memory_space<vmem>>, %arg4: memref<8x2x32xf32, #tpu.memory_space<vmem>>, %arg5: memref<8x2x32xf32, #tpu.memory_space<vmem>>, %arg6: memref<2x2x32xf32, #tpu.memory_space<vmem>>, %arg7: memref<2x2x32xf32, #tpu.memory_space<vmem>>, %arg8: memref<2x2x32xf32, #tpu.memory_space<vmem>>, %arg9: memref<2x2x32xf32, #tpu.memory_space<vmem>>) attributes {dimension_semantics = [#tpu.dimension_semantics<arbitrary>], iteration_bounds = array<i64: 1>, scalar_prefetch = 0 : i64, scratch_operands = 2 : i64, tpu.core_type = #tpu.core_type<tc>, window_params = [{transform_indices = @transform_0, window_bounds = array<i64: 8, 2, 128>}, {transform_indices = @transform_1, window_bounds = array<i64: 8, 2, 128>}, {pipeline_mode = #tpu.pipeline_mode<synchronous>, transform_indices = @transform_2, window_bounds = array<i64: 2, 32, 128>}, {transform_indices = @transform_3, window_bounds = array<i64: 8, 2, 32>}, {transform_indices = @transform_4, window_bounds = array<i64: 8, 2, 32>}, {pipeline_mode = #tpu.pipeline_mode<synchronous>, transform_indices = @transform_5, window_bounds = array<i64: 2, 2, 32>}, {pipeline_mode = #tpu.pipeline_mode<synchronous>, transform_indices = @transform_6, window_bounds = array<i64: 2, 2, 32>}]} {
    %c0_i32 = arith.constant 0 : i32
    %0 = arith.cmpi eq, %arg0, %c0_i32 : i32
    %1 = arith.extui %0 : i1 to i32
    %c0_i32_0 = arith.constant 0 : i32
    %2 = arith.cmpi ne, %1, %c0_i32_0 : i32
    scf.if %2 {
      %cst_167 = arith.constant 0.000000e+00 : f32
      %614 = vector.broadcast %cst_167 : f32 to vector<2x2x32xf32>
      %c0_168 = arith.constant 0 : index
      %c0_169 = arith.constant 0 : index
      %c0_170 = arith.constant 0 : index
      %615 = vector.load %arg8[%c0_168, %c0_169, %c0_170] : memref<2x2x32xf32, #tpu.memory_space<vmem>>, vector<2x2x32xf32>
      tpu.vector_store %arg8[%c0_168, %c0_169, %c0_170], %614 {strides = array<i32>} : memref<2x2x32xf32, #tpu.memory_space<vmem>>, vector<2x2x32xf32>,
      %cst_171 = arith.constant 0.000000e+00 : f32
      %616 = vector.broadcast %cst_171 : f32 to vector<2x2x32xf32>
      %c0_172 = arith.constant 0 : index
      %c0_173 = arith.constant 0 : index
      %c0_174 = arith.constant 0 : index
      %617 = vector.load %arg9[%c0_172, %c0_173, %c0_174] : memref<2x2x32xf32, #tpu.memory_space<vmem>>, vector<2x2x32xf32>
      tpu.vector_store %arg9[%c0_172, %c0_173, %c0_174], %616 {strides = array<i32>} : memref<2x2x32xf32, #tpu.memory_space<vmem>>, vector<2x2x32xf32>,
    } else {
    }
    %c0 = arith.constant 0 : index
    %c0_1 = arith.constant 0 : index
    %c0_2 = arith.constant 0 : index
    %3 = vector.load %arg3[%c0, %c0_1, %c0_2] : memref<2x32x128xbf16, #tpu.memory_space<vmem>>, vector<1x32x128xbf16>
    %4 = vector.shape_cast %3 : vector<1x32x128xbf16> to vector<32x128xbf16>
    %c1 = arith.constant 1 : index
    %c0_3 = arith.constant 0 : index
    %c0_4 = arith.constant 0 : index
    %5 = vector.load %arg3[%c1, %c0_3, %c0_4] : memref<2x32x128xbf16, #tpu.memory_space<vmem>>, vector<1x32x128xbf16>
    %6 = vector.shape_cast %5 : vector<1x32x128xbf16> to vector<32x128xbf16>
    %c0_5 = arith.constant 0 : index
    %c0_6 = arith.constant 0 : index
    %c0_7 = arith.constant 0 : index
    %7 = vector.load %arg8[%c0_5, %c0_6, %c0_7] : memref<2x2x32xf32, #tpu.memory_space<vmem>>, vector<1x2x32xf32>
    %8 = vector.shape_cast %7 : vector<1x2x32xf32> to vector<2x32xf32>
    %c0_8 = arith.constant 0 : index
    %c0_9 = arith.constant 0 : index
    %c0_10 = arith.constant 0 : index
    %9 = vector.load %arg9[%c0_8, %c0_9, %c0_10] : memref<2x2x32xf32, #tpu.memory_space<vmem>>, vector<1x2x32xf32>
    %10 = vector.shape_cast %9 : vector<1x2x32xf32> to vector<2x32xf32>
    %c1_11 = arith.constant 1 : index
    %c0_12 = arith.constant 0 : index
    %c0_13 = arith.constant 0 : index
    %11 = vector.load %arg8[%c1_11, %c0_12, %c0_13] : memref<2x2x32xf32, #tpu.memory_space<vmem>>, vector<1x2x32xf32>
    %12 = vector.shape_cast %11 : vector<1x2x32xf32> to vector<2x32xf32>
    %c1_14 = arith.constant 1 : index
    %c0_15 = arith.constant 0 : index
    %c0_16 = arith.constant 0 : index
    %13 = vector.load %arg9[%c1_14, %c0_15, %c0_16] : memref<2x2x32xf32, #tpu.memory_space<vmem>>, vector<1x2x32xf32>
    %14 = vector.shape_cast %13 : vector<1x2x32xf32> to vector<2x32xf32>
    %c0_i32_17 = arith.constant 0 : i32
    %15 = arith.index_cast %c0_i32_17 : i32 to index
    %c0_18 = arith.constant 0 : index
    %c0_19 = arith.constant 0 : index
    %16 = vector.load %arg1[%15, %c0_18, %c0_19] : memref<8x2x128xbf16, #tpu.memory_space<vmem>>, vector<1x2x128xbf16>
    %17 = vector.shape_cast %16 : vector<1x2x128xbf16> to vector<2x128xbf16>
    %18 = arith.extf %17 : vector<2x128xbf16> to vector<2x128xf32>
    %19 = arith.truncf %8 : vector<2x32xf32> to vector<2x32xbf16>
    %cst = arith.constant dense<0.000000e+00> : vector<2x128xf32>
    %20 = tpu.matmul %19, %4, %cst {dimension_numbers = #tpu.dot_dimension_numbers<[1], [0], [0], [1], [0, 0, 1, 1], [], []>} : vector<2x32xbf16>, vector<32x128xbf16>, vector<2x128xf32> -> vector<2x128xf32>
    %21 = arith.addf %18, %20 : vector<2x128xf32>
    %22 = vector.extract_strided_slice %21 {offsets = [0, 0], sizes = [2, 32], strides = [1, 1]} : vector<2x128xf32> to vector<2x32xf32>
    %23 = arith.negf %22 : vector<2x32xf32>
    %24 = math.exp %23 : vector<2x32xf32>
    %cst_20 = arith.constant 1.000000e+00 : f32
    %25 = vector.broadcast %cst_20 : f32 to vector<2x32xf32>
    %26 = arith.addf %25, %24 : vector<2x32xf32>
    %27 = arith.divf %25, %26 : vector<2x32xf32>
    %28 = vector.extract_strided_slice %21 {offsets = [0, 32], sizes = [2, 32], strides = [1, 1]} : vector<2x128xf32> to vector<2x32xf32>
    %29 = arith.negf %28 : vector<2x32xf32>
    %30 = math.exp %29 : vector<2x32xf32>
    %cst_21 = arith.constant 1.000000e+00 : f32
    %31 = vector.broadcast %cst_21 : f32 to vector<2x32xf32>
    %32 = arith.addf %31, %30 : vector<2x32xf32>
    %33 = arith.divf %31, %32 : vector<2x32xf32>
    %34 = vector.extract_strided_slice %21 {offsets = [0, 64], sizes = [2, 32], strides = [1, 1]} : vector<2x128xf32> to vector<2x32xf32>
    %35 = math.tanh %34 : vector<2x32xf32>
    %36 = vector.extract_strided_slice %21 {offsets = [0, 96], sizes = [2, 32], strides = [1, 1]} : vector<2x128xf32> to vector<2x32xf32>
    %37 = arith.negf %36 : vector<2x32xf32>
    %38 = math.exp %37 : vector<2x32xf32>
    %cst_22 = arith.constant 1.000000e+00 : f32
    %39 = vector.broadcast %cst_22 : f32 to vector<2x32xf32>
    %40 = arith.addf %39, %38 : vector<2x32xf32>
    %41 = arith.divf %39, %40 : vector<2x32xf32>
    %42 = arith.mulf %33, %10 : vector<2x32xf32>
    %43 = arith.mulf %27, %35 : vector<2x32xf32>
    %44 = arith.addf %42, %43 : vector<2x32xf32>
    %45 = math.tanh %44 : vector<2x32xf32>
    %46 = arith.mulf %41, %45 : vector<2x32xf32>
    %47 = arith.index_cast %c0_i32_17 : i32 to index
    %c0_23 = arith.constant 0 : index
    %c0_24 = arith.constant 0 : index
    %48 = vector.load %arg4[%47, %c0_23, %c0_24] : memref<8x2x32xf32, #tpu.memory_space<vmem>>, vector<1x2x32xf32>
    %49 = vector.shape_cast %48 : vector<1x2x32xf32> to vector<2x32xf32>
    %50 = vector.shape_cast %46 : vector<2x32xf32> to vector<1x2x32xf32>
    tpu.vector_store %arg4[%47, %c0_23, %c0_24], %50 {strides = array<i32>} : memref<8x2x32xf32, #tpu.memory_space<vmem>>, vector<1x2x32xf32>,
    %c7_i32 = arith.constant 7 : i32
    %51 = arith.subi %c7_i32, %c0_i32_17 : i32
    %52 = arith.index_cast %51 : i32 to index
    %c0_25 = arith.constant 0 : index
    %c0_26 = arith.constant 0 : index
    %53 = vector.load %arg2[%52, %c0_25, %c0_26] : memref<8x2x128xbf16, #tpu.memory_space<vmem>>, vector<1x2x128xbf16>
    %54 = vector.shape_cast %53 : vector<1x2x128xbf16> to vector<2x128xbf16>
    %55 = arith.extf %54 : vector<2x128xbf16> to vector<2x128xf32>
    %56 = arith.truncf %12 : vector<2x32xf32> to vector<2x32xbf16>
    %cst_27 = arith.constant dense<0.000000e+00> : vector<2x128xf32>
    %57 = tpu.matmul %56, %6, %cst_27 {dimension_numbers = #tpu.dot_dimension_numbers<[1], [0], [0], [1], [0, 0, 1, 1], [], []>} : vector<2x32xbf16>, vector<32x128xbf16>, vector<2x128xf32> -> vector<2x128xf32>
    %58 = arith.addf %55, %57 : vector<2x128xf32>
    %59 = vector.extract_strided_slice %58 {offsets = [0, 0], sizes = [2, 32], strides = [1, 1]} : vector<2x128xf32> to vector<2x32xf32>
    %60 = arith.negf %59 : vector<2x32xf32>
    %61 = math.exp %60 : vector<2x32xf32>
    %cst_28 = arith.constant 1.000000e+00 : f32
    %62 = vector.broadcast %cst_28 : f32 to vector<2x32xf32>
    %63 = arith.addf %62, %61 : vector<2x32xf32>
    %64 = arith.divf %62, %63 : vector<2x32xf32>
    %65 = vector.extract_strided_slice %58 {offsets = [0, 32], sizes = [2, 32], strides = [1, 1]} : vector<2x128xf32> to vector<2x32xf32>
    %66 = arith.negf %65 : vector<2x32xf32>
    %67 = math.exp %66 : vector<2x32xf32>
    %cst_29 = arith.constant 1.000000e+00 : f32
    %68 = vector.broadcast %cst_29 : f32 to vector<2x32xf32>
    %69 = arith.addf %68, %67 : vector<2x32xf32>
    %70 = arith.divf %68, %69 : vector<2x32xf32>
    %71 = vector.extract_strided_slice %58 {offsets = [0, 64], sizes = [2, 32], strides = [1, 1]} : vector<2x128xf32> to vector<2x32xf32>
    %72 = math.tanh %71 : vector<2x32xf32>
    %73 = vector.extract_strided_slice %58 {offsets = [0, 96], sizes = [2, 32], strides = [1, 1]} : vector<2x128xf32> to vector<2x32xf32>
    %74 = arith.negf %73 : vector<2x32xf32>
    %75 = math.exp %74 : vector<2x32xf32>
    %cst_30 = arith.constant 1.000000e+00 : f32
    %76 = vector.broadcast %cst_30 : f32 to vector<2x32xf32>
    %77 = arith.addf %76, %75 : vector<2x32xf32>
    %78 = arith.divf %76, %77 : vector<2x32xf32>
    %79 = arith.mulf %70, %14 : vector<2x32xf32>
    %80 = arith.mulf %64, %72 : vector<2x32xf32>
    %81 = arith.addf %79, %80 : vector<2x32xf32>
    %82 = math.tanh %81 : vector<2x32xf32>
    %83 = arith.mulf %78, %82 : vector<2x32xf32>
    %84 = arith.index_cast %51 : i32 to index
    %c0_31 = arith.constant 0 : index
    %c0_32 = arith.constant 0 : index
    %85 = vector.load %arg5[%84, %c0_31, %c0_32] : memref<8x2x32xf32, #tpu.memory_space<vmem>>, vector<1x2x32xf32>
    %86 = vector.shape_cast %85 : vector<1x2x32xf32> to vector<2x32xf32>
    %87 = vector.shape_cast %83 : vector<2x32xf32> to vector<1x2x32xf32>
    tpu.vector_store %arg5[%84, %c0_31, %c0_32], %87 {strides = array<i32>} : memref<8x2x32xf32, #tpu.memory_space<vmem>>, vector<1x2x32xf32>,
    %c1_i32 = arith.constant 1 : i32
    %88 = arith.index_cast %c1_i32 : i32 to index
    %c0_33 = arith.constant 0 : index
    %c0_34 = arith.constant 0 : index
    %89 = vector.load %arg1[%88, %c0_33, %c0_34] : memref<8x2x128xbf16, #tpu.memory_space<vmem>>, vector<1x2x128xbf16>
    %90 = vector.shape_cast %89 : vector<1x2x128xbf16> to vector<2x128xbf16>
    %91 = arith.extf %90 : vector<2x128xbf16> to vector<2x128xf32>
    %92 = arith.truncf %46 : vector<2x32xf32> to vector<2x32xbf16>
    %cst_35 = arith.constant dense<0.000000e+00> : vector<2x128xf32>
    %93 = tpu.matmul %92, %4, %cst_35 {dimension_numbers = #tpu.dot_dimension_numbers<[1], [0], [0], [1], [0, 0, 1, 1], [], []>} : vector<2x32xbf16>, vector<32x128xbf16>, vector<2x128xf32> -> vector<2x128xf32>
    %94 = arith.addf %91, %93 : vector<2x128xf32>
    %95 = vector.extract_strided_slice %94 {offsets = [0, 0], sizes = [2, 32], strides = [1, 1]} : vector<2x128xf32> to vector<2x32xf32>
    %96 = arith.negf %95 : vector<2x32xf32>
    %97 = math.exp %96 : vector<2x32xf32>
    %cst_36 = arith.constant 1.000000e+00 : f32
    %98 = vector.broadcast %cst_36 : f32 to vector<2x32xf32>
    %99 = arith.addf %98, %97 : vector<2x32xf32>
    %100 = arith.divf %98, %99 : vector<2x32xf32>
    %101 = vector.extract_strided_slice %94 {offsets = [0, 32], sizes = [2, 32], strides = [1, 1]} : vector<2x128xf32> to vector<2x32xf32>
    %102 = arith.negf %101 : vector<2x32xf32>
    %103 = math.exp %102 : vector<2x32xf32>
    %cst_37 = arith.constant 1.000000e+00 : f32
    %104 = vector.broadcast %cst_37 : f32 to vector<2x32xf32>
    %105 = arith.addf %104, %103 : vector<2x32xf32>
    %106 = arith.divf %104, %105 : vector<2x32xf32>
    %107 = vector.extract_strided_slice %94 {offsets = [0, 64], sizes = [2, 32], strides = [1, 1]} : vector<2x128xf32> to vector<2x32xf32>
    %108 = math.tanh %107 : vector<2x32xf32>
    %109 = vector.extract_strided_slice %94 {offsets = [0, 96], sizes = [2, 32], strides = [1, 1]} : vector<2x128xf32> to vector<2x32xf32>
    %110 = arith.negf %109 : vector<2x32xf32>
    %111 = math.exp %110 : vector<2x32xf32>
    %cst_38 = arith.constant 1.000000e+00 : f32
    %112 = vector.broadcast %cst_38 : f32 to vector<2x32xf32>
    %113 = arith.addf %112, %111 : vector<2x32xf32>
    %114 = arith.divf %112, %113 : vector<2x32xf32>
    %115 = arith.mulf %106, %44 : vector<2x32xf32>
    %116 = arith.mulf %100, %108 : vector<2x32xf32>
    %117 = arith.addf %115, %116 : vector<2x32xf32>
    %118 = math.tanh %117 : vector<2x32xf32>
    %119 = arith.mulf %114, %118 : vector<2x32xf32>
    %120 = arith.index_cast %c1_i32 : i32 to index
    %c0_39 = arith.constant 0 : index
    %c0_40 = arith.constant 0 : index
    %121 = vector.load %arg4[%120, %c0_39, %c0_40] : memref<8x2x32xf32, #tpu.memory_space<vmem>>, vector<1x2x32xf32>
    %122 = vector.shape_cast %121 : vector<1x2x32xf32> to vector<2x32xf32>
    %123 = vector.shape_cast %119 : vector<2x32xf32> to vector<1x2x32xf32>
    tpu.vector_store %arg4[%120, %c0_39, %c0_40], %123 {strides = array<i32>} : memref<8x2x32xf32, #tpu.memory_space<vmem>>, vector<1x2x32xf32>,
    %c7_i32_41 = arith.constant 7 : i32
    %124 = arith.subi %c7_i32_41, %c1_i32 : i32
    %125 = arith.index_cast %124 : i32 to index
    %c0_42 = arith.constant 0 : index
    %c0_43 = arith.constant 0 : index
    %126 = vector.load %arg2[%125, %c0_42, %c0_43] : memref<8x2x128xbf16, #tpu.memory_space<vmem>>, vector<1x2x128xbf16>
    %127 = vector.shape_cast %126 : vector<1x2x128xbf16> to vector<2x128xbf16>
    %128 = arith.extf %127 : vector<2x128xbf16> to vector<2x128xf32>
    %129 = arith.truncf %83 : vector<2x32xf32> to vector<2x32xbf16>
    %cst_44 = arith.constant dense<0.000000e+00> : vector<2x128xf32>
    %130 = tpu.matmul %129, %6, %cst_44 {dimension_numbers = #tpu.dot_dimension_numbers<[1], [0], [0], [1], [0, 0, 1, 1], [], []>} : vector<2x32xbf16>, vector<32x128xbf16>, vector<2x128xf32> -> vector<2x128xf32>
    %131 = arith.addf %128, %130 : vector<2x128xf32>
    %132 = vector.extract_strided_slice %131 {offsets = [0, 0], sizes = [2, 32], strides = [1, 1]} : vector<2x128xf32> to vector<2x32xf32>
    %133 = arith.negf %132 : vector<2x32xf32>
    %134 = math.exp %133 : vector<2x32xf32>
    %cst_45 = arith.constant 1.000000e+00 : f32
    %135 = vector.broadcast %cst_45 : f32 to vector<2x32xf32>
    %136 = arith.addf %135, %134 : vector<2x32xf32>
    %137 = arith.divf %135, %136 : vector<2x32xf32>
    %138 = vector.extract_strided_slice %131 {offsets = [0, 32], sizes = [2, 32], strides = [1, 1]} : vector<2x128xf32> to vector<2x32xf32>
    %139 = arith.negf %138 : vector<2x32xf32>
    %140 = math.exp %139 : vector<2x32xf32>
    %cst_46 = arith.constant 1.000000e+00 : f32
    %141 = vector.broadcast %cst_46 : f32 to vector<2x32xf32>
    %142 = arith.addf %141, %140 : vector<2x32xf32>
    %143 = arith.divf %141, %142 : vector<2x32xf32>
    %144 = vector.extract_strided_slice %131 {offsets = [0, 64], sizes = [2, 32], strides = [1, 1]} : vector<2x128xf32> to vector<2x32xf32>
    %145 = math.tanh %144 : vector<2x32xf32>
    %146 = vector.extract_strided_slice %131 {offsets = [0, 96], sizes = [2, 32], strides = [1, 1]} : vector<2x128xf32> to vector<2x32xf32>
    %147 = arith.negf %146 : vector<2x32xf32>
    %148 = math.exp %147 : vector<2x32xf32>
    %cst_47 = arith.constant 1.000000e+00 : f32
    %149 = vector.broadcast %cst_47 : f32 to vector<2x32xf32>
    %150 = arith.addf %149, %148 : vector<2x32xf32>
    %151 = arith.divf %149, %150 : vector<2x32xf32>
    %152 = arith.mulf %143, %81 : vector<2x32xf32>
    %153 = arith.mulf %137, %145 : vector<2x32xf32>
    %154 = arith.addf %152, %153 : vector<2x32xf32>
    %155 = math.tanh %154 : vector<2x32xf32>
    %156 = arith.mulf %151, %155 : vector<2x32xf32>
    %157 = arith.index_cast %124 : i32 to index
    %c0_48 = arith.constant 0 : index
    %c0_49 = arith.constant 0 : index
    %158 = vector.load %arg5[%157, %c0_48, %c0_49] : memref<8x2x32xf32, #tpu.memory_space<vmem>>, vector<1x2x32xf32>
    %159 = vector.shape_cast %158 : vector<1x2x32xf32> to vector<2x32xf32>
    %160 = vector.shape_cast %156 : vector<2x32xf32> to vector<1x2x32xf32>
    tpu.vector_store %arg5[%157, %c0_48, %c0_49], %160 {strides = array<i32>} : memref<8x2x32xf32, #tpu.memory_space<vmem>>, vector<1x2x32xf32>,
    %c2_i32 = arith.constant 2 : i32
    %161 = arith.index_cast %c2_i32 : i32 to index
    %c0_50 = arith.constant 0 : index
    %c0_51 = arith.constant 0 : index
    %162 = vector.load %arg1[%161, %c0_50, %c0_51] : memref<8x2x128xbf16, #tpu.memory_space<vmem>>, vector<1x2x128xbf16>
    %163 = vector.shape_cast %162 : vector<1x2x128xbf16> to vector<2x128xbf16>
    %164 = arith.extf %163 : vector<2x128xbf16> to vector<2x128xf32>
    %165 = arith.truncf %119 : vector<2x32xf32> to vector<2x32xbf16>
    %cst_52 = arith.constant dense<0.000000e+00> : vector<2x128xf32>
    %166 = tpu.matmul %165, %4, %cst_52 {dimension_numbers = #tpu.dot_dimension_numbers<[1], [0], [0], [1], [0, 0, 1, 1], [], []>} : vector<2x32xbf16>, vector<32x128xbf16>, vector<2x128xf32> -> vector<2x128xf32>
    %167 = arith.addf %164, %166 : vector<2x128xf32>
    %168 = vector.extract_strided_slice %167 {offsets = [0, 0], sizes = [2, 32], strides = [1, 1]} : vector<2x128xf32> to vector<2x32xf32>
    %169 = arith.negf %168 : vector<2x32xf32>
    %170 = math.exp %169 : vector<2x32xf32>
    %cst_53 = arith.constant 1.000000e+00 : f32
    %171 = vector.broadcast %cst_53 : f32 to vector<2x32xf32>
    %172 = arith.addf %171, %170 : vector<2x32xf32>
    %173 = arith.divf %171, %172 : vector<2x32xf32>
    %174 = vector.extract_strided_slice %167 {offsets = [0, 32], sizes = [2, 32], strides = [1, 1]} : vector<2x128xf32> to vector<2x32xf32>
    %175 = arith.negf %174 : vector<2x32xf32>
    %176 = math.exp %175 : vector<2x32xf32>
    %cst_54 = arith.constant 1.000000e+00 : f32
    %177 = vector.broadcast %cst_54 : f32 to vector<2x32xf32>
    %178 = arith.addf %177, %176 : vector<2x32xf32>
    %179 = arith.divf %177, %178 : vector<2x32xf32>
    %180 = vector.extract_strided_slice %167 {offsets = [0, 64], sizes = [2, 32], strides = [1, 1]} : vector<2x128xf32> to vector<2x32xf32>
    %181 = math.tanh %180 : vector<2x32xf32>
    %182 = vector.extract_strided_slice %167 {offsets = [0, 96], sizes = [2, 32], strides = [1, 1]} : vector<2x128xf32> to vector<2x32xf32>
    %183 = arith.negf %182 : vector<2x32xf32>
    %184 = math.exp %183 : vector<2x32xf32>
    %cst_55 = arith.constant 1.000000e+00 : f32
    %185 = vector.broadcast %cst_55 : f32 to vector<2x32xf32>
    %186 = arith.addf %185, %184 : vector<2x32xf32>
    %187 = arith.divf %185, %186 : vector<2x32xf32>
    %188 = arith.mulf %179, %117 : vector<2x32xf32>
    %189 = arith.mulf %173, %181 : vector<2x32xf32>
    %190 = arith.addf %188, %189 : vector<2x32xf32>
    %191 = math.tanh %190 : vector<2x32xf32>
    %192 = arith.mulf %187, %191 : vector<2x32xf32>
    %193 = arith.index_cast %c2_i32 : i32 to index
    %c0_56 = arith.constant 0 : index
    %c0_57 = arith.constant 0 : index
    %194 = vector.load %arg4[%193, %c0_56, %c0_57] : memref<8x2x32xf32, #tpu.memory_space<vmem>>, vector<1x2x32xf32>
    %195 = vector.shape_cast %194 : vector<1x2x32xf32> to vector<2x32xf32>
    %196 = vector.shape_cast %192 : vector<2x32xf32> to vector<1x2x32xf32>
    tpu.vector_store %arg4[%193, %c0_56, %c0_57], %196 {strides = array<i32>} : memref<8x2x32xf32, #tpu.memory_space<vmem>>, vector<1x2x32xf32>,
    %c7_i32_58 = arith.constant 7 : i32
    %197 = arith.subi %c7_i32_58, %c2_i32 : i32
    %198 = arith.index_cast %197 : i32 to index
    %c0_59 = arith.constant 0 : index
    %c0_60 = arith.constant 0 : index
    %199 = vector.load %arg2[%198, %c0_59, %c0_60] : memref<8x2x128xbf16, #tpu.memory_space<vmem>>, vector<1x2x128xbf16>
    %200 = vector.shape_cast %199 : vector<1x2x128xbf16> to vector<2x128xbf16>
    %201 = arith.extf %200 : vector<2x128xbf16> to vector<2x128xf32>
    %202 = arith.truncf %156 : vector<2x32xf32> to vector<2x32xbf16>
    %cst_61 = arith.constant dense<0.000000e+00> : vector<2x128xf32>
    %203 = tpu.matmul %202, %6, %cst_61 {dimension_numbers = #tpu.dot_dimension_numbers<[1], [0], [0], [1], [0, 0, 1, 1], [], []>} : vector<2x32xbf16>, vector<32x128xbf16>, vector<2x128xf32> -> vector<2x128xf32>
    %204 = arith.addf %201, %203 : vector<2x128xf32>
    %205 = vector.extract_strided_slice %204 {offsets = [0, 0], sizes = [2, 32], strides = [1, 1]} : vector<2x128xf32> to vector<2x32xf32>
    %206 = arith.negf %205 : vector<2x32xf32>
    %207 = math.exp %206 : vector<2x32xf32>
    %cst_62 = arith.constant 1.000000e+00 : f32
    %208 = vector.broadcast %cst_62 : f32 to vector<2x32xf32>
    %209 = arith.addf %208, %207 : vector<2x32xf32>
    %210 = arith.divf %208, %209 : vector<2x32xf32>
    %211 = vector.extract_strided_slice %204 {offsets = [0, 32], sizes = [2, 32], strides = [1, 1]} : vector<2x128xf32> to vector<2x32xf32>
    %212 = arith.negf %211 : vector<2x32xf32>
    %213 = math.exp %212 : vector<2x32xf32>
    %cst_63 = arith.constant 1.000000e+00 : f32
    %214 = vector.broadcast %cst_63 : f32 to vector<2x32xf32>
    %215 = arith.addf %214, %213 : vector<2x32xf32>
    %216 = arith.divf %214, %215 : vector<2x32xf32>
    %217 = vector.extract_strided_slice %204 {offsets = [0, 64], sizes = [2, 32], strides = [1, 1]} : vector<2x128xf32> to vector<2x32xf32>
    %218 = math.tanh %217 : vector<2x32xf32>
    %219 = vector.extract_strided_slice %204 {offsets = [0, 96], sizes = [2, 32], strides = [1, 1]} : vector<2x128xf32> to vector<2x32xf32>
    %220 = arith.negf %219 : vector<2x32xf32>
    %221 = math.exp %220 : vector<2x32xf32>
    %cst_64 = arith.constant 1.000000e+00 : f32
    %222 = vector.broadcast %cst_64 : f32 to vector<2x32xf32>
    %223 = arith.addf %222, %221 : vector<2x32xf32>
    %224 = arith.divf %222, %223 : vector<2x32xf32>
    %225 = arith.mulf %216, %154 : vector<2x32xf32>
    %226 = arith.mulf %210, %218 : vector<2x32xf32>
    %227 = arith.addf %225, %226 : vector<2x32xf32>
    %228 = math.tanh %227 : vector<2x32xf32>
    %229 = arith.mulf %224, %228 : vector<2x32xf32>
    %230 = arith.index_cast %197 : i32 to index
    %c0_65 = arith.constant 0 : index
    %c0_66 = arith.constant 0 : index
    %231 = vector.load %arg5[%230, %c0_65, %c0_66] : memref<8x2x32xf32, #tpu.memory_space<vmem>>, vector<1x2x32xf32>
    %232 = vector.shape_cast %231 : vector<1x2x32xf32> to vector<2x32xf32>
    %233 = vector.shape_cast %229 : vector<2x32xf32> to vector<1x2x32xf32>
    tpu.vector_store %arg5[%230, %c0_65, %c0_66], %233 {strides = array<i32>} : memref<8x2x32xf32, #tpu.memory_space<vmem>>, vector<1x2x32xf32>,
    %c3_i32 = arith.constant 3 : i32
    %234 = arith.index_cast %c3_i32 : i32 to index
    %c0_67 = arith.constant 0 : index
    %c0_68 = arith.constant 0 : index
    %235 = vector.load %arg1[%234, %c0_67, %c0_68] : memref<8x2x128xbf16, #tpu.memory_space<vmem>>, vector<1x2x128xbf16>
    %236 = vector.shape_cast %235 : vector<1x2x128xbf16> to vector<2x128xbf16>
    %237 = arith.extf %236 : vector<2x128xbf16> to vector<2x128xf32>
    %238 = arith.truncf %192 : vector<2x32xf32> to vector<2x32xbf16>
    %cst_69 = arith.constant dense<0.000000e+00> : vector<2x128xf32>
    %239 = tpu.matmul %238, %4, %cst_69 {dimension_numbers = #tpu.dot_dimension_numbers<[1], [0], [0], [1], [0, 0, 1, 1], [], []>} : vector<2x32xbf16>, vector<32x128xbf16>, vector<2x128xf32> -> vector<2x128xf32>
    %240 = arith.addf %237, %239 : vector<2x128xf32>
    %241 = vector.extract_strided_slice %240 {offsets = [0, 0], sizes = [2, 32], strides = [1, 1]} : vector<2x128xf32> to vector<2x32xf32>
    %242 = arith.negf %241 : vector<2x32xf32>
    %243 = math.exp %242 : vector<2x32xf32>
    %cst_70 = arith.constant 1.000000e+00 : f32
    %244 = vector.broadcast %cst_70 : f32 to vector<2x32xf32>
    %245 = arith.addf %244, %243 : vector<2x32xf32>
    %246 = arith.divf %244, %245 : vector<2x32xf32>
    %247 = vector.extract_strided_slice %240 {offsets = [0, 32], sizes = [2, 32], strides = [1, 1]} : vector<2x128xf32> to vector<2x32xf32>
    %248 = arith.negf %247 : vector<2x32xf32>
    %249 = math.exp %248 : vector<2x32xf32>
    %cst_71 = arith.constant 1.000000e+00 : f32
    %250 = vector.broadcast %cst_71 : f32 to vector<2x32xf32>
    %251 = arith.addf %250, %249 : vector<2x32xf32>
    %252 = arith.divf %250, %251 : vector<2x32xf32>
    %253 = vector.extract_strided_slice %240 {offsets = [0, 64], sizes = [2, 32], strides = [1, 1]} : vector<2x128xf32> to vector<2x32xf32>
    %254 = math.tanh %253 : vector<2x32xf32>
    %255 = vector.extract_strided_slice %240 {offsets = [0, 96], sizes = [2, 32], strides = [1, 1]} : vector<2x128xf32> to vector<2x32xf32>
    %256 = arith.negf %255 : vector<2x32xf32>
    %257 = math.exp %256 : vector<2x32xf32>
    %cst_72 = arith.constant 1.000000e+00 : f32
    %258 = vector.broadcast %cst_72 : f32 to vector<2x32xf32>
    %259 = arith.addf %258, %257 : vector<2x32xf32>
    %260 = arith.divf %258, %259 : vector<2x32xf32>
    %261 = arith.mulf %252, %190 : vector<2x32xf32>
    %262 = arith.mulf %246, %254 : vector<2x32xf32>
    %263 = arith.addf %261, %262 : vector<2x32xf32>
    %264 = math.tanh %263 : vector<2x32xf32>
    %265 = arith.mulf %260, %264 : vector<2x32xf32>
    %266 = arith.index_cast %c3_i32 : i32 to index
    %c0_73 = arith.constant 0 : index
    %c0_74 = arith.constant 0 : index
    %267 = vector.load %arg4[%266, %c0_73, %c0_74] : memref<8x2x32xf32, #tpu.memory_space<vmem>>, vector<1x2x32xf32>
    %268 = vector.shape_cast %267 : vector<1x2x32xf32> to vector<2x32xf32>
    %269 = vector.shape_cast %265 : vector<2x32xf32> to vector<1x2x32xf32>
    tpu.vector_store %arg4[%266, %c0_73, %c0_74], %269 {strides = array<i32>} : memref<8x2x32xf32, #tpu.memory_space<vmem>>, vector<1x2x32xf32>,
    %c7_i32_75 = arith.constant 7 : i32
    %270 = arith.subi %c7_i32_75, %c3_i32 : i32
    %271 = arith.index_cast %270 : i32 to index
    %c0_76 = arith.constant 0 : index
    %c0_77 = arith.constant 0 : index
    %272 = vector.load %arg2[%271, %c0_76, %c0_77] : memref<8x2x128xbf16, #tpu.memory_space<vmem>>, vector<1x2x128xbf16>
    %273 = vector.shape_cast %272 : vector<1x2x128xbf16> to vector<2x128xbf16>
    %274 = arith.extf %273 : vector<2x128xbf16> to vector<2x128xf32>
    %275 = arith.truncf %229 : vector<2x32xf32> to vector<2x32xbf16>
    %cst_78 = arith.constant dense<0.000000e+00> : vector<2x128xf32>
    %276 = tpu.matmul %275, %6, %cst_78 {dimension_numbers = #tpu.dot_dimension_numbers<[1], [0], [0], [1], [0, 0, 1, 1], [], []>} : vector<2x32xbf16>, vector<32x128xbf16>, vector<2x128xf32> -> vector<2x128xf32>
    %277 = arith.addf %274, %276 : vector<2x128xf32>
    %278 = vector.extract_strided_slice %277 {offsets = [0, 0], sizes = [2, 32], strides = [1, 1]} : vector<2x128xf32> to vector<2x32xf32>
    %279 = arith.negf %278 : vector<2x32xf32>
    %280 = math.exp %279 : vector<2x32xf32>
    %cst_79 = arith.constant 1.000000e+00 : f32
    %281 = vector.broadcast %cst_79 : f32 to vector<2x32xf32>
    %282 = arith.addf %281, %280 : vector<2x32xf32>
    %283 = arith.divf %281, %282 : vector<2x32xf32>
    %284 = vector.extract_strided_slice %277 {offsets = [0, 32], sizes = [2, 32], strides = [1, 1]} : vector<2x128xf32> to vector<2x32xf32>
    %285 = arith.negf %284 : vector<2x32xf32>
    %286 = math.exp %285 : vector<2x32xf32>
    %cst_80 = arith.constant 1.000000e+00 : f32
    %287 = vector.broadcast %cst_80 : f32 to vector<2x32xf32>
    %288 = arith.addf %287, %286 : vector<2x32xf32>
    %289 = arith.divf %287, %288 : vector<2x32xf32>
    %290 = vector.extract_strided_slice %277 {offsets = [0, 64], sizes = [2, 32], strides = [1, 1]} : vector<2x128xf32> to vector<2x32xf32>
    %291 = math.tanh %290 : vector<2x32xf32>
    %292 = vector.extract_strided_slice %277 {offsets = [0, 96], sizes = [2, 32], strides = [1, 1]} : vector<2x128xf32> to vector<2x32xf32>
    %293 = arith.negf %292 : vector<2x32xf32>
    %294 = math.exp %293 : vector<2x32xf32>
    %cst_81 = arith.constant 1.000000e+00 : f32
    %295 = vector.broadcast %cst_81 : f32 to vector<2x32xf32>
    %296 = arith.addf %295, %294 : vector<2x32xf32>
    %297 = arith.divf %295, %296 : vector<2x32xf32>
    %298 = arith.mulf %289, %227 : vector<2x32xf32>
    %299 = arith.mulf %283, %291 : vector<2x32xf32>
    %300 = arith.addf %298, %299 : vector<2x32xf32>
    %301 = math.tanh %300 : vector<2x32xf32>
    %302 = arith.mulf %297, %301 : vector<2x32xf32>
    %303 = arith.index_cast %270 : i32 to index
    %c0_82 = arith.constant 0 : index
    %c0_83 = arith.constant 0 : index
    %304 = vector.load %arg5[%303, %c0_82, %c0_83] : memref<8x2x32xf32, #tpu.memory_space<vmem>>, vector<1x2x32xf32>
    %305 = vector.shape_cast %304 : vector<1x2x32xf32> to vector<2x32xf32>
    %306 = vector.shape_cast %302 : vector<2x32xf32> to vector<1x2x32xf32>
    tpu.vector_store %arg5[%303, %c0_82, %c0_83], %306 {strides = array<i32>} : memref<8x2x32xf32, #tpu.memory_space<vmem>>, vector<1x2x32xf32>,
    %c4_i32 = arith.constant 4 : i32
    %307 = arith.index_cast %c4_i32 : i32 to index
    %c0_84 = arith.constant 0 : index
    %c0_85 = arith.constant 0 : index
    %308 = vector.load %arg1[%307, %c0_84, %c0_85] : memref<8x2x128xbf16, #tpu.memory_space<vmem>>, vector<1x2x128xbf16>
    %309 = vector.shape_cast %308 : vector<1x2x128xbf16> to vector<2x128xbf16>
    %310 = arith.extf %309 : vector<2x128xbf16> to vector<2x128xf32>
    %311 = arith.truncf %265 : vector<2x32xf32> to vector<2x32xbf16>
    %cst_86 = arith.constant dense<0.000000e+00> : vector<2x128xf32>
    %312 = tpu.matmul %311, %4, %cst_86 {dimension_numbers = #tpu.dot_dimension_numbers<[1], [0], [0], [1], [0, 0, 1, 1], [], []>} : vector<2x32xbf16>, vector<32x128xbf16>, vector<2x128xf32> -> vector<2x128xf32>
    %313 = arith.addf %310, %312 : vector<2x128xf32>
    %314 = vector.extract_strided_slice %313 {offsets = [0, 0], sizes = [2, 32], strides = [1, 1]} : vector<2x128xf32> to vector<2x32xf32>
    %315 = arith.negf %314 : vector<2x32xf32>
    %316 = math.exp %315 : vector<2x32xf32>
    %cst_87 = arith.constant 1.000000e+00 : f32
    %317 = vector.broadcast %cst_87 : f32 to vector<2x32xf32>
    %318 = arith.addf %317, %316 : vector<2x32xf32>
    %319 = arith.divf %317, %318 : vector<2x32xf32>
    %320 = vector.extract_strided_slice %313 {offsets = [0, 32], sizes = [2, 32], strides = [1, 1]} : vector<2x128xf32> to vector<2x32xf32>
    %321 = arith.negf %320 : vector<2x32xf32>
    %322 = math.exp %321 : vector<2x32xf32>
    %cst_88 = arith.constant 1.000000e+00 : f32
    %323 = vector.broadcast %cst_88 : f32 to vector<2x32xf32>
    %324 = arith.addf %323, %322 : vector<2x32xf32>
    %325 = arith.divf %323, %324 : vector<2x32xf32>
    %326 = vector.extract_strided_slice %313 {offsets = [0, 64], sizes = [2, 32], strides = [1, 1]} : vector<2x128xf32> to vector<2x32xf32>
    %327 = math.tanh %326 : vector<2x32xf32>
    %328 = vector.extract_strided_slice %313 {offsets = [0, 96], sizes = [2, 32], strides = [1, 1]} : vector<2x128xf32> to vector<2x32xf32>
    %329 = arith.negf %328 : vector<2x32xf32>
    %330 = math.exp %329 : vector<2x32xf32>
    %cst_89 = arith.constant 1.000000e+00 : f32
    %331 = vector.broadcast %cst_89 : f32 to vector<2x32xf32>
    %332 = arith.addf %331, %330 : vector<2x32xf32>
    %333 = arith.divf %331, %332 : vector<2x32xf32>
    %334 = arith.mulf %325, %263 : vector<2x32xf32>
    %335 = arith.mulf %319, %327 : vector<2x32xf32>
    %336 = arith.addf %334, %335 : vector<2x32xf32>
    %337 = math.tanh %336 : vector<2x32xf32>
    %338 = arith.mulf %333, %337 : vector<2x32xf32>
    %339 = arith.index_cast %c4_i32 : i32 to index
    %c0_90 = arith.constant 0 : index
    %c0_91 = arith.constant 0 : index
    %340 = vector.load %arg4[%339, %c0_90, %c0_91] : memref<8x2x32xf32, #tpu.memory_space<vmem>>, vector<1x2x32xf32>
    %341 = vector.shape_cast %340 : vector<1x2x32xf32> to vector<2x32xf32>
    %342 = vector.shape_cast %338 : vector<2x32xf32> to vector<1x2x32xf32>
    tpu.vector_store %arg4[%339, %c0_90, %c0_91], %342 {strides = array<i32>} : memref<8x2x32xf32, #tpu.memory_space<vmem>>, vector<1x2x32xf32>,
    %c7_i32_92 = arith.constant 7 : i32
    %343 = arith.subi %c7_i32_92, %c4_i32 : i32
    %344 = arith.index_cast %343 : i32 to index
    %c0_93 = arith.constant 0 : index
    %c0_94 = arith.constant 0 : index
    %345 = vector.load %arg2[%344, %c0_93, %c0_94] : memref<8x2x128xbf16, #tpu.memory_space<vmem>>, vector<1x2x128xbf16>
    %346 = vector.shape_cast %345 : vector<1x2x128xbf16> to vector<2x128xbf16>
    %347 = arith.extf %346 : vector<2x128xbf16> to vector<2x128xf32>
    %348 = arith.truncf %302 : vector<2x32xf32> to vector<2x32xbf16>
    %cst_95 = arith.constant dense<0.000000e+00> : vector<2x128xf32>
    %349 = tpu.matmul %348, %6, %cst_95 {dimension_numbers = #tpu.dot_dimension_numbers<[1], [0], [0], [1], [0, 0, 1, 1], [], []>} : vector<2x32xbf16>, vector<32x128xbf16>, vector<2x128xf32> -> vector<2x128xf32>
    %350 = arith.addf %347, %349 : vector<2x128xf32>
    %351 = vector.extract_strided_slice %350 {offsets = [0, 0], sizes = [2, 32], strides = [1, 1]} : vector<2x128xf32> to vector<2x32xf32>
    %352 = arith.negf %351 : vector<2x32xf32>
    %353 = math.exp %352 : vector<2x32xf32>
    %cst_96 = arith.constant 1.000000e+00 : f32
    %354 = vector.broadcast %cst_96 : f32 to vector<2x32xf32>
    %355 = arith.addf %354, %353 : vector<2x32xf32>
    %356 = arith.divf %354, %355 : vector<2x32xf32>
    %357 = vector.extract_strided_slice %350 {offsets = [0, 32], sizes = [2, 32], strides = [1, 1]} : vector<2x128xf32> to vector<2x32xf32>
    %358 = arith.negf %357 : vector<2x32xf32>
    %359 = math.exp %358 : vector<2x32xf32>
    %cst_97 = arith.constant 1.000000e+00 : f32
    %360 = vector.broadcast %cst_97 : f32 to vector<2x32xf32>
    %361 = arith.addf %360, %359 : vector<2x32xf32>
    %362 = arith.divf %360, %361 : vector<2x32xf32>
    %363 = vector.extract_strided_slice %350 {offsets = [0, 64], sizes = [2, 32], strides = [1, 1]} : vector<2x128xf32> to vector<2x32xf32>
    %364 = math.tanh %363 : vector<2x32xf32>
    %365 = vector.extract_strided_slice %350 {offsets = [0, 96], sizes = [2, 32], strides = [1, 1]} : vector<2x128xf32> to vector<2x32xf32>
    %366 = arith.negf %365 : vector<2x32xf32>
    %367 = math.exp %366 : vector<2x32xf32>
    %cst_98 = arith.constant 1.000000e+00 : f32
    %368 = vector.broadcast %cst_98 : f32 to vector<2x32xf32>
    %369 = arith.addf %368, %367 : vector<2x32xf32>
    %370 = arith.divf %368, %369 : vector<2x32xf32>
    %371 = arith.mulf %362, %300 : vector<2x32xf32>
    %372 = arith.mulf %356, %364 : vector<2x32xf32>
    %373 = arith.addf %371, %372 : vector<2x32xf32>
    %374 = math.tanh %373 : vector<2x32xf32>
    %375 = arith.mulf %370, %374 : vector<2x32xf32>
    %376 = arith.index_cast %343 : i32 to index
    %c0_99 = arith.constant 0 : index
    %c0_100 = arith.constant 0 : index
    %377 = vector.load %arg5[%376, %c0_99, %c0_100] : memref<8x2x32xf32, #tpu.memory_space<vmem>>, vector<1x2x32xf32>
    %378 = vector.shape_cast %377 : vector<1x2x32xf32> to vector<2x32xf32>
    %379 = vector.shape_cast %375 : vector<2x32xf32> to vector<1x2x32xf32>
    tpu.vector_store %arg5[%376, %c0_99, %c0_100], %379 {strides = array<i32>} : memref<8x2x32xf32, #tpu.memory_space<vmem>>, vector<1x2x32xf32>,
    %c5_i32 = arith.constant 5 : i32
    %380 = arith.index_cast %c5_i32 : i32 to index
    %c0_101 = arith.constant 0 : index
    %c0_102 = arith.constant 0 : index
    %381 = vector.load %arg1[%380, %c0_101, %c0_102] : memref<8x2x128xbf16, #tpu.memory_space<vmem>>, vector<1x2x128xbf16>
    %382 = vector.shape_cast %381 : vector<1x2x128xbf16> to vector<2x128xbf16>
    %383 = arith.extf %382 : vector<2x128xbf16> to vector<2x128xf32>
    %384 = arith.truncf %338 : vector<2x32xf32> to vector<2x32xbf16>
    %cst_103 = arith.constant dense<0.000000e+00> : vector<2x128xf32>
    %385 = tpu.matmul %384, %4, %cst_103 {dimension_numbers = #tpu.dot_dimension_numbers<[1], [0], [0], [1], [0, 0, 1, 1], [], []>} : vector<2x32xbf16>, vector<32x128xbf16>, vector<2x128xf32> -> vector<2x128xf32>
    %386 = arith.addf %383, %385 : vector<2x128xf32>
    %387 = vector.extract_strided_slice %386 {offsets = [0, 0], sizes = [2, 32], strides = [1, 1]} : vector<2x128xf32> to vector<2x32xf32>
    %388 = arith.negf %387 : vector<2x32xf32>
    %389 = math.exp %388 : vector<2x32xf32>
    %cst_104 = arith.constant 1.000000e+00 : f32
    %390 = vector.broadcast %cst_104 : f32 to vector<2x32xf32>
    %391 = arith.addf %390, %389 : vector<2x32xf32>
    %392 = arith.divf %390, %391 : vector<2x32xf32>
    %393 = vector.extract_strided_slice %386 {offsets = [0, 32], sizes = [2, 32], strides = [1, 1]} : vector<2x128xf32> to vector<2x32xf32>
    %394 = arith.negf %393 : vector<2x32xf32>
    %395 = math.exp %394 : vector<2x32xf32>
    %cst_105 = arith.constant 1.000000e+00 : f32
    %396 = vector.broadcast %cst_105 : f32 to vector<2x32xf32>
    %397 = arith.addf %396, %395 : vector<2x32xf32>
    %398 = arith.divf %396, %397 : vector<2x32xf32>
    %399 = vector.extract_strided_slice %386 {offsets = [0, 64], sizes = [2, 32], strides = [1, 1]} : vector<2x128xf32> to vector<2x32xf32>
    %400 = math.tanh %399 : vector<2x32xf32>
    %401 = vector.extract_strided_slice %386 {offsets = [0, 96], sizes = [2, 32], strides = [1, 1]} : vector<2x128xf32> to vector<2x32xf32>
    %402 = arith.negf %401 : vector<2x32xf32>
    %403 = math.exp %402 : vector<2x32xf32>
    %cst_106 = arith.constant 1.000000e+00 : f32
    %404 = vector.broadcast %cst_106 : f32 to vector<2x32xf32>
    %405 = arith.addf %404, %403 : vector<2x32xf32>
    %406 = arith.divf %404, %405 : vector<2x32xf32>
    %407 = arith.mulf %398, %336 : vector<2x32xf32>
    %408 = arith.mulf %392, %400 : vector<2x32xf32>
    %409 = arith.addf %407, %408 : vector<2x32xf32>
    %410 = math.tanh %409 : vector<2x32xf32>
    %411 = arith.mulf %406, %410 : vector<2x32xf32>
    %412 = arith.index_cast %c5_i32 : i32 to index
    %c0_107 = arith.constant 0 : index
    %c0_108 = arith.constant 0 : index
    %413 = vector.load %arg4[%412, %c0_107, %c0_108] : memref<8x2x32xf32, #tpu.memory_space<vmem>>, vector<1x2x32xf32>
    %414 = vector.shape_cast %413 : vector<1x2x32xf32> to vector<2x32xf32>
    %415 = vector.shape_cast %411 : vector<2x32xf32> to vector<1x2x32xf32>
    tpu.vector_store %arg4[%412, %c0_107, %c0_108], %415 {strides = array<i32>} : memref<8x2x32xf32, #tpu.memory_space<vmem>>, vector<1x2x32xf32>,
    %c7_i32_109 = arith.constant 7 : i32
    %416 = arith.subi %c7_i32_109, %c5_i32 : i32
    %417 = arith.index_cast %416 : i32 to index
    %c0_110 = arith.constant 0 : index
    %c0_111 = arith.constant 0 : index
    %418 = vector.load %arg2[%417, %c0_110, %c0_111] : memref<8x2x128xbf16, #tpu.memory_space<vmem>>, vector<1x2x128xbf16>
    %419 = vector.shape_cast %418 : vector<1x2x128xbf16> to vector<2x128xbf16>
    %420 = arith.extf %419 : vector<2x128xbf16> to vector<2x128xf32>
    %421 = arith.truncf %375 : vector<2x32xf32> to vector<2x32xbf16>
    %cst_112 = arith.constant dense<0.000000e+00> : vector<2x128xf32>
    %422 = tpu.matmul %421, %6, %cst_112 {dimension_numbers = #tpu.dot_dimension_numbers<[1], [0], [0], [1], [0, 0, 1, 1], [], []>} : vector<2x32xbf16>, vector<32x128xbf16>, vector<2x128xf32> -> vector<2x128xf32>
    %423 = arith.addf %420, %422 : vector<2x128xf32>
    %424 = vector.extract_strided_slice %423 {offsets = [0, 0], sizes = [2, 32], strides = [1, 1]} : vector<2x128xf32> to vector<2x32xf32>
    %425 = arith.negf %424 : vector<2x32xf32>
    %426 = math.exp %425 : vector<2x32xf32>
    %cst_113 = arith.constant 1.000000e+00 : f32
    %427 = vector.broadcast %cst_113 : f32 to vector<2x32xf32>
    %428 = arith.addf %427, %426 : vector<2x32xf32>
    %429 = arith.divf %427, %428 : vector<2x32xf32>
    %430 = vector.extract_strided_slice %423 {offsets = [0, 32], sizes = [2, 32], strides = [1, 1]} : vector<2x128xf32> to vector<2x32xf32>
    %431 = arith.negf %430 : vector<2x32xf32>
    %432 = math.exp %431 : vector<2x32xf32>
    %cst_114 = arith.constant 1.000000e+00 : f32
    %433 = vector.broadcast %cst_114 : f32 to vector<2x32xf32>
    %434 = arith.addf %433, %432 : vector<2x32xf32>
    %435 = arith.divf %433, %434 : vector<2x32xf32>
    %436 = vector.extract_strided_slice %423 {offsets = [0, 64], sizes = [2, 32], strides = [1, 1]} : vector<2x128xf32> to vector<2x32xf32>
    %437 = math.tanh %436 : vector<2x32xf32>
    %438 = vector.extract_strided_slice %423 {offsets = [0, 96], sizes = [2, 32], strides = [1, 1]} : vector<2x128xf32> to vector<2x32xf32>
    %439 = arith.negf %438 : vector<2x32xf32>
    %440 = math.exp %439 : vector<2x32xf32>
    %cst_115 = arith.constant 1.000000e+00 : f32
    %441 = vector.broadcast %cst_115 : f32 to vector<2x32xf32>
    %442 = arith.addf %441, %440 : vector<2x32xf32>
    %443 = arith.divf %441, %442 : vector<2x32xf32>
    %444 = arith.mulf %435, %373 : vector<2x32xf32>
    %445 = arith.mulf %429, %437 : vector<2x32xf32>
    %446 = arith.addf %444, %445 : vector<2x32xf32>
    %447 = math.tanh %446 : vector<2x32xf32>
    %448 = arith.mulf %443, %447 : vector<2x32xf32>
    %449 = arith.index_cast %416 : i32 to index
    %c0_116 = arith.constant 0 : index
    %c0_117 = arith.constant 0 : index
    %450 = vector.load %arg5[%449, %c0_116, %c0_117] : memref<8x2x32xf32, #tpu.memory_space<vmem>>, vector<1x2x32xf32>
    %451 = vector.shape_cast %450 : vector<1x2x32xf32> to vector<2x32xf32>
    %452 = vector.shape_cast %448 : vector<2x32xf32> to vector<1x2x32xf32>
    tpu.vector_store %arg5[%449, %c0_116, %c0_117], %452 {strides = array<i32>} : memref<8x2x32xf32, #tpu.memory_space<vmem>>, vector<1x2x32xf32>,
    %c6_i32 = arith.constant 6 : i32
    %453 = arith.index_cast %c6_i32 : i32 to index
    %c0_118 = arith.constant 0 : index
    %c0_119 = arith.constant 0 : index
    %454 = vector.load %arg1[%453, %c0_118, %c0_119] : memref<8x2x128xbf16, #tpu.memory_space<vmem>>, vector<1x2x128xbf16>
    %455 = vector.shape_cast %454 : vector<1x2x128xbf16> to vector<2x128xbf16>
    %456 = arith.extf %455 : vector<2x128xbf16> to vector<2x128xf32>
    %457 = arith.truncf %411 : vector<2x32xf32> to vector<2x32xbf16>
    %cst_120 = arith.constant dense<0.000000e+00> : vector<2x128xf32>
    %458 = tpu.matmul %457, %4, %cst_120 {dimension_numbers = #tpu.dot_dimension_numbers<[1], [0], [0], [1], [0, 0, 1, 1], [], []>} : vector<2x32xbf16>, vector<32x128xbf16>, vector<2x128xf32> -> vector<2x128xf32>
    %459 = arith.addf %456, %458 : vector<2x128xf32>
    %460 = vector.extract_strided_slice %459 {offsets = [0, 0], sizes = [2, 32], strides = [1, 1]} : vector<2x128xf32> to vector<2x32xf32>
    %461 = arith.negf %460 : vector<2x32xf32>
    %462 = math.exp %461 : vector<2x32xf32>
    %cst_121 = arith.constant 1.000000e+00 : f32
    %463 = vector.broadcast %cst_121 : f32 to vector<2x32xf32>
    %464 = arith.addf %463, %462 : vector<2x32xf32>
    %465 = arith.divf %463, %464 : vector<2x32xf32>
    %466 = vector.extract_strided_slice %459 {offsets = [0, 32], sizes = [2, 32], strides = [1, 1]} : vector<2x128xf32> to vector<2x32xf32>
    %467 = arith.negf %466 : vector<2x32xf32>
    %468 = math.exp %467 : vector<2x32xf32>
    %cst_122 = arith.constant 1.000000e+00 : f32
    %469 = vector.broadcast %cst_122 : f32 to vector<2x32xf32>
    %470 = arith.addf %469, %468 : vector<2x32xf32>
    %471 = arith.divf %469, %470 : vector<2x32xf32>
    %472 = vector.extract_strided_slice %459 {offsets = [0, 64], sizes = [2, 32], strides = [1, 1]} : vector<2x128xf32> to vector<2x32xf32>
    %473 = math.tanh %472 : vector<2x32xf32>
    %474 = vector.extract_strided_slice %459 {offsets = [0, 96], sizes = [2, 32], strides = [1, 1]} : vector<2x128xf32> to vector<2x32xf32>
    %475 = arith.negf %474 : vector<2x32xf32>
    %476 = math.exp %475 : vector<2x32xf32>
    %cst_123 = arith.constant 1.000000e+00 : f32
    %477 = vector.broadcast %cst_123 : f32 to vector<2x32xf32>
    %478 = arith.addf %477, %476 : vector<2x32xf32>
    %479 = arith.divf %477, %478 : vector<2x32xf32>
    %480 = arith.mulf %471, %409 : vector<2x32xf32>
    %481 = arith.mulf %465, %473 : vector<2x32xf32>
    %482 = arith.addf %480, %481 : vector<2x32xf32>
    %483 = math.tanh %482 : vector<2x32xf32>
    %484 = arith.mulf %479, %483 : vector<2x32xf32>
    %485 = arith.index_cast %c6_i32 : i32 to index
    %c0_124 = arith.constant 0 : index
    %c0_125 = arith.constant 0 : index
    %486 = vector.load %arg4[%485, %c0_124, %c0_125] : memref<8x2x32xf32, #tpu.memory_space<vmem>>, vector<1x2x32xf32>
    %487 = vector.shape_cast %486 : vector<1x2x32xf32> to vector<2x32xf32>
    %488 = vector.shape_cast %484 : vector<2x32xf32> to vector<1x2x32xf32>
    tpu.vector_store %arg4[%485, %c0_124, %c0_125], %488 {strides = array<i32>} : memref<8x2x32xf32, #tpu.memory_space<vmem>>, vector<1x2x32xf32>,
    %c7_i32_126 = arith.constant 7 : i32
    %489 = arith.subi %c7_i32_126, %c6_i32 : i32
    %490 = arith.index_cast %489 : i32 to index
    %c0_127 = arith.constant 0 : index
    %c0_128 = arith.constant 0 : index
    %491 = vector.load %arg2[%490, %c0_127, %c0_128] : memref<8x2x128xbf16, #tpu.memory_space<vmem>>, vector<1x2x128xbf16>
    %492 = vector.shape_cast %491 : vector<1x2x128xbf16> to vector<2x128xbf16>
    %493 = arith.extf %492 : vector<2x128xbf16> to vector<2x128xf32>
    %494 = arith.truncf %448 : vector<2x32xf32> to vector<2x32xbf16>
    %cst_129 = arith.constant dense<0.000000e+00> : vector<2x128xf32>
    %495 = tpu.matmul %494, %6, %cst_129 {dimension_numbers = #tpu.dot_dimension_numbers<[1], [0], [0], [1], [0, 0, 1, 1], [], []>} : vector<2x32xbf16>, vector<32x128xbf16>, vector<2x128xf32> -> vector<2x128xf32>
    %496 = arith.addf %493, %495 : vector<2x128xf32>
    %497 = vector.extract_strided_slice %496 {offsets = [0, 0], sizes = [2, 32], strides = [1, 1]} : vector<2x128xf32> to vector<2x32xf32>
    %498 = arith.negf %497 : vector<2x32xf32>
    %499 = math.exp %498 : vector<2x32xf32>
    %cst_130 = arith.constant 1.000000e+00 : f32
    %500 = vector.broadcast %cst_130 : f32 to vector<2x32xf32>
    %501 = arith.addf %500, %499 : vector<2x32xf32>
    %502 = arith.divf %500, %501 : vector<2x32xf32>
    %503 = vector.extract_strided_slice %496 {offsets = [0, 32], sizes = [2, 32], strides = [1, 1]} : vector<2x128xf32> to vector<2x32xf32>
    %504 = arith.negf %503 : vector<2x32xf32>
    %505 = math.exp %504 : vector<2x32xf32>
    %cst_131 = arith.constant 1.000000e+00 : f32
    %506 = vector.broadcast %cst_131 : f32 to vector<2x32xf32>
    %507 = arith.addf %506, %505 : vector<2x32xf32>
    %508 = arith.divf %506, %507 : vector<2x32xf32>
    %509 = vector.extract_strided_slice %496 {offsets = [0, 64], sizes = [2, 32], strides = [1, 1]} : vector<2x128xf32> to vector<2x32xf32>
    %510 = math.tanh %509 : vector<2x32xf32>
    %511 = vector.extract_strided_slice %496 {offsets = [0, 96], sizes = [2, 32], strides = [1, 1]} : vector<2x128xf32> to vector<2x32xf32>
    %512 = arith.negf %511 : vector<2x32xf32>
    %513 = math.exp %512 : vector<2x32xf32>
    %cst_132 = arith.constant 1.000000e+00 : f32
    %514 = vector.broadcast %cst_132 : f32 to vector<2x32xf32>
    %515 = arith.addf %514, %513 : vector<2x32xf32>
    %516 = arith.divf %514, %515 : vector<2x32xf32>
    %517 = arith.mulf %508, %446 : vector<2x32xf32>
    %518 = arith.mulf %502, %510 : vector<2x32xf32>
    %519 = arith.addf %517, %518 : vector<2x32xf32>
    %520 = math.tanh %519 : vector<2x32xf32>
    %521 = arith.mulf %516, %520 : vector<2x32xf32>
    %522 = arith.index_cast %489 : i32 to index
    %c0_133 = arith.constant 0 : index
    %c0_134 = arith.constant 0 : index
    %523 = vector.load %arg5[%522, %c0_133, %c0_134] : memref<8x2x32xf32, #tpu.memory_space<vmem>>, vector<1x2x32xf32>
    %524 = vector.shape_cast %523 : vector<1x2x32xf32> to vector<2x32xf32>
    %525 = vector.shape_cast %521 : vector<2x32xf32> to vector<1x2x32xf32>
    tpu.vector_store %arg5[%522, %c0_133, %c0_134], %525 {strides = array<i32>} : memref<8x2x32xf32, #tpu.memory_space<vmem>>, vector<1x2x32xf32>,
    %c7_i32_135 = arith.constant 7 : i32
    %526 = arith.index_cast %c7_i32_135 : i32 to index
    %c0_136 = arith.constant 0 : index
    %c0_137 = arith.constant 0 : index
    %527 = vector.load %arg1[%526, %c0_136, %c0_137] : memref<8x2x128xbf16, #tpu.memory_space<vmem>>, vector<1x2x128xbf16>
    %528 = vector.shape_cast %527 : vector<1x2x128xbf16> to vector<2x128xbf16>
    %529 = arith.extf %528 : vector<2x128xbf16> to vector<2x128xf32>
    %530 = arith.truncf %484 : vector<2x32xf32> to vector<2x32xbf16>
    %cst_138 = arith.constant dense<0.000000e+00> : vector<2x128xf32>
    %531 = tpu.matmul %530, %4, %cst_138 {dimension_numbers = #tpu.dot_dimension_numbers<[1], [0], [0], [1], [0, 0, 1, 1], [], []>} : vector<2x32xbf16>, vector<32x128xbf16>, vector<2x128xf32> -> vector<2x128xf32>
    %532 = arith.addf %529, %531 : vector<2x128xf32>
    %533 = vector.extract_strided_slice %532 {offsets = [0, 0], sizes = [2, 32], strides = [1, 1]} : vector<2x128xf32> to vector<2x32xf32>
    %534 = arith.negf %533 : vector<2x32xf32>
    %535 = math.exp %534 : vector<2x32xf32>
    %cst_139 = arith.constant 1.000000e+00 : f32
    %536 = vector.broadcast %cst_139 : f32 to vector<2x32xf32>
    %537 = arith.addf %536, %535 : vector<2x32xf32>
    %538 = arith.divf %536, %537 : vector<2x32xf32>
    %539 = vector.extract_strided_slice %532 {offsets = [0, 32], sizes = [2, 32], strides = [1, 1]} : vector<2x128xf32> to vector<2x32xf32>
    %540 = arith.negf %539 : vector<2x32xf32>
    %541 = math.exp %540 : vector<2x32xf32>
    %cst_140 = arith.constant 1.000000e+00 : f32
    %542 = vector.broadcast %cst_140 : f32 to vector<2x32xf32>
    %543 = arith.addf %542, %541 : vector<2x32xf32>
    %544 = arith.divf %542, %543 : vector<2x32xf32>
    %545 = vector.extract_strided_slice %532 {offsets = [0, 64], sizes = [2, 32], strides = [1, 1]} : vector<2x128xf32> to vector<2x32xf32>
    %546 = math.tanh %545 : vector<2x32xf32>
    %547 = vector.extract_strided_slice %532 {offsets = [0, 96], sizes = [2, 32], strides = [1, 1]} : vector<2x128xf32> to vector<2x32xf32>
    %548 = arith.negf %547 : vector<2x32xf32>
    %549 = math.exp %548 : vector<2x32xf32>
    %cst_141 = arith.constant 1.000000e+00 : f32
    %550 = vector.broadcast %cst_141 : f32 to vector<2x32xf32>
    %551 = arith.addf %550, %549 : vector<2x32xf32>
    %552 = arith.divf %550, %551 : vector<2x32xf32>
    %553 = arith.mulf %544, %482 : vector<2x32xf32>
    %554 = arith.mulf %538, %546 : vector<2x32xf32>
    %555 = arith.addf %553, %554 : vector<2x32xf32>
    %556 = math.tanh %555 : vector<2x32xf32>
    %557 = arith.mulf %552, %556 : vector<2x32xf32>
    %558 = arith.index_cast %c7_i32_135 : i32 to index
    %c0_142 = arith.constant 0 : index
    %c0_143 = arith.constant 0 : index
    %559 = vector.load %arg4[%558, %c0_142, %c0_143] : memref<8x2x32xf32, #tpu.memory_space<vmem>>, vector<1x2x32xf32>
    %560 = vector.shape_cast %559 : vector<1x2x32xf32> to vector<2x32xf32>
    %561 = vector.shape_cast %557 : vector<2x32xf32> to vector<1x2x32xf32>
    tpu.vector_store %arg4[%558, %c0_142, %c0_143], %561 {strides = array<i32>} : memref<8x2x32xf32, #tpu.memory_space<vmem>>, vector<1x2x32xf32>,
    %c7_i32_144 = arith.constant 7 : i32
    %562 = arith.subi %c7_i32_144, %c7_i32_135 : i32
    %563 = arith.index_cast %562 : i32 to index
    %c0_145 = arith.constant 0 : index
    %c0_146 = arith.constant 0 : index
    %564 = vector.load %arg2[%563, %c0_145, %c0_146] : memref<8x2x128xbf16, #tpu.memory_space<vmem>>, vector<1x2x128xbf16>
    %565 = vector.shape_cast %564 : vector<1x2x128xbf16> to vector<2x128xbf16>
    %566 = arith.extf %565 : vector<2x128xbf16> to vector<2x128xf32>
    %567 = arith.truncf %521 : vector<2x32xf32> to vector<2x32xbf16>
    %cst_147 = arith.constant dense<0.000000e+00> : vector<2x128xf32>
    %568 = tpu.matmul %567, %6, %cst_147 {dimension_numbers = #tpu.dot_dimension_numbers<[1], [0], [0], [1], [0, 0, 1, 1], [], []>} : vector<2x32xbf16>, vector<32x128xbf16>, vector<2x128xf32> -> vector<2x128xf32>
    %569 = arith.addf %566, %568 : vector<2x128xf32>
    %570 = vector.extract_strided_slice %569 {offsets = [0, 0], sizes = [2, 32], strides = [1, 1]} : vector<2x128xf32> to vector<2x32xf32>
    %571 = arith.negf %570 : vector<2x32xf32>
    %572 = math.exp %571 : vector<2x32xf32>
    %cst_148 = arith.constant 1.000000e+00 : f32
    %573 = vector.broadcast %cst_148 : f32 to vector<2x32xf32>
    %574 = arith.addf %573, %572 : vector<2x32xf32>
    %575 = arith.divf %573, %574 : vector<2x32xf32>
    %576 = vector.extract_strided_slice %569 {offsets = [0, 32], sizes = [2, 32], strides = [1, 1]} : vector<2x128xf32> to vector<2x32xf32>
    %577 = arith.negf %576 : vector<2x32xf32>
    %578 = math.exp %577 : vector<2x32xf32>
    %cst_149 = arith.constant 1.000000e+00 : f32
    %579 = vector.broadcast %cst_149 : f32 to vector<2x32xf32>
    %580 = arith.addf %579, %578 : vector<2x32xf32>
    %581 = arith.divf %579, %580 : vector<2x32xf32>
    %582 = vector.extract_strided_slice %569 {offsets = [0, 64], sizes = [2, 32], strides = [1, 1]} : vector<2x128xf32> to vector<2x32xf32>
    %583 = math.tanh %582 : vector<2x32xf32>
    %584 = vector.extract_strided_slice %569 {offsets = [0, 96], sizes = [2, 32], strides = [1, 1]} : vector<2x128xf32> to vector<2x32xf32>
    %585 = arith.negf %584 : vector<2x32xf32>
    %586 = math.exp %585 : vector<2x32xf32>
    %cst_150 = arith.constant 1.000000e+00 : f32
    %587 = vector.broadcast %cst_150 : f32 to vector<2x32xf32>
    %588 = arith.addf %587, %586 : vector<2x32xf32>
    %589 = arith.divf %587, %588 : vector<2x32xf32>
    %590 = arith.mulf %581, %519 : vector<2x32xf32>
    %591 = arith.mulf %575, %583 : vector<2x32xf32>
    %592 = arith.addf %590, %591 : vector<2x32xf32>
    %593 = math.tanh %592 : vector<2x32xf32>
    %594 = arith.mulf %589, %593 : vector<2x32xf32>
    %595 = arith.index_cast %562 : i32 to index
    %c0_151 = arith.constant 0 : index
    %c0_152 = arith.constant 0 : index
    %596 = vector.load %arg5[%595, %c0_151, %c0_152] : memref<8x2x32xf32, #tpu.memory_space<vmem>>, vector<1x2x32xf32>
    %597 = vector.shape_cast %596 : vector<1x2x32xf32> to vector<2x32xf32>
    %598 = vector.shape_cast %594 : vector<2x32xf32> to vector<1x2x32xf32>
    tpu.vector_store %arg5[%595, %c0_151, %c0_152], %598 {strides = array<i32>} : memref<8x2x32xf32, #tpu.memory_space<vmem>>, vector<1x2x32xf32>,
    %c8_i32 = arith.constant 8 : i32
    %c0_153 = arith.constant 0 : index
    %c0_154 = arith.constant 0 : index
    %c0_155 = arith.constant 0 : index
    %599 = vector.load %arg8[%c0_153, %c0_154, %c0_155] : memref<2x2x32xf32, #tpu.memory_space<vmem>>, vector<1x2x32xf32>
    %600 = vector.shape_cast %599 : vector<1x2x32xf32> to vector<2x32xf32>
    %601 = vector.shape_cast %557 : vector<2x32xf32> to vector<1x2x32xf32>
    tpu.vector_store %arg8[%c0_153, %c0_154, %c0_155], %601 {strides = array<i32>} : memref<2x2x32xf32, #tpu.memory_space<vmem>>, vector<1x2x32xf32>,
    %c1_156 = arith.constant 1 : index
    %c0_157 = arith.constant 0 : index
    %c0_158 = arith.constant 0 : index
    %602 = vector.load %arg8[%c1_156, %c0_157, %c0_158] : memref<2x2x32xf32, #tpu.memory_space<vmem>>, vector<1x2x32xf32>
    %603 = vector.shape_cast %602 : vector<1x2x32xf32> to vector<2x32xf32>
    %604 = vector.shape_cast %594 : vector<2x32xf32> to vector<1x2x32xf32>
    tpu.vector_store %arg8[%c1_156, %c0_157, %c0_158], %604 {strides = array<i32>} : memref<2x2x32xf32, #tpu.memory_space<vmem>>, vector<1x2x32xf32>,
    %c0_159 = arith.constant 0 : index
    %c0_160 = arith.constant 0 : index
    %c0_161 = arith.constant 0 : index
    %605 = vector.load %arg9[%c0_159, %c0_160, %c0_161] : memref<2x2x32xf32, #tpu.memory_space<vmem>>, vector<1x2x32xf32>
    %606 = vector.shape_cast %605 : vector<1x2x32xf32> to vector<2x32xf32>
    %607 = vector.shape_cast %555 : vector<2x32xf32> to vector<1x2x32xf32>
    tpu.vector_store %arg9[%c0_159, %c0_160, %c0_161], %607 {strides = array<i32>} : memref<2x2x32xf32, #tpu.memory_space<vmem>>, vector<1x2x32xf32>,
    %c1_162 = arith.constant 1 : index
    %c0_163 = arith.constant 0 : index
    %c0_164 = arith.constant 0 : index
    %608 = vector.load %arg9[%c1_162, %c0_163, %c0_164] : memref<2x2x32xf32, #tpu.memory_space<vmem>>, vector<1x2x32xf32>
    %609 = vector.shape_cast %608 : vector<1x2x32xf32> to vector<2x32xf32>
    %610 = vector.shape_cast %592 : vector<2x32xf32> to vector<1x2x32xf32>
    tpu.vector_store %arg9[%c1_162, %c0_163, %c0_164], %610 {strides = array<i32>} : memref<2x2x32xf32, #tpu.memory_space<vmem>>, vector<1x2x32xf32>,
    %c0_i32_165 = arith.constant 0 : i32
    %611 = arith.cmpi eq, %arg0, %c0_i32_165 : i32
    %612 = arith.extui %611 : i1 to i32
    %c0_i32_166 = arith.constant 0 : i32
    %613 = arith.cmpi ne, %612, %c0_i32_166 : i32
    scf.if %613 {
      %c0_167 = arith.constant 0 : index
      %c0_168 = arith.constant 0 : index
      %c0_169 = arith.constant 0 : index
      %614 = vector.load %arg6[%c0_167, %c0_168, %c0_169] : memref<2x2x32xf32, #tpu.memory_space<vmem>>, vector<1x2x32xf32>
      %615 = vector.shape_cast %614 : vector<1x2x32xf32> to vector<2x32xf32>
      %616 = vector.shape_cast %557 : vector<2x32xf32> to vector<1x2x32xf32>
      tpu.vector_store %arg6[%c0_167, %c0_168, %c0_169], %616 {strides = array<i32>} : memref<2x2x32xf32, #tpu.memory_space<vmem>>, vector<1x2x32xf32>,
      %c1_170 = arith.constant 1 : index
      %c0_171 = arith.constant 0 : index
      %c0_172 = arith.constant 0 : index
      %617 = vector.load %arg6[%c1_170, %c0_171, %c0_172] : memref<2x2x32xf32, #tpu.memory_space<vmem>>, vector<1x2x32xf32>
      %618 = vector.shape_cast %617 : vector<1x2x32xf32> to vector<2x32xf32>
      %619 = vector.shape_cast %594 : vector<2x32xf32> to vector<1x2x32xf32>
      tpu.vector_store %arg6[%c1_170, %c0_171, %c0_172], %619 {strides = array<i32>} : memref<2x2x32xf32, #tpu.memory_space<vmem>>, vector<1x2x32xf32>,
      %c0_173 = arith.constant 0 : index
      %c0_174 = arith.constant 0 : index
      %c0_175 = arith.constant 0 : index
      %620 = vector.load %arg7[%c0_173, %c0_174, %c0_175] : memref<2x2x32xf32, #tpu.memory_space<vmem>>, vector<1x2x32xf32>
      %621 = vector.shape_cast %620 : vector<1x2x32xf32> to vector<2x32xf32>
      %622 = vector.shape_cast %555 : vector<2x32xf32> to vector<1x2x32xf32>
      tpu.vector_store %arg7[%c0_173, %c0_174, %c0_175], %622 {strides = array<i32>} : memref<2x2x32xf32, #tpu.memory_space<vmem>>, vector<1x2x32xf32>,
      %c1_176 = arith.constant 1 : index
      %c0_177 = arith.constant 0 : index
      %c0_178 = arith.constant 0 : index
      %623 = vector.load %arg7[%c1_176, %c0_177, %c0_178] : memref<2x2x32xf32, #tpu.memory_space<vmem>>, vector<1x2x32xf32>
      %624 = vector.shape_cast %623 : vector<1x2x32xf32> to vector<2x32xf32>
      %625 = vector.shape_cast %592 : vector<2x32xf32> to vector<1x2x32xf32>
      tpu.vector_store %arg7[%c1_176, %c0_177, %c0_178], %625 {strides = array<i32>} : memref<2x2x32xf32, #tpu.memory_space<vmem>>, vector<1x2x32xf32>,
    } else {
    }
    return
  }
  func.func @transform_0(%arg0: i32) -> (i32, i32, i32) {
    %c0_i32 = arith.constant 0 : i32
    %c0_i32_0 = arith.constant 0 : i32
    %c0_i32_1 = arith.constant 0 : i32
    return %arg0, %c0_i32, %c0_i32_0 : i32, i32, i32
  }
  func.func @transform_1(%arg0: i32) -> (i32, i32, i32) {
    %c0_i32 = arith.constant 0 : i32
    %0 = arith.subi %c0_i32, %arg0 : i32
    %c0_i32_0 = arith.constant 0 : i32
    %c0_i32_1 = arith.constant 0 : i32
    %c0_i32_2 = arith.constant 0 : i32
    return %0, %c0_i32_0, %c0_i32_1 : i32, i32, i32
  }
  func.func @transform_2(%arg0: i32) -> (i32, i32, i32) {
    %c0_i32 = arith.constant 0 : i32
    %c0_i32_0 = arith.constant 0 : i32
    %c0_i32_1 = arith.constant 0 : i32
    %c0_i32_2 = arith.constant 0 : i32
    return %c0_i32, %c0_i32_0, %c0_i32_1 : i32, i32, i32
  }
  func.func @transform_3(%arg0: i32) -> (i32, i32, i32) {
    %c0_i32 = arith.constant 0 : i32
    %c0_i32_0 = arith.constant 0 : i32
    %c0_i32_1 = arith.constant 0 : i32
    return %arg0, %c0_i32, %c0_i32_0 : i32, i32, i32
  }
  func.func @transform_4(%arg0: i32) -> (i32, i32, i32) {
    %c0_i32 = arith.constant 0 : i32
    %0 = arith.subi %c0_i32, %arg0 : i32
    %c0_i32_0 = arith.constant 0 : i32
    %c0_i32_1 = arith.constant 0 : i32
    %c0_i32_2 = arith.constant 0 : i32
    return %0, %c0_i32_0, %c0_i32_1 : i32, i32, i32
  }
  func.func @transform_5(%arg0: i32) -> (i32, i32, i32) {
    %c0_i32 = arith.constant 0 : i32
    %c0_i32_0 = arith.constant 0 : i32
    %c0_i32_1 = arith.constant 0 : i32
    %c0_i32_2 = arith.constant 0 : i32
    return %c0_i32, %c0_i32_0, %c0_i32_1 : i32, i32, i32
  }
  func.func @transform_6(%arg0: i32) -> (i32, i32, i32) {
    %c0_i32 = arith.constant 0 : i32
    %c0_i32_0 = arith.constant 0 : i32
    %c0_i32_1 = arith.constant 0 : i32
    %c0_i32_2 = arith.constant 0 : i32
    return %c0_i32, %c0_i32_0, %c0_i32_1 : i32, i32, i32
  }
}

</mosaic_0001>

<llo_original>
// kernel: encoder_vanilla_forward.1
$region0: #{encoder_vanilla_forward.1}
  #allocation0 [shape = 'u32[]', space=smem, size = 0x4, offset = 0x4, fixed_abs, tag = 'smem constant byte address 0x4 - core index']
  #allocation1 [shape = 'u32[144,128]{1,0:T(1,128)}', space=vmem, size = 0x12000, scoped, tag = 'internal scratch']
  #allocation2 [shape = 'f32[2,2,32]{2,1,0:T(2,128)}', space=vmem, size = 0x800, scoped, tag = 'scratch operand']
  #allocation3 [shape = 'f32[2,2,32]{2,1,0:T(2,128)}', space=vmem, size = 0x800, scoped, tag = 'scratch operand']
  %s0 = inlined_call_operand.vmem [shape: bf16[8,2,128], index: 0, kind: input, shape index: {}]
  %s1 = inlined_call_operand.vmem [shape: bf16[8,2,128], index: 1, kind: input, shape index: {}]
  %s2 = inlined_call_operand.vmem [shape: bf16[2,32,128], index: 2, kind: input, shape index: {}]
  %s3 = inlined_call_operand.vmem [shape: f32[8,2,32], index: 3, kind: output, shape index: {0}]
  %s4 = inlined_call_operand.vmem [shape: f32[8,2,32], index: 4, kind: output, shape index: {1}]
  %s5 = inlined_call_operand.hbm [shape: f32[2,2,32], index: 5, kind: output, shape index: {2}]
  %s6 = inlined_call_operand.hbm [shape: f32[2,2,32], index: 6, kind: output, shape index: {3}]
  %7 = xla_tuple %s3, %s4, %s5, %s6
  %s8 = sld [smem:[#allocation0]]
  $region54: #{encoder_vanilla_forward.1} parent=0
    _
  %s10 = ssub.s32 1, %s8
  %s11 = scalar_select 0, %s10, %s8
  $region1: #{encoder_vanilla_forward.1} parent=0
    #allocation4 [shape = 'u8[2048]{0}', space=vmem, size = 0x800, scoped, tag = 'output window, operand 2, single buffered']
    #allocation5 [shape = 's32[1]{0}', space=sflag, size = 0x4, scoped, tag = 'scoped memory for encoder_vanilla_forward.1']
    #allocation6 [shape = 'u8[2048]{0}', space=vmem, size = 0x800, scoped, tag = 'output window, operand 3, single buffered']
    #allocation7 [shape = 's32[1]{0}', space=sflag, size = 0x4, scoped, tag = 'scoped memory for encoder_vanilla_forward.1']
    %12 = vsyncpa [#allocation5], 0
    %13 = vsyncpa [#allocation7], 0
    // Predicated region
    $region2: #{encoder_vanilla_forward.1} parent=1 // pred_check
      _
    $region3: #{encoder_vanilla_forward.1} parent=1 // pred_check_branch
      %15 = sbr.rel (0) target = $region5
    $region4: #{encoder_vanilla_forward.1} parent=1 // pred_region
      _
    $region5: #{encoder_vanilla_forward.1} parent=1 // pred_fallthru
      _
    // Predicated region
    $region6: #{encoder_vanilla_forward.1} parent=1 // pred_check
      _
    $region7: #{encoder_vanilla_forward.1} parent=1 // pred_check_branch
      %17 = sbr.rel (0) target = $region9
    $region8: #{encoder_vanilla_forward.1} parent=1 // pred_region
      %s18 = ssub.s32 0, 0
      %s19 = smul.u32 8, %s18
      %p20 = scmp.lt.s32.totalorder %s19, 7
      %s21 = scalar_select %p20, %s19, 7
      %s22 = scalar_lea.vmem %s1, %s21
      %s23 = ssub.s32 0, 0
      %s24 = smul.u32 8, %s23
    $region9: #{encoder_vanilla_forward.1} parent=1 // pred_fallthru
      _
    // Predicated region
    $region10: #{encoder_vanilla_forward.1} parent=1 // pred_check
      _
    $region11: #{encoder_vanilla_forward.1} parent=1 // pred_check_branch
      %26 = sbr.rel (0) target = $region13
    $region12: #{encoder_vanilla_forward.1} parent=1 // pred_region
      _
    $region13: #{encoder_vanilla_forward.1} parent=1 // pred_fallthru
      _
    %s27 = ssub.s32 0, 0
    %s28 = smul.u32 8, %s27
    %p29 = scmp.lt.s32.totalorder %s28, 7
    %s30 = scalar_select %p29, %s28, 7
    %s31 = scalar_lea.vmem %s1, %s30
    %s32 = ssub.s32 0, 0
    %s33 = smul.u32 8, %s32
    %p34 = scmp.lt.s32.totalorder %s33, 7
    %s35 = scalar_select %p34, %s33, 7
    %s36 = smul.addr %s35, 2
    %s37 = scalar_lea.vmem %s4, %s36
    %s38 = ssub.s32 0, 0
    %s39 = smul.u32 8, %s38
    %p40 = scmp.lt.s32.totalorder %s39, 7
    %s41 = scalar_select %p40, %s39, 7
    %s42 = scalar_lea.vmem %s1, %s41
    %s43 = ssub.s32 0, 0
    %s44 = smul.u32 8, %s43
    %s45 = ssub.s32 0, 0
    %s46 = smul.u32 8, %s45
    %p47 = scmp.lt.s32.totalorder %s46, 7
    %s48 = scalar_select %p47, %s46, 7
    %s49 = smul.addr %s48, 2
    %s50 = scalar_lea.vmem %s4, %s49
    %s51 = ssub.s32 0, 0
    %s52 = smul.u32 8, %s51
    %p54 = scmp.eq.s32.totalorder 0, 0
    // Predicated region
    $region14: #{encoder_vanilla_forward.1} parent=1 // pred_check
      %p55 = pneg %p54
    $region15: #{encoder_vanilla_forward.1} parent=1 // pred_check_branch
      %57 = sbr.rel (%p55) target = $region17
    $region16: #{encoder_vanilla_forward.1} parent=1 // pred_region
      %vm58 = vcmask 254976
      %59 = vst.msk [vmem:[#allocation2] sm:$0x3] %vm58, 0.0
      %60 = vst.msk [vmem:[#allocation2 + $0x2] sm:$0x3] %vm58, 0.0
      %61 = vst.msk [vmem:[#allocation3] sm:$0x3] %vm58, 0.0
      %62 = vst.msk [vmem:[#allocation3 + $0x2] sm:$0x3] %vm58, 0.0
    $region17: #{encoder_vanilla_forward.1} parent=1 // pred_fallthru
      _
    %v63 = vld [vmem:[%s2] sm:$0xf]
    %v64 = vld [vmem:[%s2 + $0x4] sm:$0xf]
    %v65 = vld [vmem:[%s2 + $0x8] sm:$0xf]
    %v66 = vld [vmem:[%s2 + $0xc] sm:$0xf]
    %s67 = scalar_lea.vmem %s2, 16
    %v68 = vld [vmem:[%s67] sm:$0xf]
    %v69 = vld [vmem:[%s67 + $0x4] sm:$0xf]
    %v70 = vld [vmem:[%s67 + $0x8] sm:$0xf]
    %v71 = vld [vmem:[%s67 + $0xc] sm:$0xf]
    %v72 = vld [vmem:[#allocation2] sm:$0x3]
    %v73 = vld [vmem:[#allocation3] sm:$0x3]
    %s74 = scalar_lea.vmem [#allocation2], 2
    %v75 = vld [vmem:[%s74] sm:$0x3]
    %s76 = scalar_lea.vmem [#allocation3], 2
    %v77 = vld [vmem:[%s76] sm:$0x3]
    %v78 = vld [vmem:[%s0] sm:$0x1]
    %v79 = vunpack.c.l.bf16 %v78
    %v80 = vpack.c.bf16 %v72, %v72
    %v85 = vunpack.c.l.b16 %v63
    %v86 = vunpack.c.l.b16 %v64
    %v87 = vunpack.c.l.b16 %v65
    %v88 = vunpack.c.l.b16 %v66
    %v89 = vpack.c.b16 %v86, %v85
    %v90 = vpack.c.b16 %v88, %v87
    %vm93 = vcmask 261120
    %v95 = vsel %vm93, %v80, 0
    %97 = vmatprep.subr.bf16.mxu0 0
    %98 = vmatpush1.bf16.msra.mxu0 0
    %99 = vmatprep.subr.bf16.mxu0 0
    %100 = vmatpush1.bf16.msra.mxu0 0
    %101 = vmatprep.subr.bf16.mxu0 0
    %102 = vmatpush1.bf16.msra.mxu0 0
    %103 = vmatprep.subr.bf16.mxu0 0
    %104 = vmatpush1.bf16.msra.mxu0 0
    %105 = vmatprep.subr.bf16.mxu0 0
    %106 = vmatpush1.bf16.msra.mxu0 0
    %107 = vmatprep.subr.bf16.mxu0 0
    %108 = vmatpush1.bf16.msra.mxu0 0
    %109 = vmatprep.subr.bf16.mxu0 0
    %110 = vmatpush1.bf16.msra.mxu0 %v90
    %111 = vmatprep.subr.bf16.mxu0 0
    %112 = vmatpush1.bf16.msra.mxu0 %v89
    %113 = vmatprep.subr.bf16.mxu0 0
    %114 = vmatpush2.bf16.msra.mxu0 0
    %115 = vmatprep.subr.bf16.mxu0 0
    %116 = vmatpush2.bf16.msra.mxu0 0
    %117 = vmatprep.subr.bf16.mxu0 0
    %118 = vmatpush2.bf16.msra.mxu0 0
    %119 = vmatprep.subr.bf16.mxu0 0
    %120 = vmatpush2.bf16.msra.mxu0 0
    %121 = vmatprep.subr.bf16.mxu0 0
    %122 = vmatpush2.bf16.msra.mxu0 0
    %123 = vmatprep.subr.bf16.mxu0 0
    %124 = vmatpush2.bf16.msra.mxu0 0
    %125 = vmatprep.subr.bf16.mxu0 0
    %126 = vmatpush2.bf16.msra.mxu0 0
    %127 = vmatprep.subr.bf16.mxu0 0
    %128 = vmatpush2.bf16.msra.mxu0 0
    %129 = vmatprep.mubr.bf16.mxu0 0
    %130 = vmatmul.mubr.bf16.gmra.mxu0 %v95
    %v131 = vpop.f32.mrf.mxu0
    %v132 = vadd.f32 0.0, %v131
    %v133 = vpop.f32.mrf.mxu0
    %v134 = vpop.f32.mrf.mxu0
    %v135 = vpop.f32.mrf.mxu0
    %136 = vdwg.mxu0
    %v137 = vadd.f32 %v79, %v132
    %v138 = vxor.u32 %v137, 2147483648
    %v139 = vmul.f32 %v138, 1.442695
    %v140 = vpow.pop %v139
    %v141 = vadd.f32 %v140, 1.0
    %v142 = vrcp.pop %v141
    %v143 = vmul.f32 1.0, %v142
    %v144 = vtanh.pop %v137
    %v147 = vunpack.c.l.s4 1983009808
    %v148 = vunpack.c.0.s8 %v147
    %v149 = vlaneseq
    %v150 = vshrl.u32 %v149, 7
    %v151 = vsub.s32 %v148, %v150
    %v152 = vrot.slane %v73, %v151
    %153 = vrot.lane.b32.xlu0 %v152, 32
    %v154 = vpop.permute.xlu0 %153
    %v156 = vmul.f32 %v143, %v154
    %158 = vrot.lane.b32.xlu0 %v144, 64
    %v159 = vpop.permute.xlu0 %158
    %v161 = vmul.f32 %v143, %v159
    %163 = vrot.lane.b32.xlu0 %v161, 32
    %v164 = vpop.permute.xlu0 %163
    %v166 = vadd.f32 %v156, %v164
    %v167 = vtanh.pop %v166
    %169 = vrot.lane.b32.xlu0 %v167, 64
    %v170 = vpop.permute.xlu0 %169
    %v172 = vmul.f32 %v143, %v170
    %v175 = vunpack.c.l.s4 1983009808
    %v176 = vunpack.c.0.s8 %v175
    %v177 = vlaneseq
    %v178 = vshrl.u32 %v177, 7
    %v179 = vsub.s32 %v176, %v178
    %v180 = vrot.slane %v172, %v179
    %181 = vrot.lane.b32.xlu0 %v180, 32
    %v182 = vpop.permute.xlu0 %181
    %vm184 = vcmask 254976
    %185 = vst.msk [vmem:[%s3] sm:$0x3] %vm184, %v182
    %s186 = scalar_lea.vmem %s42, 7
    %v187 = vld [vmem:[%s186] sm:$0x1]
    %v188 = vunpack.c.l.bf16 %v187
    %v189 = vpack.c.bf16 %v75, %v75
    %v194 = vunpack.c.l.b16 %v68
    %v195 = vunpack.c.l.b16 %v69
    %v196 = vunpack.c.l.b16 %v70
    %v197 = vunpack.c.l.b16 %v71
    %v198 = vpack.c.b16 %v195, %v194
    %v199 = vpack.c.b16 %v197, %v196
    %v203 = vsel %vm93, %v189, 0
    %205 = vmatprep.subr.bf16.mxu0 0
    %206 = vmatpush1.bf16.msra.mxu0 0
    %207 = vmatprep.subr.bf16.mxu0 0
    %208 = vmatpush1.bf16.msra.mxu0 0
    %209 = vmatprep.subr.bf16.mxu0 0
    %210 = vmatpush1.bf16.msra.mxu0 0
    %211 = vmatprep.subr.bf16.mxu0 0
    %212 = vmatpush1.bf16.msra.mxu0 0
    %213 = vmatprep.subr.bf16.mxu0 0
    %214 = vmatpush1.bf16.msra.mxu0 0
    %215 = vmatprep.subr.bf16.mxu0 0
    %216 = vmatpush1.bf16.msra.mxu0 0
    %217 = vmatprep.subr.bf16.mxu0 0
    %218 = vmatpush1.bf16.msra.mxu0 %v199
    %219 = vmatprep.subr.bf16.mxu0 0
    %220 = vmatpush1.bf16.msra.mxu0 %v198
    %221 = vmatprep.subr.bf16.mxu0 0
    %222 = vmatpush2.bf16.msra.mxu0 0
    %223 = vmatprep.subr.bf16.mxu0 0
    %224 = vmatpush2.bf16.msra.mxu0 0
    %225 = vmatprep.subr.bf16.mxu0 0
    %226 = vmatpush2.bf16.msra.mxu0 0
    %227 = vmatprep.subr.bf16.mxu0 0
    %228 = vmatpush2.bf16.msra.mxu0 0
    %229 = vmatprep.subr.bf16.mxu0 0
    %230 = vmatpush2.bf16.msra.mxu0 0
    %231 = vmatprep.subr.bf16.mxu0 0
    %232 = vmatpush2.bf16.msra.mxu0 0
    %233 = vmatprep.subr.bf16.mxu0 0
    %234 = vmatpush2.bf16.msra.mxu0 0
    %235 = vmatprep.subr.bf16.mxu0 0
    %236 = vmatpush2.bf16.msra.mxu0 0
    %237 = vmatprep.mubr.bf16.mxu0 0
    %238 = vmatmul.mubr.bf16.gmra.mxu0 %v203
    %v239 = vpop.f32.mrf.mxu0
    %v240 = vadd.f32 0.0, %v239
    %v241 = vpop.f32.mrf.mxu0
    %v242 = vpop.f32.mrf.mxu0
    %v243 = vpop.f32.mrf.mxu0
    %244 = vdwg.mxu0
    %v245 = vadd.f32 %v188, %v240
    %v246 = vxor.u32 %v245, 2147483648
    %v247 = vmul.f32 %v246, 1.442695
    %v248 = vpow.pop %v247
    %v249 = vadd.f32 %v248, 1.0
    %v250 = vrcp.pop %v249
    %v251 = vmul.f32 1.0, %v250
    %v252 = vtanh.pop %v245
    %v255 = vunpack.c.l.s4 1983009808
    %v256 = vunpack.c.0.s8 %v255
    %v257 = vlaneseq
    %v258 = vshrl.u32 %v257, 7
    %v259 = vsub.s32 %v256, %v258
    %v260 = vrot.slane %v77, %v259
    %261 = vrot.lane.b32.xlu0 %v260, 32
    %v262 = vpop.permute.xlu0 %261
    %v264 = vmul.f32 %v251, %v262
    %266 = vrot.lane.b32.xlu0 %v252, 64
    %v267 = vpop.permute.xlu0 %266
    %v269 = vmul.f32 %v251, %v267
    %271 = vrot.lane.b32.xlu0 %v269, 32
    %v272 = vpop.permute.xlu0 %271
    %v274 = vadd.f32 %v264, %v272
    %v275 = vtanh.pop %v274
    %277 = vrot.lane.b32.xlu0 %v275, 64
    %v278 = vpop.permute.xlu0 %277
    %v280 = vmul.f32 %v251, %v278
    %v283 = vunpack.c.l.s4 1983009808
    %v284 = vunpack.c.0.s8 %v283
    %v285 = vlaneseq
    %v286 = vshrl.u32 %v285, 7
    %v287 = vsub.s32 %v284, %v286
    %v288 = vrot.slane %v280, %v287
    %289 = vrot.lane.b32.xlu0 %v288, 32
    %v290 = vpop.permute.xlu0 %289
    %s292 = scalar_lea.vmem %s50, 14
    %293 = vst.msk [vmem:[%s292] sm:$0x3] %vm184, %v290
    %s294 = scalar_lea.vmem %s0, 1
    %v295 = vld [vmem:[%s294] sm:$0x1]
    %v296 = vunpack.c.l.bf16 %v295
    %v297 = vpack.c.bf16 %v172, %v172
    %299 = vrot.lane.b32.xlu0 %v297, 32
    %v300 = vpop.permute.xlu0 %299
    %v302 = vsel %vm93, %v300, 0
    %304 = vmatprep.subr.bf16.mxu0 0
    %305 = vmatpush1.bf16.msra.mxu0 0
    %306 = vmatprep.subr.bf16.mxu0 0
    %307 = vmatpush1.bf16.msra.mxu0 0
    %308 = vmatprep.subr.bf16.mxu0 0
    %309 = vmatpush1.bf16.msra.mxu0 0
    %310 = vmatprep.subr.bf16.mxu0 0
    %311 = vmatpush1.bf16.msra.mxu0 0
    %312 = vmatprep.subr.bf16.mxu0 0
    %313 = vmatpush1.bf16.msra.mxu0 0
    %314 = vmatprep.subr.bf16.mxu0 0
    %315 = vmatpush1.bf16.msra.mxu0 0
    %316 = vmatprep.subr.bf16.mxu0 0
    %317 = vmatpush1.bf16.msra.mxu0 %v90
    %318 = vmatprep.subr.bf16.mxu0 0
    %319 = vmatpush1.bf16.msra.mxu0 %v89
    %320 = vmatprep.subr.bf16.mxu0 0
    %321 = vmatpush2.bf16.msra.mxu0 0
    %322 = vmatprep.subr.bf16.mxu0 0
    %323 = vmatpush2.bf16.msra.mxu0 0
    %324 = vmatprep.subr.bf16.mxu0 0
    %325 = vmatpush2.bf16.msra.mxu0 0
    %326 = vmatprep.subr.bf16.mxu0 0
    %327 = vmatpush2.bf16.msra.mxu0 0
    %328 = vmatprep.subr.bf16.mxu0 0
    %329 = vmatpush2.bf16.msra.mxu0 0
    %330 = vmatprep.subr.bf16.mxu0 0
    %331 = vmatpush2.bf16.msra.mxu0 0
    %332 = vmatprep.subr.bf16.mxu0 0
    %333 = vmatpush2.bf16.msra.mxu0 0
    %334 = vmatprep.subr.bf16.mxu0 0
    %335 = vmatpush2.bf16.msra.mxu0 0
    %336 = vmatprep.mubr.bf16.mxu0 0
    %337 = vmatmul.mubr.bf16.gmra.mxu0 %v302
    %v338 = vpop.f32.mrf.mxu0
    %v339 = vadd.f32 0.0, %v338
    %v340 = vpop.f32.mrf.mxu0
    %v341 = vpop.f32.mrf.mxu0
    %v342 = vpop.f32.mrf.mxu0
    %343 = vdwg.mxu0
    %v344 = vadd.f32 %v296, %v339
    %v345 = vxor.u32 %v344, 2147483648
    %v346 = vmul.f32 %v345, 1.442695
    %v347 = vpow.pop %v346
    %v348 = vadd.f32 %v347, 1.0
    %v349 = vrcp.pop %v348
    %v350 = vmul.f32 1.0, %v349
    %v351 = vtanh.pop %v344
    %v352 = vmul.f32 %v350, %v166
    %354 = vrot.lane.b32.xlu0 %v351, 64
    %v355 = vpop.permute.xlu0 %354
    %v357 = vmul.f32 %v350, %v355
    %359 = vrot.lane.b32.xlu0 %v357, 32
    %v360 = vpop.permute.xlu0 %359
    %v362 = vadd.f32 %v352, %v360
    %v363 = vtanh.pop %v362
    %365 = vrot.lane.b32.xlu0 %v363, 64
    %v366 = vpop.permute.xlu0 %365
    %v368 = vmul.f32 %v350, %v366
    %v371 = vunpack.c.l.s4 1983009808
    %v372 = vunpack.c.0.s8 %v371
    %v373 = vlaneseq
    %v374 = vshrl.u32 %v373, 7
    %v375 = vsub.s32 %v372, %v374
    %v376 = vrot.slane %v368, %v375
    %377 = vrot.lane.b32.xlu0 %v376, 32
    %v378 = vpop.permute.xlu0 %377
    %s380 = scalar_lea.vmem %s3, 2
    %381 = vst.msk [vmem:[%s380] sm:$0x3] %vm184, %v378
    %s382 = scalar_lea.vmem %s42, 6
    %v383 = vld [vmem:[%s382] sm:$0x1]
    %v384 = vunpack.c.l.bf16 %v383
    %v385 = vpack.c.bf16 %v280, %v280
    %387 = vrot.lane.b32.xlu0 %v385, 32
    %v388 = vpop.permute.xlu0 %387
    %v390 = vsel %vm93, %v388, 0
    %392 = vmatprep.subr.bf16.mxu0 0
    %393 = vmatpush1.bf16.msra.mxu0 0
    %394 = vmatprep.subr.bf16.mxu0 0
    %395 = vmatpush1.bf16.msra.mxu0 0
    %396 = vmatprep.subr.bf16.mxu0 0
    %397 = vmatpush1.bf16.msra.mxu0 0
    %398 = vmatprep.subr.bf16.mxu0 0
    %399 = vmatpush1.bf16.msra.mxu0 0
    %400 = vmatprep.subr.bf16.mxu0 0
    %401 = vmatpush1.bf16.msra.mxu0 0
    %402 = vmatprep.subr.bf16.mxu0 0
    %403 = vmatpush1.bf16.msra.mxu0 0
    %404 = vmatprep.subr.bf16.mxu0 0
    %405 = vmatpush1.bf16.msra.mxu0 %v199
    %406 = vmatprep.subr.bf16.mxu0 0
    %407 = vmatpush1.bf16.msra.mxu0 %v198
    %408 = vmatprep.subr.bf16.mxu0 0
    %409 = vmatpush2.bf16.msra.mxu0 0
    %410 = vmatprep.subr.bf16.mxu0 0
    %411 = vmatpush2.bf16.msra.mxu0 0
    %412 = vmatprep.subr.bf16.mxu0 0
    %413 = vmatpush2.bf16.msra.mxu0 0
    %414 = vmatprep.subr.bf16.mxu0 0
    %415 = vmatpush2.bf16.msra.mxu0 0
    %416 = vmatprep.subr.bf16.mxu0 0
    %417 = vmatpush2.bf16.msra.mxu0 0
    %418 = vmatprep.subr.bf16.mxu0 0
    %419 = vmatpush2.bf16.msra.mxu0 0
    %420 = vmatprep.subr.bf16.mxu0 0
    %421 = vmatpush2.bf16.msra.mxu0 0
    %422 = vmatprep.subr.bf16.mxu0 0
    %423 = vmatpush2.bf16.msra.mxu0 0
    %424 = vmatprep.mubr.bf16.mxu0 0
    %425 = vmatmul.mubr.bf16.gmra.mxu0 %v390
    %v426 = vpop.f32.mrf.mxu0
    %v427 = vadd.f32 0.0, %v426
    %v428 = vpop.f32.mrf.mxu0
    %v429 = vpop.f32.mrf.mxu0
    %v430 = vpop.f32.mrf.mxu0
    %431 = vdwg.mxu0
    %v432 = vadd.f32 %v384, %v427
    %v433 = vxor.u32 %v432, 2147483648
    %v434 = vmul.f32 %v433, 1.442695
    %v435 = vpow.pop %v434
    %v436 = vadd.f32 %v435, 1.0
    %v437 = vrcp.pop %v436
    %v438 = vmul.f32 1.0, %v437
    %v439 = vtanh.pop %v432
    %v440 = vmul.f32 %v438, %v274
    %442 = vrot.lane.b32.xlu0 %v439, 64
    %v443 = vpop.permute.xlu0 %442
    %v445 = vmul.f32 %v438, %v443
    %447 = vrot.lane.b32.xlu0 %v445, 32
    %v448 = vpop.permute.xlu0 %447
    %v450 = vadd.f32 %v440, %v448
    %v451 = vtanh.pop %v450
    %453 = vrot.lane.b32.xlu0 %v451, 64
    %v454 = vpop.permute.xlu0 %453
    %v456 = vmul.f32 %v438, %v454
    %v459 = vunpack.c.l.s4 1983009808
    %v460 = vunpack.c.0.s8 %v459
    %v461 = vlaneseq
    %v462 = vshrl.u32 %v461, 7
    %v463 = vsub.s32 %v460, %v462
    %v464 = vrot.slane %v456, %v463
    %465 = vrot.lane.b32.xlu0 %v464, 32
    %v466 = vpop.permute.xlu0 %465
    %s468 = scalar_lea.vmem %s50, 12
    %469 = vst.msk [vmem:[%s468] sm:$0x3] %vm184, %v466
    %s470 = scalar_lea.vmem %s0, 2
    %v471 = vld [vmem:[%s470] sm:$0x1]
    %v472 = vunpack.c.l.bf16 %v471
    %v473 = vpack.c.bf16 %v368, %v368
    %475 = vrot.lane.b32.xlu0 %v473, 32
    %v476 = vpop.permute.xlu0 %475
    %v478 = vsel %vm93, %v476, 0
    %480 = vmatprep.subr.bf16.mxu0 0
    %481 = vmatpush1.bf16.msra.mxu0 0
    %482 = vmatprep.subr.bf16.mxu0 0
    %483 = vmatpush1.bf16.msra.mxu0 0
    %484 = vmatprep.subr.bf16.mxu0 0
    %485 = vmatpush1.bf16.msra.mxu0 0
    %486 = vmatprep.subr.bf16.mxu0 0
    %487 = vmatpush1.bf16.msra.mxu0 0
    %488 = vmatprep.subr.bf16.mxu0 0
    %489 = vmatpush1.bf16.msra.mxu0 0
    %490 = vmatprep.subr.bf16.mxu0 0
    %491 = vmatpush1.bf16.msra.mxu0 0
    %492 = vmatprep.subr.bf16.mxu0 0
    %493 = vmatpush1.bf16.msra.mxu0 %v90
    %494 = vmatprep.subr.bf16.mxu0 0
    %495 = vmatpush1.bf16.msra.mxu0 %v89
    %496 = vmatprep.subr.bf16.mxu0 0
    %497 = vmatpush2.bf16.msra.mxu0 0
    %498 = vmatprep.subr.bf16.mxu0 0
    %499 = vmatpush2.bf16.msra.mxu0 0
    %500 = vmatprep.subr.bf16.mxu0 0
    %501 = vmatpush2.bf16.msra.mxu0 0
    %502 = vmatprep.subr.bf16.mxu0 0
    %503 = vmatpush2.bf16.msra.mxu0 0
    %504 = vmatprep.subr.bf16.mxu0 0
    %505 = vmatpush2.bf16.msra.mxu0 0
    %506 = vmatprep.subr.bf16.mxu0 0
    %507 = vmatpush2.bf16.msra.mxu0 0
    %508 = vmatprep.subr.bf16.mxu0 0
    %509 = vmatpush2.bf16.msra.mxu0 0
    %510 = vmatprep.subr.bf16.mxu0 0
    %511 = vmatpush2.bf16.msra.mxu0 0
    %512 = vmatprep.mubr.bf16.mxu0 0
    %513 = vmatmul.mubr.bf16.gmra.mxu0 %v478
    %v514 = vpop.f32.mrf.mxu0
    %v515 = vadd.f32 0.0, %v514
    %v516 = vpop.f32.mrf.mxu0
    %v517 = vpop.f32.mrf.mxu0
    %v518 = vpop.f32.mrf.mxu0
    %519 = vdwg.mxu0
    %v520 = vadd.f32 %v472, %v515
    %v521 = vxor.u32 %v520, 2147483648
    %v522 = vmul.f32 %v521, 1.442695
    %v523 = vpow.pop %v522
    %v524 = vadd.f32 %v523, 1.0
    %v525 = vrcp.pop %v524
    %v526 = vmul.f32 1.0, %v525
    %v527 = vtanh.pop %v520
    %v528 = vmul.f32 %v526, %v362
    %530 = vrot.lane.b32.xlu0 %v527, 64
    %v531 = vpop.permute.xlu0 %530
    %v533 = vmul.f32 %v526, %v531
    %535 = vrot.lane.b32.xlu0 %v533, 32
    %v536 = vpop.permute.xlu0 %535
    %v538 = vadd.f32 %v528, %v536
    %v539 = vtanh.pop %v538
    %541 = vrot.lane.b32.xlu0 %v539, 64
    %v542 = vpop.permute.xlu0 %541
    %v544 = vmul.f32 %v526, %v542
    %v547 = vunpack.c.l.s4 1983009808
    %v548 = vunpack.c.0.s8 %v547
    %v549 = vlaneseq
    %v550 = vshrl.u32 %v549, 7
    %v551 = vsub.s32 %v548, %v550
    %v552 = vrot.slane %v544, %v551
    %553 = vrot.lane.b32.xlu0 %v552, 32
    %v554 = vpop.permute.xlu0 %553
    %s556 = scalar_lea.vmem %s3, 4
    %557 = vst.msk [vmem:[%s556] sm:$0x3] %vm184, %v554
    %s558 = scalar_lea.vmem %s42, 5
    %v559 = vld [vmem:[%s558] sm:$0x1]
    %v560 = vunpack.c.l.bf16 %v559
    %v561 = vpack.c.bf16 %v456, %v456
    %563 = vrot.lane.b32.xlu0 %v561, 32
    %v564 = vpop.permute.xlu0 %563
    %v566 = vsel %vm93, %v564, 0
    %568 = vmatprep.subr.bf16.mxu0 0
    %569 = vmatpush1.bf16.msra.mxu0 0
    %570 = vmatprep.subr.bf16.mxu0 0
    %571 = vmatpush1.bf16.msra.mxu0 0
    %572 = vmatprep.subr.bf16.mxu0 0
    %573 = vmatpush1.bf16.msra.mxu0 0
    %574 = vmatprep.subr.bf16.mxu0 0
    %575 = vmatpush1.bf16.msra.mxu0 0
    %576 = vmatprep.subr.bf16.mxu0 0
    %577 = vmatpush1.bf16.msra.mxu0 0
    %578 = vmatprep.subr.bf16.mxu0 0
    %579 = vmatpush1.bf16.msra.mxu0 0
    %580 = vmatprep.subr.bf16.mxu0 0
    %581 = vmatpush1.bf16.msra.mxu0 %v199
    %582 = vmatprep.subr.bf16.mxu0 0
    %583 = vmatpush1.bf16.msra.mxu0 %v198
    %584 = vmatprep.subr.bf16.mxu0 0
    %585 = vmatpush2.bf16.msra.mxu0 0
    %586 = vmatprep.subr.bf16.mxu0 0
    %587 = vmatpush2.bf16.msra.mxu0 0
    %588 = vmatprep.subr.bf16.mxu0 0
    %589 = vmatpush2.bf16.msra.mxu0 0
    %590 = vmatprep.subr.bf16.mxu0 0
    %591 = vmatpush2.bf16.msra.mxu0 0
    %592 = vmatprep.subr.bf16.mxu0 0
    %593 = vmatpush2.bf16.msra.mxu0 0
    %594 = vmatprep.subr.bf16.mxu0 0
    %595 = vmatpush2.bf16.msra.mxu0 0
    %596 = vmatprep.subr.bf16.mxu0 0
    %597 = vmatpush2.bf16.msra.mxu0 0
    %598 = vmatprep.subr.bf16.mxu0 0
    %599 = vmatpush2.bf16.msra.mxu0 0
    %600 = vmatprep.mubr.bf16.mxu0 0
    %601 = vmatmul.mubr.bf16.gmra.mxu0 %v566
    %v602 = vpop.f32.mrf.mxu0
    %v603 = vadd.f32 0.0, %v602
    %v604 = vpop.f32.mrf.mxu0
    %v605 = vpop.f32.mrf.mxu0
    %v606 = vpop.f32.mrf.mxu0
    %607 = vdwg.mxu0
    %v608 = vadd.f32 %v560, %v603
    %v609 = vxor.u32 %v608, 2147483648
    %v610 = vmul.f32 %v609, 1.442695
    %v611 = vpow.pop %v610
    %v612 = vadd.f32 %v611, 1.0
    %v613 = vrcp.pop %v612
    %v614 = vmul.f32 1.0, %v613
    %v615 = vtanh.pop %v608
    %v616 = vmul.f32 %v614, %v450
    %618 = vrot.lane.b32.xlu0 %v615, 64
    %v619 = vpop.permute.xlu0 %618
    %v621 = vmul.f32 %v614, %v619
    %623 = vrot.lane.b32.xlu0 %v621, 32
    %v624 = vpop.permute.xlu0 %623
    %v626 = vadd.f32 %v616, %v624
    %v627 = vtanh.pop %v626
    %629 = vrot.lane.b32.xlu0 %v627, 64
    %v630 = vpop.permute.xlu0 %629
    %v632 = vmul.f32 %v614, %v630
    %v635 = vunpack.c.l.s4 1983009808
    %v636 = vunpack.c.0.s8 %v635
    %v637 = vlaneseq
    %v638 = vshrl.u32 %v637, 7
    %v639 = vsub.s32 %v636, %v638
    %v640 = vrot.slane %v632, %v639
    %641 = vrot.lane.b32.xlu0 %v640, 32
    %v642 = vpop.permute.xlu0 %641
    %s644 = scalar_lea.vmem %s50, 10
    %645 = vst.msk [vmem:[%s644] sm:$0x3] %vm184, %v642
    %s646 = scalar_lea.vmem %s0, 3
    %v647 = vld [vmem:[%s646] sm:$0x1]
    %v648 = vunpack.c.l.bf16 %v647
    %v649 = vpack.c.bf16 %v544, %v544
    %651 = vrot.lane.b32.xlu0 %v649, 32
    %v652 = vpop.permute.xlu0 %651
    %v654 = vsel %vm93, %v652, 0
    %656 = vmatprep.subr.bf16.mxu0 0
    %657 = vmatpush1.bf16.msra.mxu0 0
    %658 = vmatprep.subr.bf16.mxu0 0
    %659 = vmatpush1.bf16.msra.mxu0 0
    %660 = vmatprep.subr.bf16.mxu0 0
    %661 = vmatpush1.bf16.msra.mxu0 0
    %662 = vmatprep.subr.bf16.mxu0 0
    %663 = vmatpush1.bf16.msra.mxu0 0
    %664 = vmatprep.subr.bf16.mxu0 0
    %665 = vmatpush1.bf16.msra.mxu0 0
    %666 = vmatprep.subr.bf16.mxu0 0
    %667 = vmatpush1.bf16.msra.mxu0 0
    %668 = vmatprep.subr.bf16.mxu0 0
    %669 = vmatpush1.bf16.msra.mxu0 %v90
    %670 = vmatprep.subr.bf16.mxu0 0
    %671 = vmatpush1.bf16.msra.mxu0 %v89
    %672 = vmatprep.subr.bf16.mxu0 0
    %673 = vmatpush2.bf16.msra.mxu0 0
    %674 = vmatprep.subr.bf16.mxu0 0
    %675 = vmatpush2.bf16.msra.mxu0 0
    %676 = vmatprep.subr.bf16.mxu0 0
    %677 = vmatpush2.bf16.msra.mxu0 0
    %678 = vmatprep.subr.bf16.mxu0 0
    %679 = vmatpush2.bf16.msra.mxu0 0
    %680 = vmatprep.subr.bf16.mxu0 0
    %681 = vmatpush2.bf16.msra.mxu0 0
    %682 = vmatprep.subr.bf16.mxu0 0
    %683 = vmatpush2.bf16.msra.mxu0 0
    %684 = vmatprep.subr.bf16.mxu0 0
    %685 = vmatpush2.bf16.msra.mxu0 0
    %686 = vmatprep.subr.bf16.mxu0 0
    %687 = vmatpush2.bf16.msra.mxu0 0
    %688 = vmatprep.mubr.bf16.mxu0 0
    %689 = vmatmul.mubr.bf16.gmra.mxu0 %v654
    %v690 = vpop.f32.mrf.mxu0
    %v691 = vadd.f32 0.0, %v690
    %v692 = vpop.f32.mrf.mxu0
    %v693 = vpop.f32.mrf.mxu0
    %v694 = vpop.f32.mrf.mxu0
    %695 = vdwg.mxu0
    %v696 = vadd.f32 %v648, %v691
    %v697 = vxor.u32 %v696, 2147483648
    %v698 = vmul.f32 %v697, 1.442695
    %v699 = vpow.pop %v698
    %v700 = vadd.f32 %v699, 1.0
    %v701 = vrcp.pop %v700
    %v702 = vmul.f32 1.0, %v701
    %v703 = vtanh.pop %v696
    %v704 = vmul.f32 %v702, %v538
    %706 = vrot.lane.b32.xlu0 %v703, 64
    %v707 = vpop.permute.xlu0 %706
    %v709 = vmul.f32 %v702, %v707
    %711 = vrot.lane.b32.xlu0 %v709, 32
    %v712 = vpop.permute.xlu0 %711
    %v714 = vadd.f32 %v704, %v712
    %v715 = vtanh.pop %v714
    %717 = vrot.lane.b32.xlu0 %v715, 64
    %v718 = vpop.permute.xlu0 %717
    %v720 = vmul.f32 %v702, %v718
    %v723 = vunpack.c.l.s4 1983009808
    %v724 = vunpack.c.0.s8 %v723
    %v725 = vlaneseq
    %v726 = vshrl.u32 %v725, 7
    %v727 = vsub.s32 %v724, %v726
    %v728 = vrot.slane %v720, %v727
    %729 = vrot.lane.b32.xlu0 %v728, 32
    %v730 = vpop.permute.xlu0 %729
    %s732 = scalar_lea.vmem %s3, 6
    %733 = vst.msk [vmem:[%s732] sm:$0x3] %vm184, %v730
    %s734 = scalar_lea.vmem %s42, 4
    %v735 = vld [vmem:[%s734] sm:$0x1]
    %v736 = vunpack.c.l.bf16 %v735
    %v737 = vpack.c.bf16 %v632, %v632
    %739 = vrot.lane.b32.xlu0 %v737, 32
    %v740 = vpop.permute.xlu0 %739
    %v742 = vsel %vm93, %v740, 0
    %744 = vmatprep.subr.bf16.mxu0 0
    %745 = vmatpush1.bf16.msra.mxu0 0
    %746 = vmatprep.subr.bf16.mxu0 0
    %747 = vmatpush1.bf16.msra.mxu0 0
    %748 = vmatprep.subr.bf16.mxu0 0
    %749 = vmatpush1.bf16.msra.mxu0 0
    %750 = vmatprep.subr.bf16.mxu0 0
    %751 = vmatpush1.bf16.msra.mxu0 0
    %752 = vmatprep.subr.bf16.mxu0 0
    %753 = vmatpush1.bf16.msra.mxu0 0
    %754 = vmatprep.subr.bf16.mxu0 0
    %755 = vmatpush1.bf16.msra.mxu0 0
    %756 = vmatprep.subr.bf16.mxu0 0
    %757 = vmatpush1.bf16.msra.mxu0 %v199
    %758 = vmatprep.subr.bf16.mxu0 0
    %759 = vmatpush1.bf16.msra.mxu0 %v198
    %760 = vmatprep.subr.bf16.mxu0 0
    %761 = vmatpush2.bf16.msra.mxu0 0
    %762 = vmatprep.subr.bf16.mxu0 0
    %763 = vmatpush2.bf16.msra.mxu0 0
    %764 = vmatprep.subr.bf16.mxu0 0
    %765 = vmatpush2.bf16.msra.mxu0 0
    %766 = vmatprep.subr.bf16.mxu0 0
    %767 = vmatpush2.bf16.msra.mxu0 0
    %768 = vmatprep.subr.bf16.mxu0 0
    %769 = vmatpush2.bf16.msra.mxu0 0
    %770 = vmatprep.subr.bf16.mxu0 0
    %771 = vmatpush2.bf16.msra.mxu0 0
    %772 = vmatprep.subr.bf16.mxu0 0
    %773 = vmatpush2.bf16.msra.mxu0 0
    %774 = vmatprep.subr.bf16.mxu0 0
    %775 = vmatpush2.bf16.msra.mxu0 0
    %776 = vmatprep.mubr.bf16.mxu0 0
    %777 = vmatmul.mubr.bf16.gmra.mxu0 %v742
    %v778 = vpop.f32.mrf.mxu0
    %v779 = vadd.f32 0.0, %v778
    %v780 = vpop.f32.mrf.mxu0
    %v781 = vpop.f32.mrf.mxu0
    %v782 = vpop.f32.mrf.mxu0
    %783 = vdwg.mxu0
    %v784 = vadd.f32 %v736, %v779
    %v785 = vxor.u32 %v784, 2147483648
    %v786 = vmul.f32 %v785, 1.442695
    %v787 = vpow.pop %v786
    %v788 = vadd.f32 %v787, 1.0
    %v789 = vrcp.pop %v788
    %v790 = vmul.f32 1.0, %v789
    %v791 = vtanh.pop %v784
    %v792 = vmul.f32 %v790, %v626
    %794 = vrot.lane.b32.xlu0 %v791, 64
    %v795 = vpop.permute.xlu0 %794
    %v797 = vmul.f32 %v790, %v795
    %799 = vrot.lane.b32.xlu0 %v797, 32
    %v800 = vpop.permute.xlu0 %799
    %v802 = vadd.f32 %v792, %v800
    %v803 = vtanh.pop %v802
    %805 = vrot.lane.b32.xlu0 %v803, 64
    %v806 = vpop.permute.xlu0 %805
    %v808 = vmul.f32 %v790, %v806
    %v811 = vunpack.c.l.s4 1983009808
    %v812 = vunpack.c.0.s8 %v811
    %v813 = vlaneseq
    %v814 = vshrl.u32 %v813, 7
    %v815 = vsub.s32 %v812, %v814
    %v816 = vrot.slane %v808, %v815
    %817 = vrot.lane.b32.xlu0 %v816, 32
    %v818 = vpop.permute.xlu0 %817
    %s820 = scalar_lea.vmem %s50, 8
    %821 = vst.msk [vmem:[%s820] sm:$0x3] %vm184, %v818
    %s822 = scalar_lea.vmem %s0, 4
    %v823 = vld [vmem:[%s822] sm:$0x1]
    %v824 = vunpack.c.l.bf16 %v823
    %v825 = vpack.c.bf16 %v720, %v720
    %827 = vrot.lane.b32.xlu0 %v825, 32
    %v828 = vpop.permute.xlu0 %827
    %v830 = vsel %vm93, %v828, 0
    %832 = vmatprep.subr.bf16.mxu0 0
    %833 = vmatpush1.bf16.msra.mxu0 0
    %834 = vmatprep.subr.bf16.mxu0 0
    %835 = vmatpush1.bf16.msra.mxu0 0
    %836 = vmatprep.subr.bf16.mxu0 0
    %837 = vmatpush1.bf16.msra.mxu0 0
    %838 = vmatprep.subr.bf16.mxu0 0
    %839 = vmatpush1.bf16.msra.mxu0 0
    %840 = vmatprep.subr.bf16.mxu0 0
    %841 = vmatpush1.bf16.msra.mxu0 0
    %842 = vmatprep.subr.bf16.mxu0 0
    %843 = vmatpush1.bf16.msra.mxu0 0
    %844 = vmatprep.subr.bf16.mxu0 0
    %845 = vmatpush1.bf16.msra.mxu0 %v90
    %846 = vmatprep.subr.bf16.mxu0 0
    %847 = vmatpush1.bf16.msra.mxu0 %v89
    %848 = vmatprep.subr.bf16.mxu0 0
    %849 = vmatpush2.bf16.msra.mxu0 0
    %850 = vmatprep.subr.bf16.mxu0 0
    %851 = vmatpush2.bf16.msra.mxu0 0
    %852 = vmatprep.subr.bf16.mxu0 0
    %853 = vmatpush2.bf16.msra.mxu0 0
    %854 = vmatprep.subr.bf16.mxu0 0
    %855 = vmatpush2.bf16.msra.mxu0 0
    %856 = vmatprep.subr.bf16.mxu0 0
    %857 = vmatpush2.bf16.msra.mxu0 0
    %858 = vmatprep.subr.bf16.mxu0 0
    %859 = vmatpush2.bf16.msra.mxu0 0
    %860 = vmatprep.subr.bf16.mxu0 0
    %861 = vmatpush2.bf16.msra.mxu0 0
    %862 = vmatprep.subr.bf16.mxu0 0
    %863 = vmatpush2.bf16.msra.mxu0 0
    %864 = vmatprep.mubr.bf16.mxu0 0
    %865 = vmatmul.mubr.bf16.gmra.mxu0 %v830
    %v866 = vpop.f32.mrf.mxu0
    %v867 = vadd.f32 0.0, %v866
    %v868 = vpop.f32.mrf.mxu0
    %v869 = vpop.f32.mrf.mxu0
    %v870 = vpop.f32.mrf.mxu0
    %871 = vdwg.mxu0
    %v872 = vadd.f32 %v824, %v867
    %v873 = vxor.u32 %v872, 2147483648
    %v874 = vmul.f32 %v873, 1.442695
    %v875 = vpow.pop %v874
    %v876 = vadd.f32 %v875, 1.0
    %v877 = vrcp.pop %v876
    %v878 = vmul.f32 1.0, %v877
    %v879 = vtanh.pop %v872
    %v880 = vmul.f32 %v878, %v714
    %882 = vrot.lane.b32.xlu0 %v879, 64
    %v883 = vpop.permute.xlu0 %882
    %v885 = vmul.f32 %v878, %v883
    %887 = vrot.lane.b32.xlu0 %v885, 32
    %v888 = vpop.permute.xlu0 %887
    %v890 = vadd.f32 %v880, %v888
    %v891 = vtanh.pop %v890
    %893 = vrot.lane.b32.xlu0 %v891, 64
    %v894 = vpop.permute.xlu0 %893
    %v896 = vmul.f32 %v878, %v894
    %v899 = vunpack.c.l.s4 1983009808
    %v900 = vunpack.c.0.s8 %v899
    %v901 = vlaneseq
    %v902 = vshrl.u32 %v901, 7
    %v903 = vsub.s32 %v900, %v902
    %v904 = vrot.slane %v896, %v903
    %905 = vrot.lane.b32.xlu0 %v904, 32
    %v906 = vpop.permute.xlu0 %905
    %s908 = scalar_lea.vmem %s3, 8
    %909 = vst.msk [vmem:[%s908] sm:$0x3] %vm184, %v906
    %s910 = scalar_lea.vmem %s42, 3
    %v911 = vld [vmem:[%s910] sm:$0x1]
    %v912 = vunpack.c.l.bf16 %v911
    %v913 = vpack.c.bf16 %v808, %v808
    %915 = vrot.lane.b32.xlu0 %v913, 32
    %v916 = vpop.permute.xlu0 %915
    %v918 = vsel %vm93, %v916, 0
    %920 = vmatprep.subr.bf16.mxu0 0
    %921 = vmatpush1.bf16.msra.mxu0 0
    %922 = vmatprep.subr.bf16.mxu0 0
    %923 = vmatpush1.bf16.msra.mxu0 0
    %924 = vmatprep.subr.bf16.mxu0 0
    %925 = vmatpush1.bf16.msra.mxu0 0
    %926 = vmatprep.subr.bf16.mxu0 0
    %927 = vmatpush1.bf16.msra.mxu0 0
    %928 = vmatprep.subr.bf16.mxu0 0
    %929 = vmatpush1.bf16.msra.mxu0 0
    %930 = vmatprep.subr.bf16.mxu0 0
    %931 = vmatpush1.bf16.msra.mxu0 0
    %932 = vmatprep.subr.bf16.mxu0 0
    %933 = vmatpush1.bf16.msra.mxu0 %v199
    %934 = vmatprep.subr.bf16.mxu0 0
    %935 = vmatpush1.bf16.msra.mxu0 %v198
    %936 = vmatprep.subr.bf16.mxu0 0
    %937 = vmatpush2.bf16.msra.mxu0 0
    %938 = vmatprep.subr.bf16.mxu0 0
    %939 = vmatpush2.bf16.msra.mxu0 0
    %940 = vmatprep.subr.bf16.mxu0 0
    %941 = vmatpush2.bf16.msra.mxu0 0
    %942 = vmatprep.subr.bf16.mxu0 0
    %943 = vmatpush2.bf16.msra.mxu0 0
    %944 = vmatprep.subr.bf16.mxu0 0
    %945 = vmatpush2.bf16.msra.mxu0 0
    %946 = vmatprep.subr.bf16.mxu0 0
    %947 = vmatpush2.bf16.msra.mxu0 0
    %948 = vmatprep.subr.bf16.mxu0 0
    %949 = vmatpush2.bf16.msra.mxu0 0
    %950 = vmatprep.subr.bf16.mxu0 0
    %951 = vmatpush2.bf16.msra.mxu0 0
    %952 = vmatprep.mubr.bf16.mxu0 0
    %953 = vmatmul.mubr.bf16.gmra.mxu0 %v918
    %v954 = vpop.f32.mrf.mxu0
    %v955 = vadd.f32 0.0, %v954
    %v956 = vpop.f32.mrf.mxu0
    %v957 = vpop.f32.mrf.mxu0
    %v958 = vpop.f32.mrf.mxu0
    %959 = vdwg.mxu0
    %v960 = vadd.f32 %v912, %v955
    %v961 = vxor.u32 %v960, 2147483648
    %v962 = vmul.f32 %v961, 1.442695
    %v963 = vpow.pop %v962
    %v964 = vadd.f32 %v963, 1.0
    %v965 = vrcp.pop %v964
    %v966 = vmul.f32 1.0, %v965
    %v967 = vtanh.pop %v960
    %v968 = vmul.f32 %v966, %v802
    %970 = vrot.lane.b32.xlu0 %v967, 64
    %v971 = vpop.permute.xlu0 %970
    %v973 = vmul.f32 %v966, %v971
    %975 = vrot.lane.b32.xlu0 %v973, 32
    %v976 = vpop.permute.xlu0 %975
    %v978 = vadd.f32 %v968, %v976
    %v979 = vtanh.pop %v978
    %981 = vrot.lane.b32.xlu0 %v979, 64
    %v982 = vpop.permute.xlu0 %981
    %v984 = vmul.f32 %v966, %v982
    %v987 = vunpack.c.l.s4 1983009808
    %v988 = vunpack.c.0.s8 %v987
    %v989 = vlaneseq
    %v990 = vshrl.u32 %v989, 7
    %v991 = vsub.s32 %v988, %v990
    %v992 = vrot.slane %v984, %v991
    %993 = vrot.lane.b32.xlu0 %v992, 32
    %v994 = vpop.permute.xlu0 %993
    %s996 = scalar_lea.vmem %s50, 6
    %997 = vst.msk [vmem:[%s996] sm:$0x3] %vm184, %v994
    %s998 = scalar_lea.vmem %s0, 5
    %v999 = vld [vmem:[%s998] sm:$0x1]
    %v1000 = vunpack.c.l.bf16 %v999
    %v1001 = vpack.c.bf16 %v896, %v896
    %1003 = vrot.lane.b32.xlu0 %v1001, 32
    %v1004 = vpop.permute.xlu0 %1003
    %v1006 = vsel %vm93, %v1004, 0
    %1008 = vmatprep.subr.bf16.mxu0 0
    %1009 = vmatpush1.bf16.msra.mxu0 0
    %1010 = vmatprep.subr.bf16.mxu0 0
    %1011 = vmatpush1.bf16.msra.mxu0 0
    %1012 = vmatprep.subr.bf16.mxu0 0
    %1013 = vmatpush1.bf16.msra.mxu0 0
    %1014 = vmatprep.subr.bf16.mxu0 0
    %1015 = vmatpush1.bf16.msra.mxu0 0
    %1016 = vmatprep.subr.bf16.mxu0 0
    %1017 = vmatpush1.bf16.msra.mxu0 0
    %1018 = vmatprep.subr.bf16.mxu0 0
    %1019 = vmatpush1.bf16.msra.mxu0 0
    %1020 = vmatprep.subr.bf16.mxu0 0
    %1021 = vmatpush1.bf16.msra.mxu0 %v90
    %1022 = vmatprep.subr.bf16.mxu0 0
    %1023 = vmatpush1.bf16.msra.mxu0 %v89
    %1024 = vmatprep.subr.bf16.mxu0 0
    %1025 = vmatpush2.bf16.msra.mxu0 0
    %1026 = vmatprep.subr.bf16.mxu0 0
    %1027 = vmatpush2.bf16.msra.mxu0 0
    %1028 = vmatprep.subr.bf16.mxu0 0
    %1029 = vmatpush2.bf16.msra.mxu0 0
    %1030 = vmatprep.subr.bf16.mxu0 0
    %1031 = vmatpush2.bf16.msra.mxu0 0
    %1032 = vmatprep.subr.bf16.mxu0 0
    %1033 = vmatpush2.bf16.msra.mxu0 0
    %1034 = vmatprep.subr.bf16.mxu0 0
    %1035 = vmatpush2.bf16.msra.mxu0 0
    %1036 = vmatprep.subr.bf16.mxu0 0
    %1037 = vmatpush2.bf16.msra.mxu0 0
    %1038 = vmatprep.subr.bf16.mxu0 0
    %1039 = vmatpush2.bf16.msra.mxu0 0
    %1040 = vmatprep.mubr.bf16.mxu0 0
    %1041 = vmatmul.mubr.bf16.gmra.mxu0 %v1006
    %v1042 = vpop.f32.mrf.mxu0
    %v1043 = vadd.f32 0.0, %v1042
    %v1044 = vpop.f32.mrf.mxu0
    %v1045 = vpop.f32.mrf.mxu0
    %v1046 = vpop.f32.mrf.mxu0
    %1047 = vdwg.mxu0
    %v1048 = vadd.f32 %v1000, %v1043
    %v1049 = vxor.u32 %v1048, 2147483648
    %v1050 = vmul.f32 %v1049, 1.442695
    %v1051 = vpow.pop %v1050
    %v1052 = vadd.f32 %v1051, 1.0
    %v1053 = vrcp.pop %v1052
    %v1054 = vmul.f32 1.0, %v1053
    %v1055 = vtanh.pop %v1048
    %v1056 = vmul.f32 %v1054, %v890
    %1058 = vrot.lane.b32.xlu0 %v1055, 64
    %v1059 = vpop.permute.xlu0 %1058
    %v1061 = vmul.f32 %v1054, %v1059
    %1063 = vrot.lane.b32.xlu0 %v1061, 32
    %v1064 = vpop.permute.xlu0 %1063
    %v1066 = vadd.f32 %v1056, %v1064
    %v1067 = vtanh.pop %v1066
    %1069 = vrot.lane.b32.xlu0 %v1067, 64
    %v1070 = vpop.permute.xlu0 %1069
    %v1072 = vmul.f32 %v1054, %v1070
    %v1075 = vunpack.c.l.s4 1983009808
    %v1076 = vunpack.c.0.s8 %v1075
    %v1077 = vlaneseq
    %v1078 = vshrl.u32 %v1077, 7
    %v1079 = vsub.s32 %v1076, %v1078
    %v1080 = vrot.slane %v1072, %v1079
    %1081 = vrot.lane.b32.xlu0 %v1080, 32
    %v1082 = vpop.permute.xlu0 %1081
    %s1084 = scalar_lea.vmem %s3, 10
    %1085 = vst.msk [vmem:[%s1084] sm:$0x3] %vm184, %v1082
    %s1086 = scalar_lea.vmem %s42, 2
    %v1087 = vld [vmem:[%s1086] sm:$0x1]
    %v1088 = vunpack.c.l.bf16 %v1087
    %v1089 = vpack.c.bf16 %v984, %v984
    %1091 = vrot.lane.b32.xlu0 %v1089, 32
    %v1092 = vpop.permute.xlu0 %1091
    %v1094 = vsel %vm93, %v1092, 0
    %1096 = vmatprep.subr.bf16.mxu0 0
    %1097 = vmatpush1.bf16.msra.mxu0 0
    %1098 = vmatprep.subr.bf16.mxu0 0
    %1099 = vmatpush1.bf16.msra.mxu0 0
    %1100 = vmatprep.subr.bf16.mxu0 0
    %1101 = vmatpush1.bf16.msra.mxu0 0
    %1102 = vmatprep.subr.bf16.mxu0 0
    %1103 = vmatpush1.bf16.msra.mxu0 0
    %1104 = vmatprep.subr.bf16.mxu0 0
    %1105 = vmatpush1.bf16.msra.mxu0 0
    %1106 = vmatprep.subr.bf16.mxu0 0
    %1107 = vmatpush1.bf16.msra.mxu0 0
    %1108 = vmatprep.subr.bf16.mxu0 0
    %1109 = vmatpush1.bf16.msra.mxu0 %v199
    %1110 = vmatprep.subr.bf16.mxu0 0
    %1111 = vmatpush1.bf16.msra.mxu0 %v198
    %1112 = vmatprep.subr.bf16.mxu0 0
    %1113 = vmatpush2.bf16.msra.mxu0 0
    %1114 = vmatprep.subr.bf16.mxu0 0
    %1115 = vmatpush2.bf16.msra.mxu0 0
    %1116 = vmatprep.subr.bf16.mxu0 0
    %1117 = vmatpush2.bf16.msra.mxu0 0
    %1118 = vmatprep.subr.bf16.mxu0 0
    %1119 = vmatpush2.bf16.msra.mxu0 0
    %1120 = vmatprep.subr.bf16.mxu0 0
    %1121 = vmatpush2.bf16.msra.mxu0 0
    %1122 = vmatprep.subr.bf16.mxu0 0
    %1123 = vmatpush2.bf16.msra.mxu0 0
    %1124 = vmatprep.subr.bf16.mxu0 0
    %1125 = vmatpush2.bf16.msra.mxu0 0
    %1126 = vmatprep.subr.bf16.mxu0 0
    %1127 = vmatpush2.bf16.msra.mxu0 0
    %1128 = vmatprep.mubr.bf16.mxu0 0
    %1129 = vmatmul.mubr.bf16.gmra.mxu0 %v1094
    %v1130 = vpop.f32.mrf.mxu0
    %v1131 = vadd.f32 0.0, %v1130
    %v1132 = vpop.f32.mrf.mxu0
    %v1133 = vpop.f32.mrf.mxu0
    %v1134 = vpop.f32.mrf.mxu0
    %1135 = vdwg.mxu0
    %v1136 = vadd.f32 %v1088, %v1131
    %v1137 = vxor.u32 %v1136, 2147483648
    %v1138 = vmul.f32 %v1137, 1.442695
    %v1139 = vpow.pop %v1138
    %v1140 = vadd.f32 %v1139, 1.0
    %v1141 = vrcp.pop %v1140
    %v1142 = vmul.f32 1.0, %v1141
    %v1143 = vtanh.pop %v1136
    %v1144 = vmul.f32 %v1142, %v978
    %1146 = vrot.lane.b32.xlu0 %v1143, 64
    %v1147 = vpop.permute.xlu0 %1146
    %v1149 = vmul.f32 %v1142, %v1147
    %1151 = vrot.lane.b32.xlu0 %v1149, 32
    %v1152 = vpop.permute.xlu0 %1151
    %v1154 = vadd.f32 %v1144, %v1152
    %v1155 = vtanh.pop %v1154
    %1157 = vrot.lane.b32.xlu0 %v1155, 64
    %v1158 = vpop.permute.xlu0 %1157
    %v1160 = vmul.f32 %v1142, %v1158
    %v1163 = vunpack.c.l.s4 1983009808
    %v1164 = vunpack.c.0.s8 %v1163
    %v1165 = vlaneseq
    %v1166 = vshrl.u32 %v1165, 7
    %v1167 = vsub.s32 %v1164, %v1166
    %v1168 = vrot.slane %v1160, %v1167
    %1169 = vrot.lane.b32.xlu0 %v1168, 32
    %v1170 = vpop.permute.xlu0 %1169
    %s1172 = scalar_lea.vmem %s50, 4
    %1173 = vst.msk [vmem:[%s1172] sm:$0x3] %vm184, %v1170
    %s1174 = scalar_lea.vmem %s0, 6
    %v1175 = vld [vmem:[%s1174] sm:$0x1]
    %v1176 = vunpack.c.l.bf16 %v1175
    %v1177 = vpack.c.bf16 %v1072, %v1072
    %1179 = vrot.lane.b32.xlu0 %v1177, 32
    %v1180 = vpop.permute.xlu0 %1179
    %v1182 = vsel %vm93, %v1180, 0
    %1184 = vmatprep.subr.bf16.mxu0 0
    %1185 = vmatpush1.bf16.msra.mxu0 0
    %1186 = vmatprep.subr.bf16.mxu0 0
    %1187 = vmatpush1.bf16.msra.mxu0 0
    %1188 = vmatprep.subr.bf16.mxu0 0
    %1189 = vmatpush1.bf16.msra.mxu0 0
    %1190 = vmatprep.subr.bf16.mxu0 0
    %1191 = vmatpush1.bf16.msra.mxu0 0
    %1192 = vmatprep.subr.bf16.mxu0 0
    %1193 = vmatpush1.bf16.msra.mxu0 0
    %1194 = vmatprep.subr.bf16.mxu0 0
    %1195 = vmatpush1.bf16.msra.mxu0 0
    %1196 = vmatprep.subr.bf16.mxu0 0
    %1197 = vmatpush1.bf16.msra.mxu0 %v90
    %1198 = vmatprep.subr.bf16.mxu0 0
    %1199 = vmatpush1.bf16.msra.mxu0 %v89
    %1200 = vmatprep.subr.bf16.mxu0 0
    %1201 = vmatpush2.bf16.msra.mxu0 0
    %1202 = vmatprep.subr.bf16.mxu0 0
    %1203 = vmatpush2.bf16.msra.mxu0 0
    %1204 = vmatprep.subr.bf16.mxu0 0
    %1205 = vmatpush2.bf16.msra.mxu0 0
    %1206 = vmatprep.subr.bf16.mxu0 0
    %1207 = vmatpush2.bf16.msra.mxu0 0
    %1208 = vmatprep.subr.bf16.mxu0 0
    %1209 = vmatpush2.bf16.msra.mxu0 0
    %1210 = vmatprep.subr.bf16.mxu0 0
    %1211 = vmatpush2.bf16.msra.mxu0 0
    %1212 = vmatprep.subr.bf16.mxu0 0
    %1213 = vmatpush2.bf16.msra.mxu0 0
    %1214 = vmatprep.subr.bf16.mxu0 0
    %1215 = vmatpush2.bf16.msra.mxu0 0
    %1216 = vmatprep.mubr.bf16.mxu0 0
    %1217 = vmatmul.mubr.bf16.gmra.mxu0 %v1182
    %v1218 = vpop.f32.mrf.mxu0
    %v1219 = vadd.f32 0.0, %v1218
    %v1220 = vpop.f32.mrf.mxu0
    %v1221 = vpop.f32.mrf.mxu0
    %v1222 = vpop.f32.mrf.mxu0
    %1223 = vdwg.mxu0
    %v1224 = vadd.f32 %v1176, %v1219
    %v1225 = vxor.u32 %v1224, 2147483648
    %v1226 = vmul.f32 %v1225, 1.442695
    %v1227 = vpow.pop %v1226
    %v1228 = vadd.f32 %v1227, 1.0
    %v1229 = vrcp.pop %v1228
    %v1230 = vmul.f32 1.0, %v1229
    %v1231 = vtanh.pop %v1224
    %v1232 = vmul.f32 %v1230, %v1066
    %1234 = vrot.lane.b32.xlu0 %v1231, 64
    %v1235 = vpop.permute.xlu0 %1234
    %v1237 = vmul.f32 %v1230, %v1235
    %1239 = vrot.lane.b32.xlu0 %v1237, 32
    %v1240 = vpop.permute.xlu0 %1239
    %v1242 = vadd.f32 %v1232, %v1240
    %v1243 = vtanh.pop %v1242
    %1245 = vrot.lane.b32.xlu0 %v1243, 64
    %v1246 = vpop.permute.xlu0 %1245
    %v1248 = vmul.f32 %v1230, %v1246
    %v1251 = vunpack.c.l.s4 1983009808
    %v1252 = vunpack.c.0.s8 %v1251
    %v1253 = vlaneseq
    %v1254 = vshrl.u32 %v1253, 7
    %v1255 = vsub.s32 %v1252, %v1254
    %v1256 = vrot.slane %v1248, %v1255
    %1257 = vrot.lane.b32.xlu0 %v1256, 32
    %v1258 = vpop.permute.xlu0 %1257
    %s1260 = scalar_lea.vmem %s3, 12
    %1261 = vst.msk [vmem:[%s1260] sm:$0x3] %vm184, %v1258
    %s1262 = scalar_lea.vmem %s42, 1
    %v1263 = vld [vmem:[%s1262] sm:$0x1]
    %v1264 = vunpack.c.l.bf16 %v1263
    %v1265 = vpack.c.bf16 %v1160, %v1160
    %1267 = vrot.lane.b32.xlu0 %v1265, 32
    %v1268 = vpop.permute.xlu0 %1267
    %v1270 = vsel %vm93, %v1268, 0
    %1272 = vmatprep.subr.bf16.mxu0 0
    %1273 = vmatpush1.bf16.msra.mxu0 0
    %1274 = vmatprep.subr.bf16.mxu0 0
    %1275 = vmatpush1.bf16.msra.mxu0 0
    %1276 = vmatprep.subr.bf16.mxu0 0
    %1277 = vmatpush1.bf16.msra.mxu0 0
    %1278 = vmatprep.subr.bf16.mxu0 0
    %1279 = vmatpush1.bf16.msra.mxu0 0
    %1280 = vmatprep.subr.bf16.mxu0 0
    %1281 = vmatpush1.bf16.msra.mxu0 0
    %1282 = vmatprep.subr.bf16.mxu0 0
    %1283 = vmatpush1.bf16.msra.mxu0 0
    %1284 = vmatprep.subr.bf16.mxu0 0
    %1285 = vmatpush1.bf16.msra.mxu0 %v199
    %1286 = vmatprep.subr.bf16.mxu0 0
    %1287 = vmatpush1.bf16.msra.mxu0 %v198
    %1288 = vmatprep.subr.bf16.mxu0 0
    %1289 = vmatpush2.bf16.msra.mxu0 0
    %1290 = vmatprep.subr.bf16.mxu0 0
    %1291 = vmatpush2.bf16.msra.mxu0 0
    %1292 = vmatprep.subr.bf16.mxu0 0
    %1293 = vmatpush2.bf16.msra.mxu0 0
    %1294 = vmatprep.subr.bf16.mxu0 0
    %1295 = vmatpush2.bf16.msra.mxu0 0
    %1296 = vmatprep.subr.bf16.mxu0 0
    %1297 = vmatpush2.bf16.msra.mxu0 0
    %1298 = vmatprep.subr.bf16.mxu0 0
    %1299 = vmatpush2.bf16.msra.mxu0 0
    %1300 = vmatprep.subr.bf16.mxu0 0
    %1301 = vmatpush2.bf16.msra.mxu0 0
    %1302 = vmatprep.subr.bf16.mxu0 0
    %1303 = vmatpush2.bf16.msra.mxu0 0
    %1304 = vmatprep.mubr.bf16.mxu0 0
    %1305 = vmatmul.mubr.bf16.gmra.mxu0 %v1270
    %v1306 = vpop.f32.mrf.mxu0
    %v1307 = vadd.f32 0.0, %v1306
    %v1308 = vpop.f32.mrf.mxu0
    %v1309 = vpop.f32.mrf.mxu0
    %v1310 = vpop.f32.mrf.mxu0
    %1311 = vdwg.mxu0
    %v1312 = vadd.f32 %v1264, %v1307
    %v1313 = vxor.u32 %v1312, 2147483648
    %v1314 = vmul.f32 %v1313, 1.442695
    %v1315 = vpow.pop %v1314
    %v1316 = vadd.f32 %v1315, 1.0
    %v1317 = vrcp.pop %v1316
    %v1318 = vmul.f32 1.0, %v1317
    %v1319 = vtanh.pop %v1312
    %v1320 = vmul.f32 %v1318, %v1154
    %1322 = vrot.lane.b32.xlu0 %v1319, 64
    %v1323 = vpop.permute.xlu0 %1322
    %v1325 = vmul.f32 %v1318, %v1323
    %1327 = vrot.lane.b32.xlu0 %v1325, 32
    %v1328 = vpop.permute.xlu0 %1327
    %v1330 = vadd.f32 %v1320, %v1328
    %v1331 = vtanh.pop %v1330
    %1333 = vrot.lane.b32.xlu0 %v1331, 64
    %v1334 = vpop.permute.xlu0 %1333
    %v1336 = vmul.f32 %v1318, %v1334
    %v1339 = vunpack.c.l.s4 1983009808
    %v1340 = vunpack.c.0.s8 %v1339
    %v1341 = vlaneseq
    %v1342 = vshrl.u32 %v1341, 7
    %v1343 = vsub.s32 %v1340, %v1342
    %v1344 = vrot.slane %v1336, %v1343
    %1345 = vrot.lane.b32.xlu0 %v1344, 32
    %v1346 = vpop.permute.xlu0 %1345
    %s1348 = scalar_lea.vmem %s50, 2
    %1349 = vst.msk [vmem:[%s1348] sm:$0x3] %vm184, %v1346
    %s1350 = scalar_lea.vmem %s0, 7
    %v1351 = vld [vmem:[%s1350] sm:$0x1]
    %v1352 = vunpack.c.l.bf16 %v1351
    %v1353 = vpack.c.bf16 %v1248, %v1248
    %1355 = vrot.lane.b32.xlu0 %v1353, 32
    %v1356 = vpop.permute.xlu0 %1355
    %v1358 = vsel %vm93, %v1356, 0
    %1360 = vmatprep.subr.bf16.mxu0 0
    %1361 = vmatpush1.bf16.msra.mxu0 0
    %1362 = vmatprep.subr.bf16.mxu0 0
    %1363 = vmatpush1.bf16.msra.mxu0 0
    %1364 = vmatprep.subr.bf16.mxu0 0
    %1365 = vmatpush1.bf16.msra.mxu0 0
    %1366 = vmatprep.subr.bf16.mxu0 0
    %1367 = vmatpush1.bf16.msra.mxu0 0
    %1368 = vmatprep.subr.bf16.mxu0 0
    %1369 = vmatpush1.bf16.msra.mxu0 0
    %1370 = vmatprep.subr.bf16.mxu0 0
    %1371 = vmatpush1.bf16.msra.mxu0 0
    %1372 = vmatprep.subr.bf16.mxu0 0
    %1373 = vmatpush1.bf16.msra.mxu0 %v90
    %1374 = vmatprep.subr.bf16.mxu0 0
    %1375 = vmatpush1.bf16.msra.mxu0 %v89
    %1376 = vmatprep.subr.bf16.mxu0 0
    %1377 = vmatpush2.bf16.msra.mxu0 0
    %1378 = vmatprep.subr.bf16.mxu0 0
    %1379 = vmatpush2.bf16.msra.mxu0 0
    %1380 = vmatprep.subr.bf16.mxu0 0
    %1381 = vmatpush2.bf16.msra.mxu0 0
    %1382 = vmatprep.subr.bf16.mxu0 0
    %1383 = vmatpush2.bf16.msra.mxu0 0
    %1384 = vmatprep.subr.bf16.mxu0 0
    %1385 = vmatpush2.bf16.msra.mxu0 0
    %1386 = vmatprep.subr.bf16.mxu0 0
    %1387 = vmatpush2.bf16.msra.mxu0 0
    %1388 = vmatprep.subr.bf16.mxu0 0
    %1389 = vmatpush2.bf16.msra.mxu0 0
    %1390 = vmatprep.subr.bf16.mxu0 0
    %1391 = vmatpush2.bf16.msra.mxu0 0
    %1392 = vmatprep.mubr.bf16.mxu0 0
    %1393 = vmatmul.mubr.bf16.gmra.mxu0 %v1358
    %v1394 = vpop.f32.mrf.mxu0
    %v1395 = vadd.f32 0.0, %v1394
    %v1396 = vpop.f32.mrf.mxu0
    %v1397 = vpop.f32.mrf.mxu0
    %v1398 = vpop.f32.mrf.mxu0
    %1399 = vdwg.mxu0
    %v1400 = vadd.f32 %v1352, %v1395
    %v1401 = vxor.u32 %v1400, 2147483648
    %v1402 = vmul.f32 %v1401, 1.442695
    %v1403 = vpow.pop %v1402
    %v1404 = vadd.f32 %v1403, 1.0
    %v1405 = vrcp.pop %v1404
    %v1406 = vmul.f32 1.0, %v1405
    %v1407 = vtanh.pop %v1400
    %v1408 = vmul.f32 %v1406, %v1242
    %1410 = vrot.lane.b32.xlu0 %v1407, 64
    %v1411 = vpop.permute.xlu0 %1410
    %v1413 = vmul.f32 %v1406, %v1411
    %1415 = vrot.lane.b32.xlu0 %v1413, 32
    %v1416 = vpop.permute.xlu0 %1415
    %v1418 = vadd.f32 %v1408, %v1416
    %v1419 = vtanh.pop %v1418
    %1421 = vrot.lane.b32.xlu0 %v1419, 64
    %v1422 = vpop.permute.xlu0 %1421
    %v1424 = vmul.f32 %v1406, %v1422
    %v1427 = vunpack.c.l.s4 1983009808
    %v1428 = vunpack.c.0.s8 %v1427
    %v1429 = vlaneseq
    %v1430 = vshrl.u32 %v1429, 7
    %v1431 = vsub.s32 %v1428, %v1430
    %v1432 = vrot.slane %v1424, %v1431
    %1433 = vrot.lane.b32.xlu0 %v1432, 32
    %v1434 = vpop.permute.xlu0 %1433
    %s1436 = scalar_lea.vmem %s3, 14
    %1437 = vst.msk [vmem:[%s1436] sm:$0x3] %vm184, %v1434
    %v1438 = vld [vmem:[%s42] sm:$0x1]
    %v1439 = vunpack.c.l.bf16 %v1438
    %v1440 = vpack.c.bf16 %v1336, %v1336
    %1442 = vrot.lane.b32.xlu0 %v1440, 32
    %v1443 = vpop.permute.xlu0 %1442
    %v1445 = vsel %vm93, %v1443, 0
    %1447 = vmatprep.subr.bf16.mxu0 0
    %1448 = vmatpush1.bf16.msra.mxu0 0
    %1449 = vmatprep.subr.bf16.mxu0 0
    %1450 = vmatpush1.bf16.msra.mxu0 0
    %1451 = vmatprep.subr.bf16.mxu0 0
    %1452 = vmatpush1.bf16.msra.mxu0 0
    %1453 = vmatprep.subr.bf16.mxu0 0
    %1454 = vmatpush1.bf16.msra.mxu0 0
    %1455 = vmatprep.subr.bf16.mxu0 0
    %1456 = vmatpush1.bf16.msra.mxu0 0
    %1457 = vmatprep.subr.bf16.mxu0 0
    %1458 = vmatpush1.bf16.msra.mxu0 0
    %1459 = vmatprep.subr.bf16.mxu0 0
    %1460 = vmatpush1.bf16.msra.mxu0 %v199
    %1461 = vmatprep.subr.bf16.mxu0 0
    %1462 = vmatpush1.bf16.msra.mxu0 %v198
    %1463 = vmatprep.subr.bf16.mxu0 0
    %1464 = vmatpush2.bf16.msra.mxu0 0
    %1465 = vmatprep.subr.bf16.mxu0 0
    %1466 = vmatpush2.bf16.msra.mxu0 0
    %1467 = vmatprep.subr.bf16.mxu0 0
    %1468 = vmatpush2.bf16.msra.mxu0 0
    %1469 = vmatprep.subr.bf16.mxu0 0
    %1470 = vmatpush2.bf16.msra.mxu0 0
    %1471 = vmatprep.subr.bf16.mxu0 0
    %1472 = vmatpush2.bf16.msra.mxu0 0
    %1473 = vmatprep.subr.bf16.mxu0 0
    %1474 = vmatpush2.bf16.msra.mxu0 0
    %1475 = vmatprep.subr.bf16.mxu0 0
    %1476 = vmatpush2.bf16.msra.mxu0 0
    %1477 = vmatprep.subr.bf16.mxu0 0
    %1478 = vmatpush2.bf16.msra.mxu0 0
    %1479 = vmatprep.mubr.bf16.mxu0 0
    %1480 = vmatmul.mubr.bf16.gmra.mxu0 %v1445
    %v1481 = vpop.f32.mrf.mxu0
    %v1482 = vadd.f32 0.0, %v1481
    %v1483 = vpop.f32.mrf.mxu0
    %v1484 = vpop.f32.mrf.mxu0
    %v1485 = vpop.f32.mrf.mxu0
    %1486 = vdwg.mxu0
    %v1487 = vadd.f32 %v1439, %v1482
    %v1488 = vxor.u32 %v1487, 2147483648
    %v1489 = vmul.f32 %v1488, 1.442695
    %v1490 = vpow.pop %v1489
    %v1491 = vadd.f32 %v1490, 1.0
    %v1492 = vrcp.pop %v1491
    %v1493 = vmul.f32 1.0, %v1492
    %v1494 = vtanh.pop %v1487
    %v1495 = vmul.f32 %v1493, %v1330
    %1497 = vrot.lane.b32.xlu0 %v1494, 64
    %v1498 = vpop.permute.xlu0 %1497
    %v1500 = vmul.f32 %v1493, %v1498
    %1502 = vrot.lane.b32.xlu0 %v1500, 32
    %v1503 = vpop.permute.xlu0 %1502
    %v1505 = vadd.f32 %v1495, %v1503
    %v1506 = vtanh.pop %v1505
    %1508 = vrot.lane.b32.xlu0 %v1506, 64
    %v1509 = vpop.permute.xlu0 %1508
    %v1511 = vmul.f32 %v1493, %v1509
    %v1514 = vunpack.c.l.s4 1983009808
    %v1515 = vunpack.c.0.s8 %v1514
    %v1516 = vlaneseq
    %v1517 = vshrl.u32 %v1516, 7
    %v1518 = vsub.s32 %v1515, %v1517
    %v1519 = vrot.slane %v1511, %v1518
    %1520 = vrot.lane.b32.xlu0 %v1519, 32
    %v1521 = vpop.permute.xlu0 %1520
    %1523 = vst.msk [vmem:[%s50] sm:$0x3] %vm184, %v1521
    %1524 = vst.msk [vmem:[#allocation2] sm:$0x3] %vm184, %v1434
    %1525 = vst.msk [vmem:[%s74] sm:$0x3] %vm184, %v1521
    %v1528 = vunpack.c.l.s4 1983009808
    %v1529 = vunpack.c.0.s8 %v1528
    %v1530 = vlaneseq
    %v1531 = vshrl.u32 %v1530, 7
    %v1532 = vsub.s32 %v1529, %v1531
    %v1533 = vrot.slane %v1418, %v1532
    %1534 = vrot.lane.b32.xlu0 %v1533, 96
    %v1535 = vpop.permute.xlu0 %1534
    %1537 = vst.msk [vmem:[#allocation3] sm:$0x3] %vm184, %v1535
    %v1540 = vunpack.c.l.s4 1983009808
    %v1541 = vunpack.c.0.s8 %v1540
    %v1542 = vlaneseq
    %v1543 = vshrl.u32 %v1542, 7
    %v1544 = vsub.s32 %v1541, %v1543
    %v1545 = vrot.slane %v1505, %v1544
    %1546 = vrot.lane.b32.xlu0 %v1545, 96
    %v1547 = vpop.permute.xlu0 %1546
    %1549 = vst.msk [vmem:[%s76] sm:$0x3] %vm184, %v1547
    // Predicated region
    $region18: #{encoder_vanilla_forward.1} parent=1 // pred_check
      %p1550 = pneg %p54
    $region19: #{encoder_vanilla_forward.1} parent=1 // pred_check_branch
      %1552 = sbr.rel (%p1550) target = $region21
    $region20: #{encoder_vanilla_forward.1} parent=1 // pred_region
      %1553 = vst.msk [vmem:[#allocation4] sm:$0x3] %vm184, %v1434
      %s1554 = scalar_lea.vmem [#allocation4], 2
      %1555 = vst.msk [vmem:[%s1554] sm:$0x3] %vm184, %v1521
      %1556 = vst.msk [vmem:[#allocation6] sm:$0x3] %vm184, %v1535
      %s1557 = scalar_lea.vmem [#allocation6], 2
      %1558 = vst.msk [vmem:[%s1557] sm:$0x3] %vm184, %v1547
    $region21: #{encoder_vanilla_forward.1} parent=1 // pred_fallthru
      _
    %s1559 = ssub.s32 0, 0
    %s1560 = smul.u32 8, %s1559
    %p1561 = scmp.lt.s32.totalorder %s1560, 7
    %s1562 = scalar_select %p1561, %s1560, 7
    %s1563 = smul.addr %s1562, 2
    %s1564 = scalar_lea.vmem %s4, %s1563
    // Predicated region
    $region22: #{encoder_vanilla_forward.1} parent=1 // pred_check
      _
    $region23: #{encoder_vanilla_forward.1} parent=1 // pred_check_branch
      %1566 = sbr.rel (0) target = $region25
    $region24: #{encoder_vanilla_forward.1} parent=1 // pred_region
      _
    $region25: #{encoder_vanilla_forward.1} parent=1 // pred_fallthru
      _
    // Predicated region
    $region26: #{encoder_vanilla_forward.1} parent=1 // pred_check
      _
    $region27: #{encoder_vanilla_forward.1} parent=1 // pred_check_branch
      %1568 = sbr.rel (0) target = $region29
    $region28: #{encoder_vanilla_forward.1} parent=1 // pred_region
      %s1569 = ssub.s32 0, 0
      %s1570 = smul.u32 8, %s1569
    $region29: #{encoder_vanilla_forward.1} parent=1 // pred_fallthru
      _
    // Predicated region
    $region30: #{encoder_vanilla_forward.1} parent=1 // pred_check
      _
    $region31: #{encoder_vanilla_forward.1} parent=1 // pred_check_branch
      %1572 = sbr.rel (0) target = $region33
    $region32: #{encoder_vanilla_forward.1} parent=1 // pred_region
      %s1574 = ssub.s32 64, 64
      %1575 = vsyncadd [#allocation5], %s1574
      %s1576 = sshll.u32 [#allocation4], 4
      %s1577 = int_to_ptr.vmem [resolvable:$true] %s1576
      %1582 = dma.vmem_to_hbm [thread:$0]  %s1577, 64, %s5, [#allocation5], 32, 32, 2
    $region33: #{encoder_vanilla_forward.1} parent=1 // pred_fallthru
      _
    // Predicated region
    $region34: #{encoder_vanilla_forward.1} parent=1 // pred_check
      _
    $region35: #{encoder_vanilla_forward.1} parent=1 // pred_check_branch
      %1584 = sbr.rel (0) target = $region37
    $region36: #{encoder_vanilla_forward.1} parent=1 // pred_region
      %s1586 = ssub.s32 64, 64
      %1587 = vsyncadd [#allocation7], %s1586
      %s1588 = sshll.u32 [#allocation6], 4
      %s1589 = int_to_ptr.vmem [resolvable:$true] %s1588
      %1594 = dma.vmem_to_hbm [thread:$0]  %s1589, 64, %s6, [#allocation7], 32, 32, 2
    $region37: #{encoder_vanilla_forward.1} parent=1 // pred_fallthru
      _
    // Predicated region
    $region38: #{encoder_vanilla_forward.1} parent=1 // pred_check
      _
    $region39: #{encoder_vanilla_forward.1} parent=1 // pred_check_branch
      %1596 = sbr.rel (0) target = $region41
    $region40: #{encoder_vanilla_forward.1} parent=1 // pred_region
      _
    $region41: #{encoder_vanilla_forward.1} parent=1 // pred_fallthru
      _
    // Predicated region
    $region42: #{encoder_vanilla_forward.1} parent=1 // pred_check
      _
    $region43: #{encoder_vanilla_forward.1} parent=1 // pred_check_branch
      %1598 = sbr.rel (0) target = $region45
    $region44: #{encoder_vanilla_forward.1} parent=1 // pred_region
      %s1599 = ssub.s32 0, 0
      %s1600 = smul.u32 8, %s1599
      %p1601 = scmp.lt.s32.totalorder %s1600, 7
      %s1602 = scalar_select %p1601, %s1600, 7
      %s1603 = smul.addr %s1602, 2
      %s1604 = scalar_lea.vmem %s4, %s1603
    $region45: #{encoder_vanilla_forward.1} parent=1 // pred_fallthru
      _
    // Predicated region
    $region46: #{encoder_vanilla_forward.1} parent=1 // pred_check
      _
    $region47: #{encoder_vanilla_forward.1} parent=1 // pred_check_branch
      %1606 = sbr.rel (0) target = $region49
    $region48: #{encoder_vanilla_forward.1} parent=1 // pred_region
      %1607 = dma.done [#allocation5], 64
    $region49: #{encoder_vanilla_forward.1} parent=1 // pred_fallthru
      _
    // Predicated region
    $region50: #{encoder_vanilla_forward.1} parent=1 // pred_check
      _
    $region51: #{encoder_vanilla_forward.1} parent=1 // pred_check_branch
      %1609 = sbr.rel (0) target = $region53
    $region52: #{encoder_vanilla_forward.1} parent=1 // pred_region
      %1610 = dma.done [#allocation7], 64
    $region53: #{encoder_vanilla_forward.1} parent=1 // pred_fallthru
      _
    %1611 = vsyncpa [#allocation5], 1
    %1612 = vsyncpa [#allocation7], 1

// kernel: encoder_vanilla_forward.1
$region0: #{encoder_vanilla_forward.1}
  #allocation0 [shape = 'u32[]', space=smem, size = 0x4, offset = 0x4, fixed_abs, tag = 'smem constant byte address 0x4 - core index']
  #allocation1 [shape = 'u32[144,128]{1,0:T(1,128)}', space=vmem, size = 0x12000, scoped, tag = 'internal scratch']
  #allocation2 [shape = 'f32[2,2,32]{2,1,0:T(2,128)}', space=vmem, size = 0x800, scoped, tag = 'scratch operand']
  #allocation3 [shape = 'f32[2,2,32]{2,1,0:T(2,128)}', space=vmem, size = 0x800, scoped, tag = 'scratch operand']
  %s0 = inlined_call_operand.vmem [shape: bf16[8,2,128], index: 0, kind: input, shape index: {}]
  %s1 = inlined_call_operand.vmem [shape: bf16[8,2,128], index: 1, kind: input, shape index: {}]
  %s2 = inlined_call_operand.vmem [shape: bf16[2,32,128], index: 2, kind: input, shape index: {}]
  %s3 = inlined_call_operand.vmem [shape: f32[8,2,32], index: 3, kind: output, shape index: {0}]
  %s4 = inlined_call_operand.vmem [shape: f32[8,2,32], index: 4, kind: output, shape index: {1}]
  %s5 = inlined_call_operand.hbm [shape: f32[2,2,32], index: 5, kind: output, shape index: {2}]
  %s6 = inlined_call_operand.hbm [shape: f32[2,2,32], index: 6, kind: output, shape index: {3}]
  %7 = xla_tuple %s3, %s4, %s5, %s6
  %s8 = sld [smem:[#allocation0]]
  $region54: #{encoder_vanilla_forward.1} parent=0
    _
  %s10 = ssub.s32 1, %s8
  %s11 = scalar_select 0, %s10, %s8
  $region1: #{encoder_vanilla_forward.1} parent=0
    #allocation4 [shape = 'u8[2048]{0}', space=vmem, size = 0x800, scoped, tag = 'output window, operand 2, single buffered']
    #allocation5 [shape = 's32[1]{0}', space=sflag, size = 0x4, scoped, tag = 'scoped memory for encoder_vanilla_forward.1']
    #allocation6 [shape = 'u8[2048]{0}', space=vmem, size = 0x800, scoped, tag = 'output window, operand 3, single buffered']
    #allocation7 [shape = 's32[1]{0}', space=sflag, size = 0x4, scoped, tag = 'scoped memory for encoder_vanilla_forward.1']
    %12 = vsyncpa [#allocation5], 0
    %13 = vsyncpa [#allocation7], 0
    // Predicated region
    $region2: #{encoder_vanilla_forward.1} parent=1 // pred_check
      _
    $region3: #{encoder_vanilla_forward.1} parent=1 // pred_check_branch
      %15 = sbr.rel (0) target = $region5
    $region4: #{encoder_vanilla_forward.1} parent=1 // pred_region
      _
    $region5: #{encoder_vanilla_forward.1} parent=1 // pred_fallthru
      _
    // Predicated region
    $region6: #{encoder_vanilla_forward.1} parent=1 // pred_check
      _
    $region7: #{encoder_vanilla_forward.1} parent=1 // pred_check_branch
      %17 = sbr.rel (0) target = $region9
    $region8: #{encoder_vanilla_forward.1} parent=1 // pred_region
      %s18 = ssub.s32 0, 0
      %s19 = smul.u32 8, %s18
      %p20 = scmp.lt.s32.totalorder %s19, 7
      %s21 = scalar_select %p20, %s19, 7
      %s22 = scalar_lea.vmem %s1, %s21
      %s23 = ssub.s32 0, 0
      %s24 = smul.u32 8, %s23
    $region9: #{encoder_vanilla_forward.1} parent=1 // pred_fallthru
      _
    // Predicated region
    $region10: #{encoder_vanilla_forward.1} parent=1 // pred_check
      _
    $region11: #{encoder_vanilla_forward.1} parent=1 // pred_check_branch
      %26 = sbr.rel (0) target = $region13
    $region12: #{encoder_vanilla_forward.1} parent=1 // pred_region
      _
    $region13: #{encoder_vanilla_forward.1} parent=1 // pred_fallthru
      _
    %s27 = ssub.s32 0, 0
    %s28 = smul.u32 8, %s27
    %p29 = scmp.lt.s32.totalorder %s28, 7
    %s30 = scalar_select %p29, %s28, 7
    %s31 = scalar_lea.vmem %s1, %s30
    %s32 = ssub.s32 0, 0
    %s33 = smul.u32 8, %s32
    %p34 = scmp.lt.s32.totalorder %s33, 7
    %s35 = scalar_select %p34, %s33, 7
    %s36 = smul.addr %s35, 2
    %s37 = scalar_lea.vmem %s4, %s36
    %s38 = ssub.s32 0, 0
    %s39 = smul.u32 8, %s38
    %p40 = scmp.lt.s32.totalorder %s39, 7
    %s41 = scalar_select %p40, %s39, 7
    %s42 = scalar_lea.vmem %s1, %s41
    %s43 = ssub.s32 0, 0
    %s44 = smul.u32 8, %s43
    %s45 = ssub.s32 0, 0
    %s46 = smul.u32 8, %s45
    %p47 = scmp.lt.s32.totalorder %s46, 7
    %s48 = scalar_select %p47, %s46, 7
    %s49 = smul.addr %s48, 2
    %s50 = scalar_lea.vmem %s4, %s49
    %s51 = ssub.s32 0, 0
    %s52 = smul.u32 8, %s51
    %p54 = scmp.eq.s32.totalorder 0, 0
    // Predicated region
    $region14: #{encoder_vanilla_forward.1} parent=1 // pred_check
      %p55 = pneg %p54
    $region15: #{encoder_vanilla_forward.1} parent=1 // pred_check_branch
      %57 = sbr.rel (%p55) target = $region17
    $region16: #{encoder_vanilla_forward.1} parent=1 // pred_region
      %vm58 = vcmask 254976
      %59 = vst.msk [vmem:[#allocation2] sm:$0x3] %vm58, 0.0
      %60 = vst.msk [vmem:[#allocation2 + $0x2] sm:$0x3] %vm58, 0.0
      %61 = vst.msk [vmem:[#allocation3] sm:$0x3] %vm58, 0.0
      %62 = vst.msk [vmem:[#allocation3 + $0x2] sm:$0x3] %vm58, 0.0
    $region17: #{encoder_vanilla_forward.1} parent=1 // pred_fallthru
      _
    %v63 = vld [vmem:[%s2] sm:$0xf]
    %v64 = vld [vmem:[%s2 + $0x4] sm:$0xf]
    %v65 = vld [vmem:[%s2 + $0x8] sm:$0xf]
    %v66 = vld [vmem:[%s2 + $0xc] sm:$0xf]
    %s67 = scalar_lea.vmem %s2, 16
    %v68 = vld [vmem:[%s67] sm:$0xf]
    %v69 = vld [vmem:[%s67 + $0x4] sm:$0xf]
    %v70 = vld [vmem:[%s67 + $0x8] sm:$0xf]
    %v71 = vld [vmem:[%s67 + $0xc] sm:$0xf]
    %v72 = vld [vmem:[#allocation2] sm:$0x3]
    %v73 = vld [vmem:[#allocation3] sm:$0x3]
    %s74 = scalar_lea.vmem [#allocation2], 2
    %v75 = vld [vmem:[%s74] sm:$0x3]
    %s76 = scalar_lea.vmem [#allocation3], 2
    %v77 = vld [vmem:[%s76] sm:$0x3]
    %v78 = vld [vmem:[%s0] sm:$0x1]
    %v79 = vunpack.c.l.bf16 %v78
    %v80 = vpack.c.bf16 %v72, %v72
    %v85 = vunpack.c.l.b16 %v63
    %v86 = vunpack.c.l.b16 %v64
    %v87 = vunpack.c.l.b16 %v65
    %v88 = vunpack.c.l.b16 %v66
    %v89 = vpack.c.b16 %v86, %v85
    %v90 = vpack.c.b16 %v88, %v87
    %vm93 = vcmask 261120
    %v95 = vsel %vm93, %v80, 0
    %97 = vmatprep.subr.bf16.mxu0 0
    %98 = vmatpush1.bf16.msra.mxu0 0
    %99 = vmatprep.subr.bf16.mxu0 0
    %100 = vmatpush1.bf16.msra.mxu0 0
    %101 = vmatprep.subr.bf16.mxu0 0
    %102 = vmatpush1.bf16.msra.mxu0 0
    %103 = vmatprep.subr.bf16.mxu0 0
    %104 = vmatpush1.bf16.msra.mxu0 0
    %105 = vmatprep.subr.bf16.mxu0 0
    %106 = vmatpush1.bf16.msra.mxu0 0
    %107 = vmatprep.subr.bf16.mxu0 0
    %108 = vmatpush1.bf16.msra.mxu0 0
    %109 = vmatprep.subr.bf16.mxu0 0
    %110 = vmatpush1.bf16.msra.mxu0 %v90
    %111 = vmatprep.subr.bf16.mxu0 0
    %112 = vmatpush1.bf16.msra.mxu0 %v89
    %113 = vmatprep.subr.bf16.mxu0 0
    %114 = vmatpush2.bf16.msra.mxu0 0
    %115 = vmatprep.subr.bf16.mxu0 0
    %116 = vmatpush2.bf16.msra.mxu0 0
    %117 = vmatprep.subr.bf16.mxu0 0
    %118 = vmatpush2.bf16.msra.mxu0 0
    %119 = vmatprep.subr.bf16.mxu0 0
    %120 = vmatpush2.bf16.msra.mxu0 0
    %121 = vmatprep.subr.bf16.mxu0 0
    %122 = vmatpush2.bf16.msra.mxu0 0
    %123 = vmatprep.subr.bf16.mxu0 0
    %124 = vmatpush2.bf16.msra.mxu0 0
    %125 = vmatprep.subr.bf16.mxu0 0
    %126 = vmatpush2.bf16.msra.mxu0 0
    %127 = vmatprep.subr.bf16.mxu0 0
    %128 = vmatpush2.bf16.msra.mxu0 0
    %129 = vmatprep.mubr.bf16.mxu0 0
    %130 = vmatmul.mubr.bf16.gmra.mxu0 %v95
    %v131 = vpop.f32.mrf.mxu0
    %v132 = vadd.f32 0.0, %v131
    %v133 = vpop.f32.mrf.mxu0
    %v134 = vpop.f32.mrf.mxu0
    %v135 = vpop.f32.mrf.mxu0
    %136 = vdwg.mxu0
    %v137 = vadd.f32 %v79, %v132
    %v138 = vxor.u32 %v137, 2147483648
    %v139 = vmul.f32 %v138, 1.442695
    %v140 = vpow.pop %v139
    %v141 = vadd.f32 %v140, 1.0
    %v142 = vrcp.pop %v141
    %v143 = vmul.f32 1.0, %v142
    %v144 = vtanh.pop %v137
    %v147 = vunpack.c.l.s4 1983009808
    %v148 = vunpack.c.0.s8 %v147
    %v149 = vlaneseq
    %v150 = vshrl.u32 %v149, 7
    %v151 = vsub.s32 %v148, %v150
    %v152 = vrot.slane %v73, %v151
    %153 = vrot.lane.b32.xlu0 %v152, 32
    %v154 = vpop.permute.xlu0 %153
    %v156 = vmul.f32 %v143, %v154
    %158 = vrot.lane.b32.xlu0 %v144, 64
    %v159 = vpop.permute.xlu0 %158
    %v161 = vmul.f32 %v143, %v159
    %163 = vrot.lane.b32.xlu0 %v161, 32
    %v164 = vpop.permute.xlu0 %163
    %v166 = vadd.f32 %v156, %v164
    %v167 = vtanh.pop %v166
    %169 = vrot.lane.b32.xlu0 %v167, 64
    %v170 = vpop.permute.xlu0 %169
    %v172 = vmul.f32 %v143, %v170
    %v175 = vunpack.c.l.s4 1983009808
    %v176 = vunpack.c.0.s8 %v175
    %v177 = vlaneseq
    %v178 = vshrl.u32 %v177, 7
    %v179 = vsub.s32 %v176, %v178
    %v180 = vrot.slane %v172, %v179
    %181 = vrot.lane.b32.xlu0 %v180, 32
    %v182 = vpop.permute.xlu0 %181
    %vm184 = vcmask 254976
    %185 = vst.msk [vmem:[%s3] sm:$0x3] %vm184, %v182
    %s186 = scalar_lea.vmem %s42, 7
    %v187 = vld [vmem:[%s186] sm:$0x1]
    %v188 = vunpack.c.l.bf16 %v187
    %v189 = vpack.c.bf16 %v75, %v75
    %v194 = vunpack.c.l.b16 %v68
    %v195 = vunpack.c.l.b16 %v69
    %v196 = vunpack.c.l.b16 %v70
    %v197 = vunpack.c.l.b16 %v71
    %v198 = vpack.c.b16 %v195, %v194
    %v199 = vpack.c.b16 %v197, %v196
    %v203 = vsel %vm93, %v189, 0
    %205 = vmatprep.subr.bf16.mxu0 0
    %206 = vmatpush1.bf16.msra.mxu0 0
    %207 = vmatprep.subr.bf16.mxu0 0
    %208 = vmatpush1.bf16.msra.mxu0 0
    %209 = vmatprep.subr.bf16.mxu0 0
    %210 = vmatpush1.bf16.msra.mxu0 0
    %211 = vmatprep.subr.bf16.mxu0 0
    %212 = vmatpush1.bf16.msra.mxu0 0
    %213 = vmatprep.subr.bf16.mxu0 0
    %214 = vmatpush1.bf16.msra.mxu0 0
    %215 = vmatprep.subr.bf16.mxu0 0
    %216 = vmatpush1.bf16.msra.mxu0 0
    %217 = vmatprep.subr.bf16.mxu0 0
    %218 = vmatpush1.bf16.msra.mxu0 %v199
    %219 = vmatprep.subr.bf16.mxu0 0
    %220 = vmatpush1.bf16.msra.mxu0 %v198
    %221 = vmatprep.subr.bf16.mxu0 0
    %222 = vmatpush2.bf16.msra.mxu0 0
    %223 = vmatprep.subr.bf16.mxu0 0
    %224 = vmatpush2.bf16.msra.mxu0 0
    %225 = vmatprep.subr.bf16.mxu0 0
    %226 = vmatpush2.bf16.msra.mxu0 0
    %227 = vmatprep.subr.bf16.mxu0 0
    %228 = vmatpush2.bf16.msra.mxu0 0
    %229 = vmatprep.subr.bf16.mxu0 0
    %230 = vmatpush2.bf16.msra.mxu0 0
    %231 = vmatprep.subr.bf16.mxu0 0
    %232 = vmatpush2.bf16.msra.mxu0 0
    %233 = vmatprep.subr.bf16.mxu0 0
    %234 = vmatpush2.bf16.msra.mxu0 0
    %235 = vmatprep.subr.bf16.mxu0 0
    %236 = vmatpush2.bf16.msra.mxu0 0
    %237 = vmatprep.mubr.bf16.mxu0 0
    %238 = vmatmul.mubr.bf16.gmra.mxu0 %v203
    %v239 = vpop.f32.mrf.mxu0
    %v240 = vadd.f32 0.0, %v239
    %v241 = vpop.f32.mrf.mxu0
    %v242 = vpop.f32.mrf.mxu0
    %v243 = vpop.f32.mrf.mxu0
    %244 = vdwg.mxu0
    %v245 = vadd.f32 %v188, %v240
    %v246 = vxor.u32 %v245, 2147483648
    %v247 = vmul.f32 %v246, 1.442695
    %v248 = vpow.pop %v247
    %v249 = vadd.f32 %v248, 1.0
    %v250 = vrcp.pop %v249
    %v251 = vmul.f32 1.0, %v250
    %v252 = vtanh.pop %v245
    %v255 = vunpack.c.l.s4 1983009808
    %v256 = vunpack.c.0.s8 %v255
    %v257 = vlaneseq
    %v258 = vshrl.u32 %v257, 7
    %v259 = vsub.s32 %v256, %v258
    %v260 = vrot.slane %v77, %v259
    %261 = vrot.lane.b32.xlu0 %v260, 32
    %v262 = vpop.permute.xlu0 %261
    %v264 = vmul.f32 %v251, %v262
    %266 = vrot.lane.b32.xlu0 %v252, 64
    %v267 = vpop.permute.xlu0 %266
    %v269 = vmul.f32 %v251, %v267
    %271 = vrot.lane.b32.xlu0 %v269, 32
    %v272 = vpop.permute.xlu0 %271
    %v274 = vadd.f32 %v264, %v272
    %v275 = vtanh.pop %v274
    %277 = vrot.lane.b32.xlu0 %v275, 64
    %v278 = vpop.permute.xlu0 %277
    %v280 = vmul.f32 %v251, %v278
    %v283 = vunpack.c.l.s4 1983009808
    %v284 = vunpack.c.0.s8 %v283
    %v285 = vlaneseq
    %v286 = vshrl.u32 %v285, 7
    %v287 = vsub.s32 %v284, %v286
    %v288 = vrot.slane %v280, %v287
    %289 = vrot.lane.b32.xlu0 %v288, 32
    %v290 = vpop.permute.xlu0 %289
    %s292 = scalar_lea.vmem %s50, 14
    %293 = vst.msk [vmem:[%s292] sm:$0x3] %vm184, %v290
    %s294 = scalar_lea.vmem %s0, 1
    %v295 = vld [vmem:[%s294] sm:$0x1]
    %v296 = vunpack.c.l.bf16 %v295
    %v297 = vpack.c.bf16 %v172, %v172
    %299 = vrot.lane.b32.xlu0 %v297, 32
    %v300 = vpop.permute.xlu0 %299
    %v302 = vsel %vm93, %v300, 0
    %304 = vmatprep.subr.bf16.mxu0 0
    %305 = vmatpush1.bf16.msra.mxu0 0
    %306 = vmatprep.subr.bf16.mxu0 0
    %307 = vmatpush1.bf16.msra.mxu0 0
    %308 = vmatprep.subr.bf16.mxu0 0
    %309 = vmatpush1.bf16.msra.mxu0 0
    %310 = vmatprep.subr.bf16.mxu0 0
    %311 = vmatpush1.bf16.msra.mxu0 0
    %312 = vmatprep.subr.bf16.mxu0 0
    %313 = vmatpush1.bf16.msra.mxu0 0
    %314 = vmatprep.subr.bf16.mxu0 0
    %315 = vmatpush1.bf16.msra.mxu0 0
    %316 = vmatprep.subr.bf16.mxu0 0
    %317 = vmatpush1.bf16.msra.mxu0 %v90
    %318 = vmatprep.subr.bf16.mxu0 0
    %319 = vmatpush1.bf16.msra.mxu0 %v89
    %320 = vmatprep.subr.bf16.mxu0 0
    %321 = vmatpush2.bf16.msra.mxu0 0
    %322 = vmatprep.subr.bf16.mxu0 0
    %323 = vmatpush2.bf16.msra.mxu0 0
    %324 = vmatprep.subr.bf16.mxu0 0
    %325 = vmatpush2.bf16.msra.mxu0 0
    %326 = vmatprep.subr.bf16.mxu0 0
    %327 = vmatpush2.bf16.msra.mxu0 0
    %328 = vmatprep.subr.bf16.mxu0 0
    %329 = vmatpush2.bf16.msra.mxu0 0
    %330 = vmatprep.subr.bf16.mxu0 0
    %331 = vmatpush2.bf16.msra.mxu0 0
    %332 = vmatprep.subr.bf16.mxu0 0
    %333 = vmatpush2.bf16.msra.mxu0 0
    %334 = vmatprep.subr.bf16.mxu0 0
    %335 = vmatpush2.bf16.msra.mxu0 0
    %336 = vmatprep.mubr.bf16.mxu0 0
    %337 = vmatmul.mubr.bf16.gmra.mxu0 %v302
    %v338 = vpop.f32.mrf.mxu0
    %v339 = vadd.f32 0.0, %v338
    %v340 = vpop.f32.mrf.mxu0
    %v341 = vpop.f32.mrf.mxu0
    %v342 = vpop.f32.mrf.mxu0
    %343 = vdwg.mxu0
    %v344 = vadd.f32 %v296, %v339
    %v345 = vxor.u32 %v344, 2147483648
    %v346 = vmul.f32 %v345, 1.442695
    %v347 = vpow.pop %v346
    %v348 = vadd.f32 %v347, 1.0
    %v349 = vrcp.pop %v348
    %v350 = vmul.f32 1.0, %v349
    %v351 = vtanh.pop %v344
    %v352 = vmul.f32 %v350, %v166
    %354 = vrot.lane.b32.xlu0 %v351, 64
    %v355 = vpop.permute.xlu0 %354
    %v357 = vmul.f32 %v350, %v355
    %359 = vrot.lane.b32.xlu0 %v357, 32
    %v360 = vpop.permute.xlu0 %359
    %v362 = vadd.f32 %v352, %v360
    %v363 = vtanh.pop %v362
    %365 = vrot.lane.b32.xlu0 %v363, 64
    %v366 = vpop.permute.xlu0 %365
    %v368 = vmul.f32 %v350, %v366
    %v371 = vunpack.c.l.s4 1983009808
    %v372 = vunpack.c.0.s8 %v371
    %v373 = vlaneseq
    %v374 = vshrl.u32 %v373, 7
    %v375 = vsub.s32 %v372, %v374
    %v376 = vrot.slane %v368, %v375
    %377 = vrot.lane.b32.xlu0 %v376, 32
    %v378 = vpop.permute.xlu0 %377
    %s380 = scalar_lea.vmem %s3, 2
    %381 = vst.msk [vmem:[%s380] sm:$0x3] %vm184, %v378
    %s382 = scalar_lea.vmem %s42, 6
    %v383 = vld [vmem:[%s382] sm:$0x1]
    %v384 = vunpack.c.l.bf16 %v383
    %v385 = vpack.c.bf16 %v280, %v280
    %387 = vrot.lane.b32.xlu0 %v385, 32
    %v388 = vpop.permute.xlu0 %387
    %v390 = vsel %vm93, %v388, 0
    %392 = vmatprep.subr.bf16.mxu0 0
    %393 = vmatpush1.bf16.msra.mxu0 0
    %394 = vmatprep.subr.bf16.mxu0 0
    %395 = vmatpush1.bf16.msra.mxu0 0
    %396 = vmatprep.subr.bf16.mxu0 0
    %397 = vmatpush1.bf16.msra.mxu0 0
    %398 = vmatprep.subr.bf16.mxu0 0
    %399 = vmatpush1.bf16.msra.mxu0 0
    %400 = vmatprep.subr.bf16.mxu0 0
    %401 = vmatpush1.bf16.msra.mxu0 0
    %402 = vmatprep.subr.bf16.mxu0 0
    %403 = vmatpush1.bf16.msra.mxu0 0
    %404 = vmatprep.subr.bf16.mxu0 0
    %405 = vmatpush1.bf16.msra.mxu0 %v199
    %406 = vmatprep.subr.bf16.mxu0 0
    %407 = vmatpush1.bf16.msra.mxu0 %v198
    %408 = vmatprep.subr.bf16.mxu0 0
    %409 = vmatpush2.bf16.msra.mxu0 0
    %410 = vmatprep.subr.bf16.mxu0 0
    %411 = vmatpush2.bf16.msra.mxu0 0
    %412 = vmatprep.subr.bf16.mxu0 0
    %413 = vmatpush2.bf16.msra.mxu0 0
    %414 = vmatprep.subr.bf16.mxu0 0
    %415 = vmatpush2.bf16.msra.mxu0 0
    %416 = vmatprep.subr.bf16.mxu0 0
    %417 = vmatpush2.bf16.msra.mxu0 0
    %418 = vmatprep.subr.bf16.mxu0 0
    %419 = vmatpush2.bf16.msra.mxu0 0
    %420 = vmatprep.subr.bf16.mxu0 0
    %421 = vmatpush2.bf16.msra.mxu0 0
    %422 = vmatprep.subr.bf16.mxu0 0
    %423 = vmatpush2.bf16.msra.mxu0 0
    %424 = vmatprep.mubr.bf16.mxu0 0
    %425 = vmatmul.mubr.bf16.gmra.mxu0 %v390
    %v426 = vpop.f32.mrf.mxu0
    %v427 = vadd.f32 0.0, %v426
    %v428 = vpop.f32.mrf.mxu0
    %v429 = vpop.f32.mrf.mxu0
    %v430 = vpop.f32.mrf.mxu0
    %431 = vdwg.mxu0
    %v432 = vadd.f32 %v384, %v427
    %v433 = vxor.u32 %v432, 2147483648
    %v434 = vmul.f32 %v433, 1.442695
    %v435 = vpow.pop %v434
    %v436 = vadd.f32 %v435, 1.0
    %v437 = vrcp.pop %v436
    %v438 = vmul.f32 1.0, %v437
    %v439 = vtanh.pop %v432
    %v440 = vmul.f32 %v438, %v274
    %442 = vrot.lane.b32.xlu0 %v439, 64
    %v443 = vpop.permute.xlu0 %442
    %v445 = vmul.f32 %v438, %v443
    %447 = vrot.lane.b32.xlu0 %v445, 32
    %v448 = vpop.permute.xlu0 %447
    %v450 = vadd.f32 %v440, %v448
    %v451 = vtanh.pop %v450
    %453 = vrot.lane.b32.xlu0 %v451, 64
    %v454 = vpop.permute.xlu0 %453
    %v456 = vmul.f32 %v438, %v454
    %v459 = vunpack.c.l.s4 1983009808
    %v460 = vunpack.c.0.s8 %v459
    %v461 = vlaneseq
    %v462 = vshrl.u32 %v461, 7
    %v463 = vsub.s32 %v460, %v462
    %v464 = vrot.slane %v456, %v463
    %465 = vrot.lane.b32.xlu0 %v464, 32
    %v466 = vpop.permute.xlu0 %465
    %s468 = scalar_lea.vmem %s50, 12
    %469 = vst.msk [vmem:[%s468] sm:$0x3] %vm184, %v466
    %s470 = scalar_lea.vmem %s0, 2
    %v471 = vld [vmem:[%s470] sm:$0x1]
    %v472 = vunpack.c.l.bf16 %v471
    %v473 = vpack.c.bf16 %v368, %v368
    %475 = vrot.lane.b32.xlu0 %v473, 32
    %v476 = vpop.permute.xlu0 %475
    %v478 = vsel %vm93, %v476, 0
    %480 = vmatprep.subr.bf16.mxu0 0
    %481 = vmatpush1.bf16.msra.mxu0 0
    %482 = vmatprep.subr.bf16.mxu0 0
    %483 = vmatpush1.bf16.msra.mxu0 0
    %484 = vmatprep.subr.bf16.mxu0 0
    %485 = vmatpush1.bf16.msra.mxu0 0
    %486 = vmatprep.subr.bf16.mxu0 0
    %487 = vmatpush1.bf16.msra.mxu0 0
    %488 = vmatprep.subr.bf16.mxu0 0
    %489 = vmatpush1.bf16.msra.mxu0 0
    %490 = vmatprep.subr.bf16.mxu0 0
    %491 = vmatpush1.bf16.msra.mxu0 0
    %492 = vmatprep.subr.bf16.mxu0 0
    %493 = vmatpush1.bf16.msra.mxu0 %v90
    %494 = vmatprep.subr.bf16.mxu0 0
    %495 = vmatpush1.bf16.msra.mxu0 %v89
    %496 = vmatprep.subr.bf16.mxu0 0
    %497 = vmatpush2.bf16.msra.mxu0 0
    %498 = vmatprep.subr.bf16.mxu0 0
    %499 = vmatpush2.bf16.msra.mxu0 0
    %500 = vmatprep.subr.bf16.mxu0 0
    %501 = vmatpush2.bf16.msra.mxu0 0
    %502 = vmatprep.subr.bf16.mxu0 0
    %503 = vmatpush2.bf16.msra.mxu0 0
    %504 = vmatprep.subr.bf16.mxu0 0
    %505 = vmatpush2.bf16.msra.mxu0 0
    %506 = vmatprep.subr.bf16.mxu0 0
    %507 = vmatpush2.bf16.msra.mxu0 0
    %508 = vmatprep.subr.bf16.mxu0 0
    %509 = vmatpush2.bf16.msra.mxu0 0
    %510 = vmatprep.subr.bf16.mxu0 0
    %511 = vmatpush2.bf16.msra.mxu0 0
    %512 = vmatprep.mubr.bf16.mxu0 0
    %513 = vmatmul.mubr.bf16.gmra.mxu0 %v478
    %v514 = vpop.f32.mrf.mxu0
    %v515 = vadd.f32 0.0, %v514
    %v516 = vpop.f32.mrf.mxu0
    %v517 = vpop.f32.mrf.mxu0
    %v518 = vpop.f32.mrf.mxu0
    %519 = vdwg.mxu0
    %v520 = vadd.f32 %v472, %v515
    %v521 = vxor.u32 %v520, 2147483648
    %v522 = vmul.f32 %v521, 1.442695
    %v523 = vpow.pop %v522
    %v524 = vadd.f32 %v523, 1.0
    %v525 = vrcp.pop %v524
    %v526 = vmul.f32 1.0, %v525
    %v527 = vtanh.pop %v520
    %v528 = vmul.f32 %v526, %v362
    %530 = vrot.lane.b32.xlu0 %v527, 64
    %v531 = vpop.permute.xlu0 %530
    %v533 = vmul.f32 %v526, %v531
    %535 = vrot.lane.b32.xlu0 %v533, 32
    %v536 = vpop.permute.xlu0 %535
    %v538 = vadd.f32 %v528, %v536
    %v539 = vtanh.pop %v538
    %541 = vrot.lane.b32.xlu0 %v539, 64
    %v542 = vpop.permute.xlu0 %541
    %v544 = vmul.f32 %v526, %v542
    %v547 = vunpack.c.l.s4 1983009808
    %v548 = vunpack.c.0.s8 %v547
    %v549 = vlaneseq
    %v550 = vshrl.u32 %v549, 7
    %v551 = vsub.s32 %v548, %v550
    %v552 = vrot.slane %v544, %v551
    %553 = vrot.lane.b32.xlu0 %v552, 32
    %v554 = vpop.permute.xlu0 %553
    %s556 = scalar_lea.vmem %s3, 4
    %557 = vst.msk [vmem:[%s556] sm:$0x3] %vm184, %v554
    %s558 = scalar_lea.vmem %s42, 5
    %v559 = vld [vmem:[%s558] sm:$0x1]
    %v560 = vunpack.c.l.bf16 %v559
    %v561 = vpack.c.bf16 %v456, %v456
    %563 = vrot.lane.b32.xlu0 %v561, 32
    %v564 = vpop.permute.xlu0 %563
    %v566 = vsel %vm93, %v564, 0
    %568 = vmatprep.subr.bf16.mxu0 0
    %569 = vmatpush1.bf16.msra.mxu0 0
    %570 = vmatprep.subr.bf16.mxu0 0
    %571 = vmatpush1.bf16.msra.mxu0 0
    %572 = vmatprep.subr.bf16.mxu0 0
    %573 = vmatpush1.bf16.msra.mxu0 0
    %574 = vmatprep.subr.bf16.mxu0 0
    %575 = vmatpush1.bf16.msra.mxu0 0
    %576 = vmatprep.subr.bf16.mxu0 0
    %577 = vmatpush1.bf16.msra.mxu0 0
    %578 = vmatprep.subr.bf16.mxu0 0
    %579 = vmatpush1.bf16.msra.mxu0 0
    %580 = vmatprep.subr.bf16.mxu0 0
    %581 = vmatpush1.bf16.msra.mxu0 %v199
    %582 = vmatprep.subr.bf16.mxu0 0
    %583 = vmatpush1.bf16.msra.mxu0 %v198
    %584 = vmatprep.subr.bf16.mxu0 0
    %585 = vmatpush2.bf16.msra.mxu0 0
    %586 = vmatprep.subr.bf16.mxu0 0
    %587 = vmatpush2.bf16.msra.mxu0 0
    %588 = vmatprep.subr.bf16.mxu0 0
    %589 = vmatpush2.bf16.msra.mxu0 0
    %590 = vmatprep.subr.bf16.mxu0 0
    %591 = vmatpush2.bf16.msra.mxu0 0
    %592 = vmatprep.subr.bf16.mxu0 0
    %593 = vmatpush2.bf16.msra.mxu0 0
    %594 = vmatprep.subr.bf16.mxu0 0
    %595 = vmatpush2.bf16.msra.mxu0 0
    %596 = vmatprep.subr.bf16.mxu0 0
    %597 = vmatpush2.bf16.msra.mxu0 0
    %598 = vmatprep.subr.bf16.mxu0 0
    %599 = vmatpush2.bf16.msra.mxu0 0
    %600 = vmatprep.mubr.bf16.mxu0 0
    %601 = vmatmul.mubr.bf16.gmra.mxu0 %v566
    %v602 = vpop.f32.mrf.mxu0
    %v603 = vadd.f32 0.0, %v602
    %v604 = vpop.f32.mrf.mxu0
    %v605 = vpop.f32.mrf.mxu0
    %v606 = vpop.f32.mrf.mxu0
    %607 = vdwg.mxu0
    %v608 = vadd.f32 %v560, %v603
    %v609 = vxor.u32 %v608, 2147483648
    %v610 = vmul.f32 %v609, 1.442695
    %v611 = vpow.pop %v610
    %v612 = vadd.f32 %v611, 1.0
    %v613 = vrcp.pop %v612
    %v614 = vmul.f32 1.0, %v613
    %v615 = vtanh.pop %v608
    %v616 = vmul.f32 %v614, %v450
    %618 = vrot.lane.b32.xlu0 %v615, 64
    %v619 = vpop.permute.xlu0 %618
    %v621 = vmul.f32 %v614, %v619
    %623 = vrot.lane.b32.xlu0 %v621, 32
    %v624 = vpop.permute.xlu0 %623
    %v626 = vadd.f32 %v616, %v624
    %v627 = vtanh.pop %v626
    %629 = vrot.lane.b32.xlu0 %v627, 64
    %v630 = vpop.permute.xlu0 %629
    %v632 = vmul.f32 %v614, %v630
    %v635 = vunpack.c.l.s4 1983009808
    %v636 = vunpack.c.0.s8 %v635
    %v637 = vlaneseq
    %v638 = vshrl.u32 %v637, 7
    %v639 = vsub.s32 %v636, %v638
    %v640 = vrot.slane %v632, %v639
    %641 = vrot.lane.b32.xlu0 %v640, 32
    %v642 = vpop.permute.xlu0 %641
    %s644 = scalar_lea.vmem %s50, 10
    %645 = vst.msk [vmem:[%s644] sm:$0x3] %vm184, %v642
    %s646 = scalar_lea.vmem %s0, 3
    %v647 = vld [vmem:[%s646] sm:$0x1]
    %v648 = vunpack.c.l.bf16 %v647
    %v649 = vpack.c.bf16 %v544, %v544
    %651 = vrot.lane.b32.xlu0 %v649, 32
    %v652 = vpop.permute.xlu0 %651
    %v654 = vsel %vm93, %v652, 0
    %656 = vmatprep.subr.bf16.mxu0 0
    %657 = vmatpush1.bf16.msra.mxu0 0
    %658 = vmatprep.subr.bf16.mxu0 0
    %659 = vmatpush1.bf16.msra.mxu0 0
    %660 = vmatprep.subr.bf16.mxu0 0
    %661 = vmatpush1.bf16.msra.mxu0 0
    %662 = vmatprep.subr.bf16.mxu0 0
    %663 = vmatpush1.bf16.msra.mxu0 0
    %664 = vmatprep.subr.bf16.mxu0 0
    %665 = vmatpush1.bf16.msra.mxu0 0
    %666 = vmatprep.subr.bf16.mxu0 0
    %667 = vmatpush1.bf16.msra.mxu0 0
    %668 = vmatprep.subr.bf16.mxu0 0
    %669 = vmatpush1.bf16.msra.mxu0 %v90
    %670 = vmatprep.subr.bf16.mxu0 0
    %671 = vmatpush1.bf16.msra.mxu0 %v89
    %672 = vmatprep.subr.bf16.mxu0 0
    %673 = vmatpush2.bf16.msra.mxu0 0
    %674 = vmatprep.subr.bf16.mxu0 0
    %675 = vmatpush2.bf16.msra.mxu0 0
    %676 = vmatprep.subr.bf16.mxu0 0
    %677 = vmatpush2.bf16.msra.mxu0 0
    %678 = vmatprep.subr.bf16.mxu0 0
    %679 = vmatpush2.bf16.msra.mxu0 0
    %680 = vmatprep.subr.bf16.mxu0 0
    %681 = vmatpush2.bf16.msra.mxu0 0
    %682 = vmatprep.subr.bf16.mxu0 0
    %683 = vmatpush2.bf16.msra.mxu0 0
    %684 = vmatprep.subr.bf16.mxu0 0
    %685 = vmatpush2.bf16.msra.mxu0 0
    %686 = vmatprep.subr.bf16.mxu0 0
    %687 = vmatpush2.bf16.msra.mxu0 0
    %688 = vmatprep.mubr.bf16.mxu0 0
    %689 = vmatmul.mubr.bf16.gmra.mxu0 %v654
    %v690 = vpop.f32.mrf.mxu0
    %v691 = vadd.f32 0.0, %v690
    %v692 = vpop.f32.mrf.mxu0
    %v693 = vpop.f32.mrf.mxu0
    %v694 = vpop.f32.mrf.mxu0
    %695 = vdwg.mxu0
    %v696 = vadd.f32 %v648, %v691
    %v697 = vxor.u32 %v696, 2147483648
    %v698 = vmul.f32 %v697, 1.442695
    %v699 = vpow.pop %v698
    %v700 = vadd.f32 %v699, 1.0
    %v701 = vrcp.pop %v700
    %v702 = vmul.f32 1.0, %v701
    %v703 = vtanh.pop %v696
    %v704 = vmul.f32 %v702, %v538
    %706 = vrot.lane.b32.xlu0 %v703, 64
    %v707 = vpop.permute.xlu0 %706
    %v709 = vmul.f32 %v702, %v707
    %711 = vrot.lane.b32.xlu0 %v709, 32
    %v712 = vpop.permute.xlu0 %711
    %v714 = vadd.f32 %v704, %v712
    %v715 = vtanh.pop %v714
    %717 = vrot.lane.b32.xlu0 %v715, 64
    %v718 = vpop.permute.xlu0 %717
    %v720 = vmul.f32 %v702, %v718
    %v723 = vunpack.c.l.s4 1983009808
    %v724 = vunpack.c.0.s8 %v723
    %v725 = vlaneseq
    %v726 = vshrl.u32 %v725, 7
    %v727 = vsub.s32 %v724, %v726
    %v728 = vrot.slane %v720, %v727
    %729 = vrot.lane.b32.xlu0 %v728, 32
    %v730 = vpop.permute.xlu0 %729
    %s732 = scalar_lea.vmem %s3, 6
    %733 = vst.msk [vmem:[%s732] sm:$0x3] %vm184, %v730
    %s734 = scalar_lea.vmem %s42, 4
    %v735 = vld [vmem:[%s734] sm:$0x1]
    %v736 = vunpack.c.l.bf16 %v735
    %v737 = vpack.c.bf16 %v632, %v632
    %739 = vrot.lane.b32.xlu0 %v737, 32
    %v740 = vpop.permute.xlu0 %739
    %v742 = vsel %vm93, %v740, 0
    %744 = vmatprep.subr.bf16.mxu0 0
    %745 = vmatpush1.bf16.msra.mxu0 0
    %746 = vmatprep.subr.bf16.mxu0 0
    %747 = vmatpush1.bf16.msra.mxu0 0
    %748 = vmatprep.subr.bf16.mxu0 0
    %749 = vmatpush1.bf16.msra.mxu0 0
    %750 = vmatprep.subr.bf16.mxu0 0
    %751 = vmatpush1.bf16.msra.mxu0 0
    %752 = vmatprep.subr.bf16.mxu0 0
    %753 = vmatpush1.bf16.msra.mxu0 0
    %754 = vmatprep.subr.bf16.mxu0 0
    %755 = vmatpush1.bf16.msra.mxu0 0
    %756 = vmatprep.subr.bf16.mxu0 0
    %757 = vmatpush1.bf16.msra.mxu0 %v199
    %758 = vmatprep.subr.bf16.mxu0 0
    %759 = vmatpush1.bf16.msra.mxu0 %v198
    %760 = vmatprep.subr.bf16.mxu0 0
    %761 = vmatpush2.bf16.msra.mxu0 0
    %762 = vmatprep.subr.bf16.mxu0 0
    %763 = vmatpush2.bf16.msra.mxu0 0
    %764 = vmatprep.subr.bf16.mxu0 0
    %765 = vmatpush2.bf16.msra.mxu0 0
    %766 = vmatprep.subr.bf16.mxu0 0
    %767 = vmatpush2.bf16.msra.mxu0 0
    %768 = vmatprep.subr.bf16.mxu0 0
    %769 = vmatpush2.bf16.msra.mxu0 0
    %770 = vmatprep.subr.bf16.mxu0 0
    %771 = vmatpush2.bf16.msra.mxu0 0
    %772 = vmatprep.subr.bf16.mxu0 0
    %773 = vmatpush2.bf16.msra.mxu0 0
    %774 = vmatprep.subr.bf16.mxu0 0
    %775 = vmatpush2.bf16.msra.mxu0 0
    %776 = vmatprep.mubr.bf16.mxu0 0
    %777 = vmatmul.mubr.bf16.gmra.mxu0 %v742
    %v778 = vpop.f32.mrf.mxu0
    %v779 = vadd.f32 0.0, %v778
    %v780 = vpop.f32.mrf.mxu0
    %v781 = vpop.f32.mrf.mxu0
    %v782 = vpop.f32.mrf.mxu0
    %783 = vdwg.mxu0
    %v784 = vadd.f32 %v736, %v779
    %v785 = vxor.u32 %v784, 2147483648
    %v786 = vmul.f32 %v785, 1.442695
    %v787 = vpow.pop %v786
    %v788 = vadd.f32 %v787, 1.0
    %v789 = vrcp.pop %v788
    %v790 = vmul.f32 1.0, %v789
    %v791 = vtanh.pop %v784
    %v792 = vmul.f32 %v790, %v626
    %794 = vrot.lane.b32.xlu0 %v791, 64
    %v795 = vpop.permute.xlu0 %794
    %v797 = vmul.f32 %v790, %v795
    %799 = vrot.lane.b32.xlu0 %v797, 32
    %v800 = vpop.permute.xlu0 %799
    %v802 = vadd.f32 %v792, %v800
    %v803 = vtanh.pop %v802
    %805 = vrot.lane.b32.xlu0 %v803, 64
    %v806 = vpop.permute.xlu0 %805
    %v808 = vmul.f32 %v790, %v806
    %v811 = vunpack.c.l.s4 1983009808
    %v812 = vunpack.c.0.s8 %v811
    %v813 = vlaneseq
    %v814 = vshrl.u32 %v813, 7
    %v815 = vsub.s32 %v812, %v814
    %v816 = vrot.slane %v808, %v815
    %817 = vrot.lane.b32.xlu0 %v816, 32
    %v818 = vpop.permute.xlu0 %817
    %s820 = scalar_lea.vmem %s50, 8
    %821 = vst.msk [vmem:[%s820] sm:$0x3] %vm184, %v818
    %s822 = scalar_lea.vmem %s0, 4
    %v823 = vld [vmem:[%s822] sm:$0x1]
    %v824 = vunpack.c.l.bf16 %v823
    %v825 = vpack.c.bf16 %v720, %v720
    %827 = vrot.lane.b32.xlu0 %v825, 32
    %v828 = vpop.permute.xlu0 %827
    %v830 = vsel %vm93, %v828, 0
    %832 = vmatprep.subr.bf16.mxu0 0
    %833 = vmatpush1.bf16.msra.mxu0 0
    %834 = vmatprep.subr.bf16.mxu0 0
    %835 = vmatpush1.bf16.msra.mxu0 0
    %836 = vmatprep.subr.bf16.mxu0 0
    %837 = vmatpush1.bf16.msra.mxu0 0
    %838 = vmatprep.subr.bf16.mxu0 0
    %839 = vmatpush1.bf16.msra.mxu0 0
    %840 = vmatprep.subr.bf16.mxu0 0
    %841 = vmatpush1.bf16.msra.mxu0 0
    %842 = vmatprep.subr.bf16.mxu0 0
    %843 = vmatpush1.bf16.msra.mxu0 0
    %844 = vmatprep.subr.bf16.mxu0 0
    %845 = vmatpush1.bf16.msra.mxu0 %v90
    %846 = vmatprep.subr.bf16.mxu0 0
    %847 = vmatpush1.bf16.msra.mxu0 %v89
    %848 = vmatprep.subr.bf16.mxu0 0
    %849 = vmatpush2.bf16.msra.mxu0 0
    %850 = vmatprep.subr.bf16.mxu0 0
    %851 = vmatpush2.bf16.msra.mxu0 0
    %852 = vmatprep.subr.bf16.mxu0 0
    %853 = vmatpush2.bf16.msra.mxu0 0
    %854 = vmatprep.subr.bf16.mxu0 0
    %855 = vmatpush2.bf16.msra.mxu0 0
    %856 = vmatprep.subr.bf16.mxu0 0
    %857 = vmatpush2.bf16.msra.mxu0 0
    %858 = vmatprep.subr.bf16.mxu0 0
    %859 = vmatpush2.bf16.msra.mxu0 0
    %860 = vmatprep.subr.bf16.mxu0 0
    %861 = vmatpush2.bf16.msra.mxu0 0
    %862 = vmatprep.subr.bf16.mxu0 0
    %863 = vmatpush2.bf16.msra.mxu0 0
    %864 = vmatprep.mubr.bf16.mxu0 0
    %865 = vmatmul.mubr.bf16.gmra.mxu0 %v830
    %v866 = vpop.f32.mrf.mxu0
    %v867 = vadd.f32 0.0, %v866
    %v868 = vpop.f32.mrf.mxu0
    %v869 = vpop.f32.mrf.mxu0
    %v870 = vpop.f32.mrf.mxu0
    %871 = vdwg.mxu0
    %v872 = vadd.f32 %v824, %v867
    %v873 = vxor.u32 %v872, 2147483648
    %v874 = vmul.f32 %v873, 1.442695
    %v875 = vpow.pop %v874
    %v876 = vadd.f32 %v875, 1.0
    %v877 = vrcp.pop %v876
    %v878 = vmul.f32 1.0, %v877
    %v879 = vtanh.pop %v872
    %v880 = vmul.f32 %v878, %v714
    %882 = vrot.lane.b32.xlu0 %v879, 64
    %v883 = vpop.permute.xlu0 %882
    %v885 = vmul.f32 %v878, %v883
    %887 = vrot.lane.b32.xlu0 %v885, 32
    %v888 = vpop.permute.xlu0 %887
    %v890 = vadd.f32 %v880, %v888
    %v891 = vtanh.pop %v890
    %893 = vrot.lane.b32.xlu0 %v891, 64
    %v894 = vpop.permute.xlu0 %893
    %v896 = vmul.f32 %v878, %v894
    %v899 = vunpack.c.l.s4 1983009808
    %v900 = vunpack.c.0.s8 %v899
    %v901 = vlaneseq
    %v902 = vshrl.u32 %v901, 7
    %v903 = vsub.s32 %v900, %v902
    %v904 = vrot.slane %v896, %v903
    %905 = vrot.lane.b32.xlu0 %v904, 32
    %v906 = vpop.permute.xlu0 %905
    %s908 = scalar_lea.vmem %s3, 8
    %909 = vst.msk [vmem:[%s908] sm:$0x3] %vm184, %v906
    %s910 = scalar_lea.vmem %s42, 3
    %v911 = vld [vmem:[%s910] sm:$0x1]
    %v912 = vunpack.c.l.bf16 %v911
    %v913 = vpack.c.bf16 %v808, %v808
    %915 = vrot.lane.b32.xlu0 %v913, 32
    %v916 = vpop.permute.xlu0 %915
    %v918 = vsel %vm93, %v916, 0
    %920 = vmatprep.subr.bf16.mxu0 0
    %921 = vmatpush1.bf16.msra.mxu0 0
    %922 = vmatprep.subr.bf16.mxu0 0
    %923 = vmatpush1.bf16.msra.mxu0 0
    %924 = vmatprep.subr.bf16.mxu0 0
    %925 = vmatpush1.bf16.msra.mxu0 0
    %926 = vmatprep.subr.bf16.mxu0 0
    %927 = vmatpush1.bf16.msra.mxu0 0
    %928 = vmatprep.subr.bf16.mxu0 0
    %929 = vmatpush1.bf16.msra.mxu0 0
    %930 = vmatprep.subr.bf16.mxu0 0
    %931 = vmatpush1.bf16.msra.mxu0 0
    %932 = vmatprep.subr.bf16.mxu0 0
    %933 = vmatpush1.bf16.msra.mxu0 %v199
    %934 = vmatprep.subr.bf16.mxu0 0
    %935 = vmatpush1.bf16.msra.mxu0 %v198
    %936 = vmatprep.subr.bf16.mxu0 0
    %937 = vmatpush2.bf16.msra.mxu0 0
    %938 = vmatprep.subr.bf16.mxu0 0
    %939 = vmatpush2.bf16.msra.mxu0 0
    %940 = vmatprep.subr.bf16.mxu0 0
    %941 = vmatpush2.bf16.msra.mxu0 0
    %942 = vmatprep.subr.bf16.mxu0 0
    %943 = vmatpush2.bf16.msra.mxu0 0
    %944 = vmatprep.subr.bf16.mxu0 0
    %945 = vmatpush2.bf16.msra.mxu0 0
    %946 = vmatprep.subr.bf16.mxu0 0
    %947 = vmatpush2.bf16.msra.mxu0 0
    %948 = vmatprep.subr.bf16.mxu0 0
    %949 = vmatpush2.bf16.msra.mxu0 0
    %950 = vmatprep.subr.bf16.mxu0 0
    %951 = vmatpush2.bf16.msra.mxu0 0
    %952 = vmatprep.mubr.bf16.mxu0 0
    %953 = vmatmul.mubr.bf16.gmra.mxu0 %v918
    %v954 = vpop.f32.mrf.mxu0
    %v955 = vadd.f32 0.0, %v954
    %v956 = vpop.f32.mrf.mxu0
    %v957 = vpop.f32.mrf.mxu0
    %v958 = vpop.f32.mrf.mxu0
    %959 = vdwg.mxu0
    %v960 = vadd.f32 %v912, %v955
    %v961 = vxor.u32 %v960, 2147483648
    %v962 = vmul.f32 %v961, 1.442695
    %v963 = vpow.pop %v962
    %v964 = vadd.f32 %v963, 1.0
    %v965 = vrcp.pop %v964
    %v966 = vmul.f32 1.0, %v965
    %v967 = vtanh.pop %v960
    %v968 = vmul.f32 %v966, %v802
    %970 = vrot.lane.b32.xlu0 %v967, 64
    %v971 = vpop.permute.xlu0 %970
    %v973 = vmul.f32 %v966, %v971
    %975 = vrot.lane.b32.xlu0 %v973, 32
    %v976 = vpop.permute.xlu0 %975
    %v978 = vadd.f32 %v968, %v976
    %v979 = vtanh.pop %v978
    %981 = vrot.lane.b32.xlu0 %v979, 64
    %v982 = vpop.permute.xlu0 %981
    %v984 = vmul.f32 %v966, %v982
    %v987 = vunpack.c.l.s4 1983009808
    %v988 = vunpack.c.0.s8 %v987
    %v989 = vlaneseq
    %v990 = vshrl.u32 %v989, 7
    %v991 = vsub.s32 %v988, %v990
    %v992 = vrot.slane %v984, %v991
    %993 = vrot.lane.b32.xlu0 %v992, 32
    %v994 = vpop.permute.xlu0 %993
    %s996 = scalar_lea.vmem %s50, 6
    %997 = vst.msk [vmem:[%s996] sm:$0x3] %vm184, %v994
    %s998 = scalar_lea.vmem %s0, 5
    %v999 = vld [vmem:[%s998] sm:$0x1]
    %v1000 = vunpack.c.l.bf16 %v999
    %v1001 = vpack.c.bf16 %v896, %v896
    %1003 = vrot.lane.b32.xlu0 %v1001, 32
    %v1004 = vpop.permute.xlu0 %1003
    %v1006 = vsel %vm93, %v1004, 0
    %1008 = vmatprep.subr.bf16.mxu0 0
    %1009 = vmatpush1.bf16.msra.mxu0 0
    %1010 = vmatprep.subr.bf16.mxu0 0
    %1011 = vmatpush1.bf16.msra.mxu0 0
    %1012 = vmatprep.subr.bf16.mxu0 0
    %1013 = vmatpush1.bf16.msra.mxu0 0
    %1014 = vmatprep.subr.bf16.mxu0 0
    %1015 = vmatpush1.bf16.msra.mxu0 0
    %1016 = vmatprep.subr.bf16.mxu0 0
    %1017 = vmatpush1.bf16.msra.mxu0 0
    %1018 = vmatprep.subr.bf16.mxu0 0
    %1019 = vmatpush1.bf16.msra.mxu0 0
    %1020 = vmatprep.subr.bf16.mxu0 0
    %1021 = vmatpush1.bf16.msra.mxu0 %v90
    %1022 = vmatprep.subr.bf16.mxu0 0
    %1023 = vmatpush1.bf16.msra.mxu0 %v89
    %1024 = vmatprep.subr.bf16.mxu0 0
    %1025 = vmatpush2.bf16.msra.mxu0 0
    %1026 = vmatprep.subr.bf16.mxu0 0
    %1027 = vmatpush2.bf16.msra.mxu0 0
    %1028 = vmatprep.subr.bf16.mxu0 0
    %1029 = vmatpush2.bf16.msra.mxu0 0
    %1030 = vmatprep.subr.bf16.mxu0 0
    %1031 = vmatpush2.bf16.msra.mxu0 0
    %1032 = vmatprep.subr.bf16.mxu0 0
    %1033 = vmatpush2.bf16.msra.mxu0 0
    %1034 = vmatprep.subr.bf16.mxu0 0
    %1035 = vmatpush2.bf16.msra.mxu0 0
    %1036 = vmatprep.subr.bf16.mxu0 0
    %1037 = vmatpush2.bf16.msra.mxu0 0
    %1038 = vmatprep.subr.bf16.mxu0 0
    %1039 = vmatpush2.bf16.msra.mxu0 0
    %1040 = vmatprep.mubr.bf16.mxu0 0
    %1041 = vmatmul.mubr.bf16.gmra.mxu0 %v1006
    %v1042 = vpop.f32.mrf.mxu0
    %v1043 = vadd.f32 0.0, %v1042
    %v1044 = vpop.f32.mrf.mxu0
    %v1045 = vpop.f32.mrf.mxu0
    %v1046 = vpop.f32.mrf.mxu0
    %1047 = vdwg.mxu0
    %v1048 = vadd.f32 %v1000, %v1043
    %v1049 = vxor.u32 %v1048, 2147483648
    %v1050 = vmul.f32 %v1049, 1.442695
    %v1051 = vpow.pop %v1050
    %v1052 = vadd.f32 %v1051, 1.0
    %v1053 = vrcp.pop %v1052
    %v1054 = vmul.f32 1.0, %v1053
    %v1055 = vtanh.pop %v1048
    %v1056 = vmul.f32 %v1054, %v890
    %1058 = vrot.lane.b32.xlu0 %v1055, 64
    %v1059 = vpop.permute.xlu0 %1058
    %v1061 = vmul.f32 %v1054, %v1059
    %1063 = vrot.lane.b32.xlu0 %v1061, 32
    %v1064 = vpop.permute.xlu0 %1063
    %v1066 = vadd.f32 %v1056, %v1064
    %v1067 = vtanh.pop %v1066
    %1069 = vrot.lane.b32.xlu0 %v1067, 64
    %v1070 = vpop.permute.xlu0 %1069
    %v1072 = vmul.f32 %v1054, %v1070
    %v1075 = vunpack.c.l.s4 1983009808
    %v1076 = vunpack.c.0.s8 %v1075
    %v1077 = vlaneseq
    %v1078 = vshrl.u32 %v1077, 7
    %v1079 = vsub.s32 %v1076, %v1078
    %v1080 = vrot.slane %v1072, %v1079
    %1081 = vrot.lane.b32.xlu0 %v1080, 32
    %v1082 = vpop.permute.xlu0 %1081
    %s1084 = scalar_lea.vmem %s3, 10
    %1085 = vst.msk [vmem:[%s1084] sm:$0x3] %vm184, %v1082
    %s1086 = scalar_lea.vmem %s42, 2
    %v1087 = vld [vmem:[%s1086] sm:$0x1]
    %v1088 = vunpack.c.l.bf16 %v1087
    %v1089 = vpack.c.bf16 %v984, %v984
    %1091 = vrot.lane.b32.xlu0 %v1089, 32
    %v1092 = vpop.permute.xlu0 %1091
    %v1094 = vsel %vm93, %v1092, 0
    %1096 = vmatprep.subr.bf16.mxu0 0
    %1097 = vmatpush1.bf16.msra.mxu0 0
    %1098 = vmatprep.subr.bf16.mxu0 0
    %1099 = vmatpush1.bf16.msra.mxu0 0
    %1100 = vmatprep.subr.bf16.mxu0 0
    %1101 = vmatpush1.bf16.msra.mxu0 0
    %1102 = vmatprep.subr.bf16.mxu0 0
    %1103 = vmatpush1.bf16.msra.mxu0 0
    %1104 = vmatprep.subr.bf16.mxu0 0
    %1105 = vmatpush1.bf16.msra.mxu0 0
    %1106 = vmatprep.subr.bf16.mxu0 0
    %1107 = vmatpush1.bf16.msra.mxu0 0
    %1108 = vmatprep.subr.bf16.mxu0 0
    %1109 = vmatpush1.bf16.msra.mxu0 %v199
    %1110 = vmatprep.subr.bf16.mxu0 0
    %1111 = vmatpush1.bf16.msra.mxu0 %v198
    %1112 = vmatprep.subr.bf16.mxu0 0
    %1113 = vmatpush2.bf16.msra.mxu0 0
    %1114 = vmatprep.subr.bf16.mxu0 0
    %1115 = vmatpush2.bf16.msra.mxu0 0
    %1116 = vmatprep.subr.bf16.mxu0 0
    %1117 = vmatpush2.bf16.msra.mxu0 0
    %1118 = vmatprep.subr.bf16.mxu0 0
    %1119 = vmatpush2.bf16.msra.mxu0 0
    %1120 = vmatprep.subr.bf16.mxu0 0
    %1121 = vmatpush2.bf16.msra.mxu0 0
    %1122 = vmatprep.subr.bf16.mxu0 0
    %1123 = vmatpush2.bf16.msra.mxu0 0
    %1124 = vmatprep.subr.bf16.mxu0 0
    %1125 = vmatpush2.bf16.msra.mxu0 0
    %1126 = vmatprep.subr.bf16.mxu0 0
    %1127 = vmatpush2.bf16.msra.mxu0 0
    %1128 = vmatprep.mubr.bf16.mxu0 0
    %1129 = vmatmul.mubr.bf16.gmra.mxu0 %v1094
    %v1130 = vpop.f32.mrf.mxu0
    %v1131 = vadd.f32 0.0, %v1130
    %v1132 = vpop.f32.mrf.mxu0
    %v1133 = vpop.f32.mrf.mxu0
    %v1134 = vpop.f32.mrf.mxu0
    %1135 = vdwg.mxu0
    %v1136 = vadd.f32 %v1088, %v1131
    %v1137 = vxor.u32 %v1136, 2147483648
    %v1138 = vmul.f32 %v1137, 1.442695
    %v1139 = vpow.pop %v1138
    %v1140 = vadd.f32 %v1139, 1.0
    %v1141 = vrcp.pop %v1140
    %v1142 = vmul.f32 1.0, %v1141
    %v1143 = vtanh.pop %v1136
    %v1144 = vmul.f32 %v1142, %v978
    %1146 = vrot.lane.b32.xlu0 %v1143, 64
    %v1147 = vpop.permute.xlu0 %1146
    %v1149 = vmul.f32 %v1142, %v1147
    %1151 = vrot.lane.b32.xlu0 %v1149, 32
    %v1152 = vpop.permute.xlu0 %1151
    %v1154 = vadd.f32 %v1144, %v1152
    %v1155 = vtanh.pop %v1154
    %1157 = vrot.lane.b32.xlu0 %v1155, 64
    %v1158 = vpop.permute.xlu0 %1157
    %v1160 = vmul.f32 %v1142, %v1158
    %v1163 = vunpack.c.l.s4 1983009808
    %v1164 = vunpack.c.0.s8 %v1163
    %v1165 = vlaneseq
    %v1166 = vshrl.u32 %v1165, 7
    %v1167 = vsub.s32 %v1164, %v1166
    %v1168 = vrot.slane %v1160, %v1167
    %1169 = vrot.lane.b32.xlu0 %v1168, 32
    %v1170 = vpop.permute.xlu0 %1169
    %s1172 = scalar_lea.vmem %s50, 4
    %1173 = vst.msk [vmem:[%s1172] sm:$0x3] %vm184, %v1170
    %s1174 = scalar_lea.vmem %s0, 6
    %v1175 = vld [vmem:[%s1174] sm:$0x1]
    %v1176 = vunpack.c.l.bf16 %v1175
    %v1177 = vpack.c.bf16 %v1072, %v1072
    %1179 = vrot.lane.b32.xlu0 %v1177, 32
    %v1180 = vpop.permute.xlu0 %1179
    %v1182 = vsel %vm93, %v1180, 0
    %1184 = vmatprep.subr.bf16.mxu0 0
    %1185 = vmatpush1.bf16.msra.mxu0 0
    %1186 = vmatprep.subr.bf16.mxu0 0
    %1187 = vmatpush1.bf16.msra.mxu0 0
    %1188 = vmatprep.subr.bf16.mxu0 0
    %1189 = vmatpush1.bf16.msra.mxu0 0
    %1190 = vmatprep.subr.bf16.mxu0 0
    %1191 = vmatpush1.bf16.msra.mxu0 0
    %1192 = vmatprep.subr.bf16.mxu0 0
    %1193 = vmatpush1.bf16.msra.mxu0 0
    %1194 = vmatprep.subr.bf16.mxu0 0
    %1195 = vmatpush1.bf16.msra.mxu0 0
    %1196 = vmatprep.subr.bf16.mxu0 0
    %1197 = vmatpush1.bf16.msra.mxu0 %v90
    %1198 = vmatprep.subr.bf16.mxu0 0
    %1199 = vmatpush1.bf16.msra.mxu0 %v89
    %1200 = vmatprep.subr.bf16.mxu0 0
    %1201 = vmatpush2.bf16.msra.mxu0 0
    %1202 = vmatprep.subr.bf16.mxu0 0
    %1203 = vmatpush2.bf16.msra.mxu0 0
    %1204 = vmatprep.subr.bf16.mxu0 0
    %1205 = vmatpush2.bf16.msra.mxu0 0
    %1206 = vmatprep.subr.bf16.mxu0 0
    %1207 = vmatpush2.bf16.msra.mxu0 0
    %1208 = vmatprep.subr.bf16.mxu0 0
    %1209 = vmatpush2.bf16.msra.mxu0 0
    %1210 = vmatprep.subr.bf16.mxu0 0
    %1211 = vmatpush2.bf16.msra.mxu0 0
    %1212 = vmatprep.subr.bf16.mxu0 0
    %1213 = vmatpush2.bf16.msra.mxu0 0
    %1214 = vmatprep.subr.bf16.mxu0 0
    %1215 = vmatpush2.bf16.msra.mxu0 0
    %1216 = vmatprep.mubr.bf16.mxu0 0
    %1217 = vmatmul.mubr.bf16.gmra.mxu0 %v1182
    %v1218 = vpop.f32.mrf.mxu0
    %v1219 = vadd.f32 0.0, %v1218
    %v1220 = vpop.f32.mrf.mxu0
    %v1221 = vpop.f32.mrf.mxu0
    %v1222 = vpop.f32.mrf.mxu0
    %1223 = vdwg.mxu0
    %v1224 = vadd.f32 %v1176, %v1219
    %v1225 = vxor.u32 %v1224, 2147483648
    %v1226 = vmul.f32 %v1225, 1.442695
    %v1227 = vpow.pop %v1226
    %v1228 = vadd.f32 %v1227, 1.0
    %v1229 = vrcp.pop %v1228
    %v1230 = vmul.f32 1.0, %v1229
    %v1231 = vtanh.pop %v1224
    %v1232 = vmul.f32 %v1230, %v1066
    %1234 = vrot.lane.b32.xlu0 %v1231, 64
    %v1235 = vpop.permute.xlu0 %1234
    %v1237 = vmul.f32 %v1230, %v1235
    %1239 = vrot.lane.b32.xlu0 %v1237, 32
    %v1240 = vpop.permute.xlu0 %1239
    %v1242 = vadd.f32 %v1232, %v1240
    %v1243 = vtanh.pop %v1242
    %1245 = vrot.lane.b32.xlu0 %v1243, 64
    %v1246 = vpop.permute.xlu0 %1245
    %v1248 = vmul.f32 %v1230, %v1246
    %v1251 = vunpack.c.l.s4 1983009808
    %v1252 = vunpack.c.0.s8 %v1251
    %v1253 = vlaneseq
    %v1254 = vshrl.u32 %v1253, 7
    %v1255 = vsub.s32 %v1252, %v1254
    %v1256 = vrot.slane %v1248, %v1255
    %1257 = vrot.lane.b32.xlu0 %v1256, 32
    %v1258 = vpop.permute.xlu0 %1257
    %s1260 = scalar_lea.vmem %s3, 12
    %1261 = vst.msk [vmem:[%s1260] sm:$0x3] %vm184, %v1258
    %s1262 = scalar_lea.vmem %s42, 1
    %v1263 = vld [vmem:[%s1262] sm:$0x1]
    %v1264 = vunpack.c.l.bf16 %v1263
    %v1265 = vpack.c.bf16 %v1160, %v1160
    %1267 = vrot.lane.b32.xlu0 %v1265, 32
    %v1268 = vpop.permute.xlu0 %1267
    %v1270 = vsel %vm93, %v1268, 0
    %1272 = vmatprep.subr.bf16.mxu0 0
    %1273 = vmatpush1.bf16.msra.mxu0 0
    %1274 = vmatprep.subr.bf16.mxu0 0
    %1275 = vmatpush1.bf16.msra.mxu0 0
    %1276 = vmatprep.subr.bf16.mxu0 0
    %1277 = vmatpush1.bf16.msra.mxu0 0
    %1278 = vmatprep.subr.bf16.mxu0 0
    %1279 = vmatpush1.bf16.msra.mxu0 0
    %1280 = vmatprep.subr.bf16.mxu0 0
    %1281 = vmatpush1.bf16.msra.mxu0 0
    %1282 = vmatprep.subr.bf16.mxu0 0
    %1283 = vmatpush1.bf16.msra.mxu0 0
    %1284 = vmatprep.subr.bf16.mxu0 0
    %1285 = vmatpush1.bf16.msra.mxu0 %v199
    %1286 = vmatprep.subr.bf16.mxu0 0
    %1287 = vmatpush1.bf16.msra.mxu0 %v198
    %1288 = vmatprep.subr.bf16.mxu0 0
    %1289 = vmatpush2.bf16.msra.mxu0 0
    %1290 = vmatprep.subr.bf16.mxu0 0
    %1291 = vmatpush2.bf16.msra.mxu0 0
    %1292 = vmatprep.subr.bf16.mxu0 0
    %1293 = vmatpush2.bf16.msra.mxu0 0
    %1294 = vmatprep.subr.bf16.mxu0 0
    %1295 = vmatpush2.bf16.msra.mxu0 0
    %1296 = vmatprep.subr.bf16.mxu0 0
    %1297 = vmatpush2.bf16.msra.mxu0 0
    %1298 = vmatprep.subr.bf16.mxu0 0
    %1299 = vmatpush2.bf16.msra.mxu0 0
    %1300 = vmatprep.subr.bf16.mxu0 0
    %1301 = vmatpush2.bf16.msra.mxu0 0
    %1302 = vmatprep.subr.bf16.mxu0 0
    %1303 = vmatpush2.bf16.msra.mxu0 0
    %1304 = vmatprep.mubr.bf16.mxu0 0
    %1305 = vmatmul.mubr.bf16.gmra.mxu0 %v1270
    %v1306 = vpop.f32.mrf.mxu0
    %v1307 = vadd.f32 0.0, %v1306
    %v1308 = vpop.f32.mrf.mxu0
    %v1309 = vpop.f32.mrf.mxu0
    %v1310 = vpop.f32.mrf.mxu0
    %1311 = vdwg.mxu0
    %v1312 = vadd.f32 %v1264, %v1307
    %v1313 = vxor.u32 %v1312, 2147483648
    %v1314 = vmul.f32 %v1313, 1.442695
    %v1315 = vpow.pop %v1314
    %v1316 = vadd.f32 %v1315, 1.0
    %v1317 = vrcp.pop %v1316
    %v1318 = vmul.f32 1.0, %v1317
    %v1319 = vtanh.pop %v1312
    %v1320 = vmul.f32 %v1318, %v1154
    %1322 = vrot.lane.b32.xlu0 %v1319, 64
    %v1323 = vpop.permute.xlu0 %1322
    %v1325 = vmul.f32 %v1318, %v1323
    %1327 = vrot.lane.b32.xlu0 %v1325, 32
    %v1328 = vpop.permute.xlu0 %1327
    %v1330 = vadd.f32 %v1320, %v1328
    %v1331 = vtanh.pop %v1330
    %1333 = vrot.lane.b32.xlu0 %v1331, 64
    %v1334 = vpop.permute.xlu0 %1333
    %v1336 = vmul.f32 %v1318, %v1334
    %v1339 = vunpack.c.l.s4 1983009808
    %v1340 = vunpack.c.0.s8 %v1339
    %v1341 = vlaneseq
    %v1342 = vshrl.u32 %v1341, 7
    %v1343 = vsub.s32 %v1340, %v1342
    %v1344 = vrot.slane %v1336, %v1343
    %1345 = vrot.lane.b32.xlu0 %v1344, 32
    %v1346 = vpop.permute.xlu0 %1345
    %s1348 = scalar_lea.vmem %s50, 2
    %1349 = vst.msk [vmem:[%s1348] sm:$0x3] %vm184, %v1346
    %s1350 = scalar_lea.vmem %s0, 7
    %v1351 = vld [vmem:[%s1350] sm:$0x1]
    %v1352 = vunpack.c.l.bf16 %v1351
    %v1353 = vpack.c.bf16 %v1248, %v1248
    %1355 = vrot.lane.b32.xlu0 %v1353, 32
    %v1356 = vpop.permute.xlu0 %1355
    %v1358 = vsel %vm93, %v1356, 0
    %1360 = vmatprep.subr.bf16.mxu0 0
    %1361 = vmatpush1.bf16.msra.mxu0 0
    %1362 = vmatprep.subr.bf16.mxu0 0
    %1363 = vmatpush1.bf16.msra.mxu0 0
    %1364 = vmatprep.subr.bf16.mxu0 0
    %1365 = vmatpush1.bf16.msra.mxu0 0
    %1366 = vmatprep.subr.bf16.mxu0 0
    %1367 = vmatpush1.bf16.msra.mxu0 0
    %1368 = vmatprep.subr.bf16.mxu0 0
    %1369 = vmatpush1.bf16.msra.mxu0 0
    %1370 = vmatprep.subr.bf16.mxu0 0
    %1371 = vmatpush1.bf16.msra.mxu0 0
    %1372 = vmatprep.subr.bf16.mxu0 0
    %1373 = vmatpush1.bf16.msra.mxu0 %v90
    %1374 = vmatprep.subr.bf16.mxu0 0
    %1375 = vmatpush1.bf16.msra.mxu0 %v89
    %1376 = vmatprep.subr.bf16.mxu0 0
    %1377 = vmatpush2.bf16.msra.mxu0 0
    %1378 = vmatprep.subr.bf16.mxu0 0
    %1379 = vmatpush2.bf16.msra.mxu0 0
    %1380 = vmatprep.subr.bf16.mxu0 0
    %1381 = vmatpush2.bf16.msra.mxu0 0
    %1382 = vmatprep.subr.bf16.mxu0 0
    %1383 = vmatpush2.bf16.msra.mxu0 0
    %1384 = vmatprep.subr.bf16.mxu0 0
    %1385 = vmatpush2.bf16.msra.mxu0 0
    %1386 = vmatprep.subr.bf16.mxu0 0
    %1387 = vmatpush2.bf16.msra.mxu0 0
    %1388 = vmatprep.subr.bf16.mxu0 0
    %1389 = vmatpush2.bf16.msra.mxu0 0
    %1390 = vmatprep.subr.bf16.mxu0 0
    %1391 = vmatpush2.bf16.msra.mxu0 0
    %1392 = vmatprep.mubr.bf16.mxu0 0
    %1393 = vmatmul.mubr.bf16.gmra.mxu0 %v1358
    %v1394 = vpop.f32.mrf.mxu0
    %v1395 = vadd.f32 0.0, %v1394
    %v1396 = vpop.f32.mrf.mxu0
    %v1397 = vpop.f32.mrf.mxu0
    %v1398 = vpop.f32.mrf.mxu0
    %1399 = vdwg.mxu0
    %v1400 = vadd.f32 %v1352, %v1395
    %v1401 = vxor.u32 %v1400, 2147483648
    %v1402 = vmul.f32 %v1401, 1.442695
    %v1403 = vpow.pop %v1402
    %v1404 = vadd.f32 %v1403, 1.0
    %v1405 = vrcp.pop %v1404
    %v1406 = vmul.f32 1.0, %v1405
    %v1407 = vtanh.pop %v1400
    %v1408 = vmul.f32 %v1406, %v1242
    %1410 = vrot.lane.b32.xlu0 %v1407, 64
    %v1411 = vpop.permute.xlu0 %1410
    %v1413 = vmul.f32 %v1406, %v1411
    %1415 = vrot.lane.b32.xlu0 %v1413, 32
    %v1416 = vpop.permute.xlu0 %1415
    %v1418 = vadd.f32 %v1408, %v1416
    %v1419 = vtanh.pop %v1418
    %1421 = vrot.lane.b32.xlu0 %v1419, 64
    %v1422 = vpop.permute.xlu0 %1421
    %v1424 = vmul.f32 %v1406, %v1422
    %v1427 = vunpack.c.l.s4 1983009808
    %v1428 = vunpack.c.0.s8 %v1427
    %v1429 = vlaneseq
    %v1430 = vshrl.u32 %v1429, 7
    %v1431 = vsub.s32 %v1428, %v1430
    %v1432 = vrot.slane %v1424, %v1431
    %1433 = vrot.lane.b32.xlu0 %v1432, 32
    %v1434 = vpop.permute.xlu0 %1433
    %s1436 = scalar_lea.vmem %s3, 14
    %1437 = vst.msk [vmem:[%s1436] sm:$0x3] %vm184, %v1434
    %v1438 = vld [vmem:[%s42] sm:$0x1]
    %v1439 = vunpack.c.l.bf16 %v1438
    %v1440 = vpack.c.bf16 %v1336, %v1336
    %1442 = vrot.lane.b32.xlu0 %v1440, 32
    %v1443 = vpop.permute.xlu0 %1442
    %v1445 = vsel %vm93, %v1443, 0
    %1447 = vmatprep.subr.bf16.mxu0 0
    %1448 = vmatpush1.bf16.msra.mxu0 0
    %1449 = vmatprep.subr.bf16.mxu0 0
    %1450 = vmatpush1.bf16.msra.mxu0 0
    %1451 = vmatprep.subr.bf16.mxu0 0
    %1452 = vmatpush1.bf16.msra.mxu0 0
    %1453 = vmatprep.subr.bf16.mxu0 0
    %1454 = vmatpush1.bf16.msra.mxu0 0
    %1455 = vmatprep.subr.bf16.mxu0 0
    %1456 = vmatpush1.bf16.msra.mxu0 0
    %1457 = vmatprep.subr.bf16.mxu0 0
    %1458 = vmatpush1.bf16.msra.mxu0 0
    %1459 = vmatprep.subr.bf16.mxu0 0
    %1460 = vmatpush1.bf16.msra.mxu0 %v199
    %1461 = vmatprep.subr.bf16.mxu0 0
    %1462 = vmatpush1.bf16.msra.mxu0 %v198
    %1463 = vmatprep.subr.bf16.mxu0 0
    %1464 = vmatpush2.bf16.msra.mxu0 0
    %1465 = vmatprep.subr.bf16.mxu0 0
    %1466 = vmatpush2.bf16.msra.mxu0 0
    %1467 = vmatprep.subr.bf16.mxu0 0
    %1468 = vmatpush2.bf16.msra.mxu0 0
    %1469 = vmatprep.subr.bf16.mxu0 0
    %1470 = vmatpush2.bf16.msra.mxu0 0
    %1471 = vmatprep.subr.bf16.mxu0 0
    %1472 = vmatpush2.bf16.msra.mxu0 0
    %1473 = vmatprep.subr.bf16.mxu0 0
    %1474 = vmatpush2.bf16.msra.mxu0 0
    %1475 = vmatprep.subr.bf16.mxu0 0
    %1476 = vmatpush2.bf16.msra.mxu0 0
    %1477 = vmatprep.subr.bf16.mxu0 0
    %1478 = vmatpush2.bf16.msra.mxu0 0
    %1479 = vmatprep.mubr.bf16.mxu0 0
    %1480 = vmatmul.mubr.bf16.gmra.mxu0 %v1445
    %v1481 = vpop.f32.mrf.mxu0
    %v1482 = vadd.f32 0.0, %v1481
    %v1483 = vpop.f32.mrf.mxu0
    %v1484 = vpop.f32.mrf.mxu0
    %v1485 = vpop.f32.mrf.mxu0
    %1486 = vdwg.mxu0
    %v1487 = vadd.f32 %v1439, %v1482
    %v1488 = vxor.u32 %v1487, 2147483648
    %v1489 = vmul.f32 %v1488, 1.442695
    %v1490 = vpow.pop %v1489
    %v1491 = vadd.f32 %v1490, 1.0
    %v1492 = vrcp.pop %v1491
    %v1493 = vmul.f32 1.0, %v1492
    %v1494 = vtanh.pop %v1487
    %v1495 = vmul.f32 %v1493, %v1330
    %1497 = vrot.lane.b32.xlu0 %v1494, 64
    %v1498 = vpop.permute.xlu0 %1497
    %v1500 = vmul.f32 %v1493, %v1498
    %1502 = vrot.lane.b32.xlu0 %v1500, 32
    %v1503 = vpop.permute.xlu0 %1502
    %v1505 = vadd.f32 %v1495, %v1503
    %v1506 = vtanh.pop %v1505
    %1508 = vrot.lane.b32.xlu0 %v1506, 64
    %v1509 = vpop.permute.xlu0 %1508
    %v1511 = vmul.f32 %v1493, %v1509
    %v1514 = vunpack.c.l.s4 1983009808
    %v1515 = vunpack.c.0.s8 %v1514
    %v1516 = vlaneseq
    %v1517 = vshrl.u32 %v1516, 7
    %v1518 = vsub.s32 %v1515, %v1517
    %v1519 = vrot.slane %v1511, %v1518
    %1520 = vrot.lane.b32.xlu0 %v1519, 32
    %v1521 = vpop.permute.xlu0 %1520
    %1523 = vst.msk [vmem:[%s50] sm:$0x3] %vm184, %v1521
    %1524 = vst.msk [vmem:[#allocation2] sm:$0x3] %vm184, %v1434
    %1525 = vst.msk [vmem:[%s74] sm:$0x3] %vm184, %v1521
    %v1528 = vunpack.c.l.s4 1983009808
    %v1529 = vunpack.c.0.s8 %v1528
    %v1530 = vlaneseq
    %v1531 = vshrl.u32 %v1530, 7
    %v1532 = vsub.s32 %v1529, %v1531
    %v1533 = vrot.slane %v1418, %v1532
    %1534 = vrot.lane.b32.xlu0 %v1533, 96
    %v1535 = vpop.permute.xlu0 %1534
    %1537 = vst.msk [vmem:[#allocation3] sm:$0x3] %vm184, %v1535
    %v1540 = vunpack.c.l.s4 1983009808
    %v1541 = vunpack.c.0.s8 %v1540
    %v1542 = vlaneseq
    %v1543 = vshrl.u32 %v1542, 7
    %v1544 = vsub.s32 %v1541, %v1543
    %v1545 = vrot.slane %v1505, %v1544
    %1546 = vrot.lane.b32.xlu0 %v1545, 96
    %v1547 = vpop.permute.xlu0 %1546
    %1549 = vst.msk [vmem:[%s76] sm:$0x3] %vm184, %v1547
    // Predicated region
    $region18: #{encoder_vanilla_forward.1} parent=1 // pred_check
      %p1550 = pneg %p54
    $region19: #{encoder_vanilla_forward.1} parent=1 // pred_check_branch
      %1552 = sbr.rel (%p1550) target = $region21
    $region20: #{encoder_vanilla_forward.1} parent=1 // pred_region
      %1553 = vst.msk [vmem:[#allocation4] sm:$0x3] %vm184, %v1434
      %s1554 = scalar_lea.vmem [#allocation4], 2
      %1555 = vst.msk [vmem:[%s1554] sm:$0x3] %vm184, %v1521
      %1556 = vst.msk [vmem:[#allocation6] sm:$0x3] %vm184, %v1535
      %s1557 = scalar_lea.vmem [#allocation6], 2
      %1558 = vst.msk [vmem:[%s1557] sm:$0x3] %vm184, %v1547
    $region21: #{encoder_vanilla_forward.1} parent=1 // pred_fallthru
      _
    %s1559 = ssub.s32 0, 0
    %s1560 = smul.u32 8, %s1559
    %p1561 = scmp.lt.s32.totalorder %s1560, 7
    %s1562 = scalar_select %p1561, %s1560, 7
    %s1563 = smul.addr %s1562, 2
    %s1564 = scalar_lea.vmem %s4, %s1563
    // Predicated region
    $region22: #{encoder_vanilla_forward.1} parent=1 // pred_check
      _
    $region23: #{encoder_vanilla_forward.1} parent=1 // pred_check_branch
      %1566 = sbr.rel (0) target = $region25
    $region24: #{encoder_vanilla_forward.1} parent=1 // pred_region
      _
    $region25: #{encoder_vanilla_forward.1} parent=1 // pred_fallthru
      _
    // Predicated region
    $region26: #{encoder_vanilla_forward.1} parent=1 // pred_check
      _
    $region27: #{encoder_vanilla_forward.1} parent=1 // pred_check_branch
      %1568 = sbr.rel (0) target = $region29
    $region28: #{encoder_vanilla_forward.1} parent=1 // pred_region
      %s1569 = ssub.s32 0, 0
      %s1570 = smul.u32 8, %s1569
    $region29: #{encoder_vanilla_forward.1} parent=1 // pred_fallthru
      _
    // Predicated region
    $region30: #{encoder_vanilla_forward.1} parent=1 // pred_check
      _
    $region31: #{encoder_vanilla_forward.1} parent=1 // pred_check_branch
      %1572 = sbr.rel (0) target = $region33
    $region32: #{encoder_vanilla_forward.1} parent=1 // pred_region
      %s1574 = ssub.s32 64, 64
      %1575 = vsyncadd [#allocation5], %s1574
      %s1576 = sshll.u32 [#allocation4], 4
      %s1577 = int_to_ptr.vmem [resolvable:$true] %s1576
      %1582 = dma.vmem_to_hbm [thread:$0]  %s1577, 64, %s5, [#allocation5], 32, 32, 2
    $region33: #{encoder_vanilla_forward.1} parent=1 // pred_fallthru
      _
    // Predicated region
    $region34: #{encoder_vanilla_forward.1} parent=1 // pred_check
      _
    $region35: #{encoder_vanilla_forward.1} parent=1 // pred_check_branch
      %1584 = sbr.rel (0) target = $region37
    $region36: #{encoder_vanilla_forward.1} parent=1 // pred_region
      %s1586 = ssub.s32 64, 64
      %1587 = vsyncadd [#allocation7], %s1586
      %s1588 = sshll.u32 [#allocation6], 4
      %s1589 = int_to_ptr.vmem [resolvable:$true] %s1588
      %1594 = dma.vmem_to_hbm [thread:$0]  %s1589, 64, %s6, [#allocation7], 32, 32, 2
    $region37: #{encoder_vanilla_forward.1} parent=1 // pred_fallthru
      _
    // Predicated region
    $region38: #{encoder_vanilla_forward.1} parent=1 // pred_check
      _
    $region39: #{encoder_vanilla_forward.1} parent=1 // pred_check_branch
      %1596 = sbr.rel (0) target = $region41
    $region40: #{encoder_vanilla_forward.1} parent=1 // pred_region
      _
    $region41: #{encoder_vanilla_forward.1} parent=1 // pred_fallthru
      _
    // Predicated region
    $region42: #{encoder_vanilla_forward.1} parent=1 // pred_check
      _
    $region43: #{encoder_vanilla_forward.1} parent=1 // pred_check_branch
      %1598 = sbr.rel (0) target = $region45
    $region44: #{encoder_vanilla_forward.1} parent=1 // pred_region
      %s1599 = ssub.s32 0, 0
      %s1600 = smul.u32 8, %s1599
      %p1601 = scmp.lt.s32.totalorder %s1600, 7
      %s1602 = scalar_select %p1601, %s1600, 7
      %s1603 = smul.addr %s1602, 2
      %s1604 = scalar_lea.vmem %s4, %s1603
    $region45: #{encoder_vanilla_forward.1} parent=1 // pred_fallthru
      _
    // Predicated region
    $region46: #{encoder_vanilla_forward.1} parent=1 // pred_check
      _
    $region47: #{encoder_vanilla_forward.1} parent=1 // pred_check_branch
      %1606 = sbr.rel (0) target = $region49
    $region48: #{encoder_vanilla_forward.1} parent=1 // pred_region
      %1607 = dma.done [#allocation5], 64
    $region49: #{encoder_vanilla_forward.1} parent=1 // pred_fallthru
      _
    // Predicated region
    $region50: #{encoder_vanilla_forward.1} parent=1 // pred_check
      _
    $region51: #{encoder_vanilla_forward.1} parent=1 // pred_check_branch
      %1609 = sbr.rel (0) target = $region53
    $region52: #{encoder_vanilla_forward.1} parent=1 // pred_region
      %1610 = dma.done [#allocation7], 64
    $region53: #{encoder_vanilla_forward.1} parent=1 // pred_fallthru
      _
    %1611 = vsyncpa [#allocation5], 1
    %1612 = vsyncpa [#allocation7], 1

</llo_original>
